<compile_context>
chip_gen: v6e
topology: v6e:2x2x1
jax: 0.10.0
libtpu: 0.0.40
codegen_flags: <defaults>
</compile_context>

<pallas_src>
import functools

import jax
import jax.numpy as jnp
from jax.experimental import pallas as pl
from jax.experimental.pallas import tpu as pltpu


_MIN_ROW_TILE = 256   # row depth that fills the 256-wide MXU pipe on v6e/v7x
_MAX_UNROLL = 64      # cap on statically-unrolled dots per grid step (compile time)


def _round_up(a, b):
    return -(-a // b) * b


def _tpu_vmem_capacity_bytes():
    """Per-core VMEM capacity; falls back to v7x's 64 MiB (smallest generation)."""
    try:
        cap = int(pltpu.get_tpu_info().vmem_capacity_bytes)
    except Exception:
        cap = 64 << 20
    return min(max(cap, 16 << 20), 128 << 20)


def _vmem_budget_bytes():
    return int(_tpu_vmem_capacity_bytes() * 0.75)   # headroom for compiler scratch


def prepare_weights(weights):
    """One-time weight prep (keep OUT of the per-call hot path).

    Casts the [num_mats, H, H] stack to bf16 once, picks how many matrices to
    fuse per grid step (`fuse`) under the per-generation VMEM budget, and pads
    the chain with identity matrices (exact in bf16) when `fuse` would not
    divide the chain length.  Returns (w_bf16, fuse).
    """
    num_mats, H, H2 = weights.shape
    assert H == H2, "per-chunk weights must be square"
    w = weights.astype(jnp.bfloat16)            # cast once, not per forward call

    budget = _vmem_budget_bytes()
    act_reserve = 4 * _MIN_ROW_TILE * H * 4     # f32 x+out row tiles, double-buffered
    w_bytes_per_mat = 2 * H * H * 2             # bf16 weight block, double-buffered
    g_max = max(1, (budget - act_reserve) // w_bytes_per_mat)
    g_max = int(min(g_max, _MAX_UNROLL, num_mats))

    if num_mats <= g_max:
        # Whole stack VMEM-resident: single chain step, weights read from HBM once.
        return w, num_mats

    fuse = 1
    for cand in range(g_max, 0, -1):
        if num_mats % cand == 0:
            fuse = cand
            break
    if fuse < max(1, g_max // 2):
        # No good divisor: pad the chain with identities instead of tiny fusion groups.
        fuse = g_max
        pad = _round_up(num_mats, fuse) - num_mats
        eye = jnp.broadcast_to(jnp.eye(H, dtype=jnp.bfloat16), (pad, H, H))
        w = jnp.concatenate([w, eye], axis=0)
    return w, fuse


def _choose_tm(m_ceil, H, act_budget_bytes):
    """Largest row tile whose f32 x/out double-buffered blocks fit the leftover
    VMEM, capped so that >=2 row tiles exist when there is enough work (v7x 2 TCs)."""
    for tm in (2048, 1024, 512, 256, 128, 64, 32, 16, 8):
        if tm > m_ceil and tm > 8:
            continue
        if 4 * tm * H * 4 > act_budget_bytes and tm > 8:
            continue
        if m_ceil >= 2 * _MIN_ROW_TILE and tm > m_ceil // 2:
            continue
        return tm
    return 8


def _chain_matmul_kernel(x_ref, w_ref, o_ref, *, n_fused, n_sub, sub_m, single_step):
    """Apply n_fused chained matmuls to the VMEM-resident activation tile.

    The row tile is split into n_sub independent sub-streams whose dots are
    interleaved per weight, so consecutive MXU pushes never wait on the previous
    dot's pop + f32->bf16 cast.  bf16 operands, f32 accumulation.
    """
    if single_step:
        accs = [x_ref[pl.ds(s * sub_m, sub_m), :] for s in range(n_sub)]
    else:
        k = pl.program_id(1)

        @pl.when(k == 0)
        def _():
            o_ref[...] = x_ref[...]

        accs = [o_ref[pl.ds(s * sub_m, sub_m), :] for s in range(n_sub)]

    for g in range(n_fused):                    # statically unrolled chain
        w_g = w_ref[g]
        accs = [jnp.dot(a.astype(jnp.bfloat16), w_g,
                        preferred_element_type=jnp.float32) for a in accs]

    for s in range(n_sub):
        o_ref[pl.ds(s * sub_m, sub_m), :] = accs[s]


@functools.partial(jax.jit, static_argnames=("fuse",))
def _forward_impl(x, w, *, fuse):
    """x: [B, S, H] float32, w: [num_mats_padded, H, H] bfloat16 (from prepare_weights)."""
    B, S, H = x.shape
    num_mats = w.shape[0]
    num_steps = num_mats // fuse
    M = B * S

    x2d = x.reshape(M, H).astype(jnp.float32)

    cap = _tpu_vmem_capacity_bytes()
    budget = int(cap * 0.75)
    w_step_bytes = 2 * fuse * H * H * 2
    tm = _choose_tm(_round_up(max(M, 8), 8), H, budget - w_step_bytes)

    M_pad = _round_up(M, tm)
    if M_pad != M:
        x2d = jnp.pad(x2d, ((0, M_pad - M), (0, 0)))   # zero rows stay zero through matmuls
    m_tiles = M_pad // tm

    # Independent row sub-streams inside the kernel keep the MXU slot busy.
    if tm >= 512 and tm % 32 == 0:
        n_sub = 4
    elif tm >= 16 and tm % 16 == 0:
        n_sub = 2
    else:
        n_sub = 1
    sub_m = tm // n_sub

    deep_weight_buffer = (
        num_steps > 1 and 3 * fuse * H * H * 2 + 4 * tm * H * 4 <= budget)

    kernel = functools.partial(
        _chain_matmul_kernel, n_fused=fuse, n_sub=n_sub, sub_m=sub_m,
        single_step=(num_steps == 1))

    if num_steps == 1:
        # Weight-resident: no k axis, weights DMA'd from HBM exactly once.
        grid = (m_tiles,)
        in_specs = [
            pl.BlockSpec((tm, H), lambda m: (m, 0)),
            pl.BlockSpec((fuse, H, H), lambda m: (0, 0, 0)),
        ]
        out_specs = pl.BlockSpec((tm, H), lambda m: (m, 0))
        dims = ("parallel",)
    else:
        grid = (m_tiles, num_steps)                       # k innermost (accumulator resident)
        w_spec_kwargs = {"pipeline_mode": pl.Buffered(3)} if deep_weight_buffer else {}
        in_specs = [
            pl.BlockSpec((tm, H), lambda m, k: (m, 0)),
            pl.BlockSpec((fuse, H, H), lambda m, k: (k, 0, 0), **w_spec_kwargs),
        ]
        out_specs = pl.BlockSpec((tm, H), lambda m, k: (m, 0))
        dims = ("parallel", "arbitrary")

    buffers = 3 if deep_weight_buffer else 2
    vmem_needed = buffers * fuse * H * H * 2 + 4 * tm * H * 4
    vmem_limit = int(min(cap, max(vmem_needed + (8 << 20), 32 << 20)))

    weight_reads = 1 if num_steps == 1 else m_tiles
    cost = pl.CostEstimate(
        flops=2 * M_pad * H * H * num_mats,
        transcendentals=0,
        bytes_accessed=weight_reads * num_mats * H * H * 2 + 2 * M_pad * H * 4,
    )

    out2d = pl.pallas_call(
        kernel,
        out_shape=jax.ShapeDtypeStruct((M_pad, H), jnp.float32),
        grid_spec=pltpu.PrefetchScalarGridSpec(
            num_scalar_prefetch=0,
            grid=grid,
            in_specs=in_specs,
            out_specs=out_specs,
        ),
        compiler_params=pltpu.CompilerParams(
            dimension_semantics=dims,
            vmem_limit_bytes=vmem_limit,
        ),
        cost_estimate=cost,
    )(x2d, w)

    if M_pad != M:
        out2d = out2d[:M]
    return out2d.reshape(B, S, H).astype(x.dtype)


def distributed_model_forward(x, weights):
    """Convenience one-shot wrapper.  For repeated calls, do
    `w, fuse = prepare_weights(weights)` once and call `_forward_impl(x, w, fuse=fuse)`."""
    w, fuse = prepare_weights(weights)
    return _forward_impl(x, w, fuse=fuse)


def make_weights(key, num_layers, num_chunks, hidden):
    """Deterministic stand-in for chunked_tensors: for each layer, 6 weight params
    (wk, wq, wv, wo, fc1, fc2), each split into `num_chunks` square [H, H] chunks,
    stacked in exactly the order DistributedTransformerLayer.forward consumes them."""
    num_weight_params = 6  # attention wk/wq/wv/wo + feed_forward fc1/fc2 (weights)
    num_mats = num_layers * num_weight_params * num_chunks
    w = jax.random.normal(key, (num_mats, hidden, hidden), dtype=jnp.float32)
    # scale so the chained product stays O(1)
    return w * (1.0 / jnp.sqrt(jnp.float32(hidden)))


if __name__ == "__main__":
    # Small, module-consistent shapes.
    batch, seq, hidden = 2, 8, 128
    num_layers_test = 3   # (module default is 32; kept small for the synthetic test)
    num_chunks = 2        # (module default num_gpus=6 device chunks)

    key = jax.random.PRNGKey(0)
    kx, kw = jax.random.split(key)
    x = jax.random.normal(kx, (batch, seq, hidden), dtype=jnp.float32)
    weights = make_weights(kw, num_layers_test, num_chunks, hidden)

    # One-time weight prep (bf16 cast + fusion-group choice) kept out of the hot path.
    w_prepped, fuse = prepare_weights(weights)
    out = _forward_impl(x, w_prepped, fuse=fuse)
    out = jax.block_until_ready(out)

    # Pure-JAX reference performing the same chain with the same per-step arithmetic
    # the kernel uses (bf16 operands on the MXU, f32 accumulation).
    w_bf16 = weights.astype(jnp.bfloat16)
    ref = x.reshape(batch * seq, hidden).astype(jnp.float32)
    for k in range(weights.shape[0]):
        ref = jnp.dot(ref.astype(jnp.bfloat16), w_bf16[k],
                      preferred_element_type=jnp.float32)
    ref = ref.reshape(batch, seq, hidden)

    assert out.shape == (batch, seq, hidden), out.shape
    max_err = float(jnp.max(jnp.abs(out - ref)))
    assert jnp.allclose(out, ref, rtol=2e-2, atol=2e-2), max_err
    print("KERNEL_OK")
</pallas_src>

<mosaic_0001>
module attributes {stable_mosaic.version = 11 : i64} {
  func.func @_chain_matmul_kernel(%arg0: i32, %arg1: memref<16x128xf32, #tpu.memory_space<vmem>>, %arg2: memref<36x128x128xbf16, #tpu.memory_space<vmem>>, %arg3: memref<16x128xf32, #tpu.memory_space<vmem>>) attributes {dimension_semantics = [#tpu.dimension_semantics<parallel>], iteration_bounds = array<i64: 1>, scalar_prefetch = 0 : i64, scratch_operands = 0 : i64, tpu.core_type = #tpu.core_type<tc>, window_params = [{transform_indices = @transform_0, window_bounds = array<i64: 16, 128>}, {pipeline_mode = #tpu.pipeline_mode<synchronous>, transform_indices = @transform_1, window_bounds = array<i64: 36, 128, 128>}, {transform_indices = @transform_2, window_bounds = array<i64: 16, 128>}]} {
    %c0 = arith.constant 0 : index
    %c0_0 = arith.constant 0 : index
    %0 = vector.load %arg1[%c0, %c0_0] : memref<16x128xf32, #tpu.memory_space<vmem>>, vector<8x128xf32>
    %c8 = arith.constant 8 : index
    %c0_1 = arith.constant 0 : index
    %1 = vector.load %arg1[%c8, %c0_1] : memref<16x128xf32, #tpu.memory_space<vmem>>, vector<8x128xf32>
    %c0_2 = arith.constant 0 : index
    %c0_3 = arith.constant 0 : index
    %c0_4 = arith.constant 0 : index
    %2 = vector.load %arg2[%c0_2, %c0_3, %c0_4] : memref<36x128x128xbf16, #tpu.memory_space<vmem>>, vector<1x128x128xbf16>
    %3 = vector.shape_cast %2 : vector<1x128x128xbf16> to vector<128x128xbf16>
    %4 = arith.truncf %0 : vector<8x128xf32> to vector<8x128xbf16>
    %cst = arith.constant dense<0.000000e+00> : vector<8x128xf32>
    %5 = tpu.matmul %4, %3, %cst {dimension_numbers = #tpu.dot_dimension_numbers<[1], [0], [0], [1], [0, 0, 1, 1], [], []>} : vector<8x128xbf16>, vector<128x128xbf16>, vector<8x128xf32> -> vector<8x128xf32>
    %6 = arith.truncf %1 : vector<8x128xf32> to vector<8x128xbf16>
    %cst_5 = arith.constant dense<0.000000e+00> : vector<8x128xf32>
    %7 = tpu.matmul %6, %3, %cst_5 {dimension_numbers = #tpu.dot_dimension_numbers<[1], [0], [0], [1], [0, 0, 1, 1], [], []>} : vector<8x128xbf16>, vector<128x128xbf16>, vector<8x128xf32> -> vector<8x128xf32>
    %c1 = arith.constant 1 : index
    %c0_6 = arith.constant 0 : index
    %c0_7 = arith.constant 0 : index
    %8 = vector.load %arg2[%c1, %c0_6, %c0_7] : memref<36x128x128xbf16, #tpu.memory_space<vmem>>, vector<1x128x128xbf16>
    %9 = vector.shape_cast %8 : vector<1x128x128xbf16> to vector<128x128xbf16>
    %10 = arith.truncf %5 : vector<8x128xf32> to vector<8x128xbf16>
    %cst_8 = arith.constant dense<0.000000e+00> : vector<8x128xf32>
    %11 = tpu.matmul %10, %9, %cst_8 {dimension_numbers = #tpu.dot_dimension_numbers<[1], [0], [0], [1], [0, 0, 1, 1], [], []>} : vector<8x128xbf16>, vector<128x128xbf16>, vector<8x128xf32> -> vector<8x128xf32>
    %12 = arith.truncf %7 : vector<8x128xf32> to vector<8x128xbf16>
    %cst_9 = arith.constant dense<0.000000e+00> : vector<8x128xf32>
    %13 = tpu.matmul %12, %9, %cst_9 {dimension_numbers = #tpu.dot_dimension_numbers<[1], [0], [0], [1], [0, 0, 1, 1], [], []>} : vector<8x128xbf16>, vector<128x128xbf16>, vector<8x128xf32> -> vector<8x128xf32>
    %c2 = arith.constant 2 : index
    %c0_10 = arith.constant 0 : index
    %c0_11 = arith.constant 0 : index
    %14 = vector.load %arg2[%c2, %c0_10, %c0_11] : memref<36x128x128xbf16, #tpu.memory_space<vmem>>, vector<1x128x128xbf16>
    %15 = vector.shape_cast %14 : vector<1x128x128xbf16> to vector<128x128xbf16>
    %16 = arith.truncf %11 : vector<8x128xf32> to vector<8x128xbf16>
    %cst_12 = arith.constant dense<0.000000e+00> : vector<8x128xf32>
    %17 = tpu.matmul %16, %15, %cst_12 {dimension_numbers = #tpu.dot_dimension_numbers<[1], [0], [0], [1], [0, 0, 1, 1], [], []>} : vector<8x128xbf16>, vector<128x128xbf16>, vector<8x128xf32> -> vector<8x128xf32>
    %18 = arith.truncf %13 : vector<8x128xf32> to vector<8x128xbf16>
    %cst_13 = arith.constant dense<0.000000e+00> : vector<8x128xf32>
    %19 = tpu.matmul %18, %15, %cst_13 {dimension_numbers = #tpu.dot_dimension_numbers<[1], [0], [0], [1], [0, 0, 1, 1], [], []>} : vector<8x128xbf16>, vector<128x128xbf16>, vector<8x128xf32> -> vector<8x128xf32>
    %c3 = arith.constant 3 : index
    %c0_14 = arith.constant 0 : index
    %c0_15 = arith.constant 0 : index
    %20 = vector.load %arg2[%c3, %c0_14, %c0_15] : memref<36x128x128xbf16, #tpu.memory_space<vmem>>, vector<1x128x128xbf16>
    %21 = vector.shape_cast %20 : vector<1x128x128xbf16> to vector<128x128xbf16>
    %22 = arith.truncf %17 : vector<8x128xf32> to vector<8x128xbf16>
    %cst_16 = arith.constant dense<0.000000e+00> : vector<8x128xf32>
    %23 = tpu.matmul %22, %21, %cst_16 {dimension_numbers = #tpu.dot_dimension_numbers<[1], [0], [0], [1], [0, 0, 1, 1], [], []>} : vector<8x128xbf16>, vector<128x128xbf16>, vector<8x128xf32> -> vector<8x128xf32>
    %24 = arith.truncf %19 : vector<8x128xf32> to vector<8x128xbf16>
    %cst_17 = arith.constant dense<0.000000e+00> : vector<8x128xf32>
    %25 = tpu.matmul %24, %21, %cst_17 {dimension_numbers = #tpu.dot_dimension_numbers<[1], [0], [0], [1], [0, 0, 1, 1], [], []>} : vector<8x128xbf16>, vector<128x128xbf16>, vector<8x128xf32> -> vector<8x128xf32>
    %c4 = arith.constant 4 : index
    %c0_18 = arith.constant 0 : index
    %c0_19 = arith.constant 0 : index
    %26 = vector.load %arg2[%c4, %c0_18, %c0_19] : memref<36x128x128xbf16, #tpu.memory_space<vmem>>, vector<1x128x128xbf16>
    %27 = vector.shape_cast %26 : vector<1x128x128xbf16> to vector<128x128xbf16>
    %28 = arith.truncf %23 : vector<8x128xf32> to vector<8x128xbf16>
    %cst_20 = arith.constant dense<0.000000e+00> : vector<8x128xf32>
    %29 = tpu.matmul %28, %27, %cst_20 {dimension_numbers = #tpu.dot_dimension_numbers<[1], [0], [0], [1], [0, 0, 1, 1], [], []>} : vector<8x128xbf16>, vector<128x128xbf16>, vector<8x128xf32> -> vector<8x128xf32>
    %30 = arith.truncf %25 : vector<8x128xf32> to vector<8x128xbf16>
    %cst_21 = arith.constant dense<0.000000e+00> : vector<8x128xf32>
    %31 = tpu.matmul %30, %27, %cst_21 {dimension_numbers = #tpu.dot_dimension_numbers<[1], [0], [0], [1], [0, 0, 1, 1], [], []>} : vector<8x128xbf16>, vector<128x128xbf16>, vector<8x128xf32> -> vector<8x128xf32>
    %c5 = arith.constant 5 : index
    %c0_22 = arith.constant 0 : index
    %c0_23 = arith.constant 0 : index
    %32 = vector.load %arg2[%c5, %c0_22, %c0_23] : memref<36x128x128xbf16, #tpu.memory_space<vmem>>, vector<1x128x128xbf16>
    %33 = vector.shape_cast %32 : vector<1x128x128xbf16> to vector<128x128xbf16>
    %34 = arith.truncf %29 : vector<8x128xf32> to vector<8x128xbf16>
    %cst_24 = arith.constant dense<0.000000e+00> : vector<8x128xf32>
    %35 = tpu.matmul %34, %33, %cst_24 {dimension_numbers = #tpu.dot_dimension_numbers<[1], [0], [0], [1], [0, 0, 1, 1], [], []>} : vector<8x128xbf16>, vector<128x128xbf16>, vector<8x128xf32> -> vector<8x128xf32>
    %36 = arith.truncf %31 : vector<8x128xf32> to vector<8x128xbf16>
    %cst_25 = arith.constant dense<0.000000e+00> : vector<8x128xf32>
    %37 = tpu.matmul %36, %33, %cst_25 {dimension_numbers = #tpu.dot_dimension_numbers<[1], [0], [0], [1], [0, 0, 1, 1], [], []>} : vector<8x128xbf16>, vector<128x128xbf16>, vector<8x128xf32> -> vector<8x128xf32>
    %c6 = arith.constant 6 : index
    %c0_26 = arith.constant 0 : index
    %c0_27 = arith.constant 0 : index
    %38 = vector.load %arg2[%c6, %c0_26, %c0_27] : memref<36x128x128xbf16, #tpu.memory_space<vmem>>, vector<1x128x128xbf16>
    %39 = vector.shape_cast %38 : vector<1x128x128xbf16> to vector<128x128xbf16>
    %40 = arith.truncf %35 : vector<8x128xf32> to vector<8x128xbf16>
    %cst_28 = arith.constant dense<0.000000e+00> : vector<8x128xf32>
    %41 = tpu.matmul %40, %39, %cst_28 {dimension_numbers = #tpu.dot_dimension_numbers<[1], [0], [0], [1], [0, 0, 1, 1], [], []>} : vector<8x128xbf16>, vector<128x128xbf16>, vector<8x128xf32> -> vector<8x128xf32>
    %42 = arith.truncf %37 : vector<8x128xf32> to vector<8x128xbf16>
    %cst_29 = arith.constant dense<0.000000e+00> : vector<8x128xf32>
    %43 = tpu.matmul %42, %39, %cst_29 {dimension_numbers = #tpu.dot_dimension_numbers<[1], [0], [0], [1], [0, 0, 1, 1], [], []>} : vector<8x128xbf16>, vector<128x128xbf16>, vector<8x128xf32> -> vector<8x128xf32>
    %c7 = arith.constant 7 : index
    %c0_30 = arith.constant 0 : index
    %c0_31 = arith.constant 0 : index
    %44 = vector.load %arg2[%c7, %c0_30, %c0_31] : memref<36x128x128xbf16, #tpu.memory_space<vmem>>, vector<1x128x128xbf16>
    %45 = vector.shape_cast %44 : vector<1x128x128xbf16> to vector<128x128xbf16>
    %46 = arith.truncf %41 : vector<8x128xf32> to vector<8x128xbf16>
    %cst_32 = arith.constant dense<0.000000e+00> : vector<8x128xf32>
    %47 = tpu.matmul %46, %45, %cst_32 {dimension_numbers = #tpu.dot_dimension_numbers<[1], [0], [0], [1], [0, 0, 1, 1], [], []>} : vector<8x128xbf16>, vector<128x128xbf16>, vector<8x128xf32> -> vector<8x128xf32>
    %48 = arith.truncf %43 : vector<8x128xf32> to vector<8x128xbf16>
    %cst_33 = arith.constant dense<0.000000e+00> : vector<8x128xf32>
    %49 = tpu.matmul %48, %45, %cst_33 {dimension_numbers = #tpu.dot_dimension_numbers<[1], [0], [0], [1], [0, 0, 1, 1], [], []>} : vector<8x128xbf16>, vector<128x128xbf16>, vector<8x128xf32> -> vector<8x128xf32>
    %c8_34 = arith.constant 8 : index
    %c0_35 = arith.constant 0 : index
    %c0_36 = arith.constant 0 : index
    %50 = vector.load %arg2[%c8_34, %c0_35, %c0_36] : memref<36x128x128xbf16, #tpu.memory_space<vmem>>, vector<1x128x128xbf16>
    %51 = vector.shape_cast %50 : vector<1x128x128xbf16> to vector<128x128xbf16>
    %52 = arith.truncf %47 : vector<8x128xf32> to vector<8x128xbf16>
    %cst_37 = arith.constant dense<0.000000e+00> : vector<8x128xf32>
    %53 = tpu.matmul %52, %51, %cst_37 {dimension_numbers = #tpu.dot_dimension_numbers<[1], [0], [0], [1], [0, 0, 1, 1], [], []>} : vector<8x128xbf16>, vector<128x128xbf16>, vector<8x128xf32> -> vector<8x128xf32>
    %54 = arith.truncf %49 : vector<8x128xf32> to vector<8x128xbf16>
    %cst_38 = arith.constant dense<0.000000e+00> : vector<8x128xf32>
    %55 = tpu.matmul %54, %51, %cst_38 {dimension_numbers = #tpu.dot_dimension_numbers<[1], [0], [0], [1], [0, 0, 1, 1], [], []>} : vector<8x128xbf16>, vector<128x128xbf16>, vector<8x128xf32> -> vector<8x128xf32>
    %c9 = arith.constant 9 : index
    %c0_39 = arith.constant 0 : index
    %c0_40 = arith.constant 0 : index
    %56 = vector.load %arg2[%c9, %c0_39, %c0_40] : memref<36x128x128xbf16, #tpu.memory_space<vmem>>, vector<1x128x128xbf16>
    %57 = vector.shape_cast %56 : vector<1x128x128xbf16> to vector<128x128xbf16>
    %58 = arith.truncf %53 : vector<8x128xf32> to vector<8x128xbf16>
    %cst_41 = arith.constant dense<0.000000e+00> : vector<8x128xf32>
    %59 = tpu.matmul %58, %57, %cst_41 {dimension_numbers = #tpu.dot_dimension_numbers<[1], [0], [0], [1], [0, 0, 1, 1], [], []>} : vector<8x128xbf16>, vector<128x128xbf16>, vector<8x128xf32> -> vector<8x128xf32>
    %60 = arith.truncf %55 : vector<8x128xf32> to vector<8x128xbf16>
    %cst_42 = arith.constant dense<0.000000e+00> : vector<8x128xf32>
    %61 = tpu.matmul %60, %57, %cst_42 {dimension_numbers = #tpu.dot_dimension_numbers<[1], [0], [0], [1], [0, 0, 1, 1], [], []>} : vector<8x128xbf16>, vector<128x128xbf16>, vector<8x128xf32> -> vector<8x128xf32>
    %c10 = arith.constant 10 : index
    %c0_43 = arith.constant 0 : index
    %c0_44 = arith.constant 0 : index
    %62 = vector.load %arg2[%c10, %c0_43, %c0_44] : memref<36x128x128xbf16, #tpu.memory_space<vmem>>, vector<1x128x128xbf16>
    %63 = vector.shape_cast %62 : vector<1x128x128xbf16> to vector<128x128xbf16>
    %64 = arith.truncf %59 : vector<8x128xf32> to vector<8x128xbf16>
    %cst_45 = arith.constant dense<0.000000e+00> : vector<8x128xf32>
    %65 = tpu.matmul %64, %63, %cst_45 {dimension_numbers = #tpu.dot_dimension_numbers<[1], [0], [0], [1], [0, 0, 1, 1], [], []>} : vector<8x128xbf16>, vector<128x128xbf16>, vector<8x128xf32> -> vector<8x128xf32>
    %66 = arith.truncf %61 : vector<8x128xf32> to vector<8x128xbf16>
    %cst_46 = arith.constant dense<0.000000e+00> : vector<8x128xf32>
    %67 = tpu.matmul %66, %63, %cst_46 {dimension_numbers = #tpu.dot_dimension_numbers<[1], [0], [0], [1], [0, 0, 1, 1], [], []>} : vector<8x128xbf16>, vector<128x128xbf16>, vector<8x128xf32> -> vector<8x128xf32>
    %c11 = arith.constant 11 : index
    %c0_47 = arith.constant 0 : index
    %c0_48 = arith.constant 0 : index
    %68 = vector.load %arg2[%c11, %c0_47, %c0_48] : memref<36x128x128xbf16, #tpu.memory_space<vmem>>, vector<1x128x128xbf16>
    %69 = vector.shape_cast %68 : vector<1x128x128xbf16> to vector<128x128xbf16>
    %70 = arith.truncf %65 : vector<8x128xf32> to vector<8x128xbf16>
    %cst_49 = arith.constant dense<0.000000e+00> : vector<8x128xf32>
    %71 = tpu.matmul %70, %69, %cst_49 {dimension_numbers = #tpu.dot_dimension_numbers<[1], [0], [0], [1], [0, 0, 1, 1], [], []>} : vector<8x128xbf16>, vector<128x128xbf16>, vector<8x128xf32> -> vector<8x128xf32>
    %72 = arith.truncf %67 : vector<8x128xf32> to vector<8x128xbf16>
    %cst_50 = arith.constant dense<0.000000e+00> : vector<8x128xf32>
    %73 = tpu.matmul %72, %69, %cst_50 {dimension_numbers = #tpu.dot_dimension_numbers<[1], [0], [0], [1], [0, 0, 1, 1], [], []>} : vector<8x128xbf16>, vector<128x128xbf16>, vector<8x128xf32> -> vector<8x128xf32>
    %c12 = arith.constant 12 : index
    %c0_51 = arith.constant 0 : index
    %c0_52 = arith.constant 0 : index
    %74 = vector.load %arg2[%c12, %c0_51, %c0_52] : memref<36x128x128xbf16, #tpu.memory_space<vmem>>, vector<1x128x128xbf16>
    %75 = vector.shape_cast %74 : vector<1x128x128xbf16> to vector<128x128xbf16>
    %76 = arith.truncf %71 : vector<8x128xf32> to vector<8x128xbf16>
    %cst_53 = arith.constant dense<0.000000e+00> : vector<8x128xf32>
    %77 = tpu.matmul %76, %75, %cst_53 {dimension_numbers = #tpu.dot_dimension_numbers<[1], [0], [0], [1], [0, 0, 1, 1], [], []>} : vector<8x128xbf16>, vector<128x128xbf16>, vector<8x128xf32> -> vector<8x128xf32>
    %78 = arith.truncf %73 : vector<8x128xf32> to vector<8x128xbf16>
    %cst_54 = arith.constant dense<0.000000e+00> : vector<8x128xf32>
    %79 = tpu.matmul %78, %75, %cst_54 {dimension_numbers = #tpu.dot_dimension_numbers<[1], [0], [0], [1], [0, 0, 1, 1], [], []>} : vector<8x128xbf16>, vector<128x128xbf16>, vector<8x128xf32> -> vector<8x128xf32>
    %c13 = arith.constant 13 : index
    %c0_55 = arith.constant 0 : index
    %c0_56 = arith.constant 0 : index
    %80 = vector.load %arg2[%c13, %c0_55, %c0_56] : memref<36x128x128xbf16, #tpu.memory_space<vmem>>, vector<1x128x128xbf16>
    %81 = vector.shape_cast %80 : vector<1x128x128xbf16> to vector<128x128xbf16>
    %82 = arith.truncf %77 : vector<8x128xf32> to vector<8x128xbf16>
    %cst_57 = arith.constant dense<0.000000e+00> : vector<8x128xf32>
    %83 = tpu.matmul %82, %81, %cst_57 {dimension_numbers = #tpu.dot_dimension_numbers<[1], [0], [0], [1], [0, 0, 1, 1], [], []>} : vector<8x128xbf16>, vector<128x128xbf16>, vector<8x128xf32> -> vector<8x128xf32>
    %84 = arith.truncf %79 : vector<8x128xf32> to vector<8x128xbf16>
    %cst_58 = arith.constant dense<0.000000e+00> : vector<8x128xf32>
    %85 = tpu.matmul %84, %81, %cst_58 {dimension_numbers = #tpu.dot_dimension_numbers<[1], [0], [0], [1], [0, 0, 1, 1], [], []>} : vector<8x128xbf16>, vector<128x128xbf16>, vector<8x128xf32> -> vector<8x128xf32>
    %c14 = arith.constant 14 : index
    %c0_59 = arith.constant 0 : index
    %c0_60 = arith.constant 0 : index
    %86 = vector.load %arg2[%c14, %c0_59, %c0_60] : memref<36x128x128xbf16, #tpu.memory_space<vmem>>, vector<1x128x128xbf16>
    %87 = vector.shape_cast %86 : vector<1x128x128xbf16> to vector<128x128xbf16>
    %88 = arith.truncf %83 : vector<8x128xf32> to vector<8x128xbf16>
    %cst_61 = arith.constant dense<0.000000e+00> : vector<8x128xf32>
    %89 = tpu.matmul %88, %87, %cst_61 {dimension_numbers = #tpu.dot_dimension_numbers<[1], [0], [0], [1], [0, 0, 1, 1], [], []>} : vector<8x128xbf16>, vector<128x128xbf16>, vector<8x128xf32> -> vector<8x128xf32>
    %90 = arith.truncf %85 : vector<8x128xf32> to vector<8x128xbf16>
    %cst_62 = arith.constant dense<0.000000e+00> : vector<8x128xf32>
    %91 = tpu.matmul %90, %87, %cst_62 {dimension_numbers = #tpu.dot_dimension_numbers<[1], [0], [0], [1], [0, 0, 1, 1], [], []>} : vector<8x128xbf16>, vector<128x128xbf16>, vector<8x128xf32> -> vector<8x128xf32>
    %c15 = arith.constant 15 : index
    %c0_63 = arith.constant 0 : index
    %c0_64 = arith.constant 0 : index
    %92 = vector.load %arg2[%c15, %c0_63, %c0_64] : memref<36x128x128xbf16, #tpu.memory_space<vmem>>, vector<1x128x128xbf16>
    %93 = vector.shape_cast %92 : vector<1x128x128xbf16> to vector<128x128xbf16>
    %94 = arith.truncf %89 : vector<8x128xf32> to vector<8x128xbf16>
    %cst_65 = arith.constant dense<0.000000e+00> : vector<8x128xf32>
    %95 = tpu.matmul %94, %93, %cst_65 {dimension_numbers = #tpu.dot_dimension_numbers<[1], [0], [0], [1], [0, 0, 1, 1], [], []>} : vector<8x128xbf16>, vector<128x128xbf16>, vector<8x128xf32> -> vector<8x128xf32>
    %96 = arith.truncf %91 : vector<8x128xf32> to vector<8x128xbf16>
    %cst_66 = arith.constant dense<0.000000e+00> : vector<8x128xf32>
    %97 = tpu.matmul %96, %93, %cst_66 {dimension_numbers = #tpu.dot_dimension_numbers<[1], [0], [0], [1], [0, 0, 1, 1], [], []>} : vector<8x128xbf16>, vector<128x128xbf16>, vector<8x128xf32> -> vector<8x128xf32>
    %c16 = arith.constant 16 : index
    %c0_67 = arith.constant 0 : index
    %c0_68 = arith.constant 0 : index
    %98 = vector.load %arg2[%c16, %c0_67, %c0_68] : memref<36x128x128xbf16, #tpu.memory_space<vmem>>, vector<1x128x128xbf16>
    %99 = vector.shape_cast %98 : vector<1x128x128xbf16> to vector<128x128xbf16>
    %100 = arith.truncf %95 : vector<8x128xf32> to vector<8x128xbf16>
    %cst_69 = arith.constant dense<0.000000e+00> : vector<8x128xf32>
    %101 = tpu.matmul %100, %99, %cst_69 {dimension_numbers = #tpu.dot_dimension_numbers<[1], [0], [0], [1], [0, 0, 1, 1], [], []>} : vector<8x128xbf16>, vector<128x128xbf16>, vector<8x128xf32> -> vector<8x128xf32>
    %102 = arith.truncf %97 : vector<8x128xf32> to vector<8x128xbf16>
    %cst_70 = arith.constant dense<0.000000e+00> : vector<8x128xf32>
    %103 = tpu.matmul %102, %99, %cst_70 {dimension_numbers = #tpu.dot_dimension_numbers<[1], [0], [0], [1], [0, 0, 1, 1], [], []>} : vector<8x128xbf16>, vector<128x128xbf16>, vector<8x128xf32> -> vector<8x128xf32>
    %c17 = arith.constant 17 : index
    %c0_71 = arith.constant 0 : index
    %c0_72 = arith.constant 0 : index
    %104 = vector.load %arg2[%c17, %c0_71, %c0_72] : memref<36x128x128xbf16, #tpu.memory_space<vmem>>, vector<1x128x128xbf16>
    %105 = vector.shape_cast %104 : vector<1x128x128xbf16> to vector<128x128xbf16>
    %106 = arith.truncf %101 : vector<8x128xf32> to vector<8x128xbf16>
    %cst_73 = arith.constant dense<0.000000e+00> : vector<8x128xf32>
    %107 = tpu.matmul %106, %105, %cst_73 {dimension_numbers = #tpu.dot_dimension_numbers<[1], [0], [0], [1], [0, 0, 1, 1], [], []>} : vector<8x128xbf16>, vector<128x128xbf16>, vector<8x128xf32> -> vector<8x128xf32>
    %108 = arith.truncf %103 : vector<8x128xf32> to vector<8x128xbf16>
    %cst_74 = arith.constant dense<0.000000e+00> : vector<8x128xf32>
    %109 = tpu.matmul %108, %105, %cst_74 {dimension_numbers = #tpu.dot_dimension_numbers<[1], [0], [0], [1], [0, 0, 1, 1], [], []>} : vector<8x128xbf16>, vector<128x128xbf16>, vector<8x128xf32> -> vector<8x128xf32>
    %c18 = arith.constant 18 : index
    %c0_75 = arith.constant 0 : index
    %c0_76 = arith.constant 0 : index
    %110 = vector.load %arg2[%c18, %c0_75, %c0_76] : memref<36x128x128xbf16, #tpu.memory_space<vmem>>, vector<1x128x128xbf16>
    %111 = vector.shape_cast %110 : vector<1x128x128xbf16> to vector<128x128xbf16>
    %112 = arith.truncf %107 : vector<8x128xf32> to vector<8x128xbf16>
    %cst_77 = arith.constant dense<0.000000e+00> : vector<8x128xf32>
    %113 = tpu.matmul %112, %111, %cst_77 {dimension_numbers = #tpu.dot_dimension_numbers<[1], [0], [0], [1], [0, 0, 1, 1], [], []>} : vector<8x128xbf16>, vector<128x128xbf16>, vector<8x128xf32> -> vector<8x128xf32>
    %114 = arith.truncf %109 : vector<8x128xf32> to vector<8x128xbf16>
    %cst_78 = arith.constant dense<0.000000e+00> : vector<8x128xf32>
    %115 = tpu.matmul %114, %111, %cst_78 {dimension_numbers = #tpu.dot_dimension_numbers<[1], [0], [0], [1], [0, 0, 1, 1], [], []>} : vector<8x128xbf16>, vector<128x128xbf16>, vector<8x128xf32> -> vector<8x128xf32>
    %c19 = arith.constant 19 : index
    %c0_79 = arith.constant 0 : index
    %c0_80 = arith.constant 0 : index
    %116 = vector.load %arg2[%c19, %c0_79, %c0_80] : memref<36x128x128xbf16, #tpu.memory_space<vmem>>, vector<1x128x128xbf16>
    %117 = vector.shape_cast %116 : vector<1x128x128xbf16> to vector<128x128xbf16>
    %118 = arith.truncf %113 : vector<8x128xf32> to vector<8x128xbf16>
    %cst_81 = arith.constant dense<0.000000e+00> : vector<8x128xf32>
    %119 = tpu.matmul %118, %117, %cst_81 {dimension_numbers = #tpu.dot_dimension_numbers<[1], [0], [0], [1], [0, 0, 1, 1], [], []>} : vector<8x128xbf16>, vector<128x128xbf16>, vector<8x128xf32> -> vector<8x128xf32>
    %120 = arith.truncf %115 : vector<8x128xf32> to vector<8x128xbf16>
    %cst_82 = arith.constant dense<0.000000e+00> : vector<8x128xf32>
    %121 = tpu.matmul %120, %117, %cst_82 {dimension_numbers = #tpu.dot_dimension_numbers<[1], [0], [0], [1], [0, 0, 1, 1], [], []>} : vector<8x128xbf16>, vector<128x128xbf16>, vector<8x128xf32> -> vector<8x128xf32>
    %c20 = arith.constant 20 : index
    %c0_83 = arith.constant 0 : index
    %c0_84 = arith.constant 0 : index
    %122 = vector.load %arg2[%c20, %c0_83, %c0_84] : memref<36x128x128xbf16, #tpu.memory_space<vmem>>, vector<1x128x128xbf16>
    %123 = vector.shape_cast %122 : vector<1x128x128xbf16> to vector<128x128xbf16>
    %124 = arith.truncf %119 : vector<8x128xf32> to vector<8x128xbf16>
    %cst_85 = arith.constant dense<0.000000e+00> : vector<8x128xf32>
    %125 = tpu.matmul %124, %123, %cst_85 {dimension_numbers = #tpu.dot_dimension_numbers<[1], [0], [0], [1], [0, 0, 1, 1], [], []>} : vector<8x128xbf16>, vector<128x128xbf16>, vector<8x128xf32> -> vector<8x128xf32>
    %126 = arith.truncf %121 : vector<8x128xf32> to vector<8x128xbf16>
    %cst_86 = arith.constant dense<0.000000e+00> : vector<8x128xf32>
    %127 = tpu.matmul %126, %123, %cst_86 {dimension_numbers = #tpu.dot_dimension_numbers<[1], [0], [0], [1], [0, 0, 1, 1], [], []>} : vector<8x128xbf16>, vector<128x128xbf16>, vector<8x128xf32> -> vector<8x128xf32>
    %c21 = arith.constant 21 : index
    %c0_87 = arith.constant 0 : index
    %c0_88 = arith.constant 0 : index
    %128 = vector.load %arg2[%c21, %c0_87, %c0_88] : memref<36x128x128xbf16, #tpu.memory_space<vmem>>, vector<1x128x128xbf16>
    %129 = vector.shape_cast %128 : vector<1x128x128xbf16> to vector<128x128xbf16>
    %130 = arith.truncf %125 : vector<8x128xf32> to vector<8x128xbf16>
    %cst_89 = arith.constant dense<0.000000e+00> : vector<8x128xf32>
    %131 = tpu.matmul %130, %129, %cst_89 {dimension_numbers = #tpu.dot_dimension_numbers<[1], [0], [0], [1], [0, 0, 1, 1], [], []>} : vector<8x128xbf16>, vector<128x128xbf16>, vector<8x128xf32> -> vector<8x128xf32>
    %132 = arith.truncf %127 : vector<8x128xf32> to vector<8x128xbf16>
    %cst_90 = arith.constant dense<0.000000e+00> : vector<8x128xf32>
    %133 = tpu.matmul %132, %129, %cst_90 {dimension_numbers = #tpu.dot_dimension_numbers<[1], [0], [0], [1], [0, 0, 1, 1], [], []>} : vector<8x128xbf16>, vector<128x128xbf16>, vector<8x128xf32> -> vector<8x128xf32>
    %c22 = arith.constant 22 : index
    %c0_91 = arith.constant 0 : index
    %c0_92 = arith.constant 0 : index
    %134 = vector.load %arg2[%c22, %c0_91, %c0_92] : memref<36x128x128xbf16, #tpu.memory_space<vmem>>, vector<1x128x128xbf16>
    %135 = vector.shape_cast %134 : vector<1x128x128xbf16> to vector<128x128xbf16>
    %136 = arith.truncf %131 : vector<8x128xf32> to vector<8x128xbf16>
    %cst_93 = arith.constant dense<0.000000e+00> : vector<8x128xf32>
    %137 = tpu.matmul %136, %135, %cst_93 {dimension_numbers = #tpu.dot_dimension_numbers<[1], [0], [0], [1], [0, 0, 1, 1], [], []>} : vector<8x128xbf16>, vector<128x128xbf16>, vector<8x128xf32> -> vector<8x128xf32>
    %138 = arith.truncf %133 : vector<8x128xf32> to vector<8x128xbf16>
    %cst_94 = arith.constant dense<0.000000e+00> : vector<8x128xf32>
    %139 = tpu.matmul %138, %135, %cst_94 {dimension_numbers = #tpu.dot_dimension_numbers<[1], [0], [0], [1], [0, 0, 1, 1], [], []>} : vector<8x128xbf16>, vector<128x128xbf16>, vector<8x128xf32> -> vector<8x128xf32>
    %c23 = arith.constant 23 : index
    %c0_95 = arith.constant 0 : index
    %c0_96 = arith.constant 0 : index
    %140 = vector.load %arg2[%c23, %c0_95, %c0_96] : memref<36x128x128xbf16, #tpu.memory_space<vmem>>, vector<1x128x128xbf16>
    %141 = vector.shape_cast %140 : vector<1x128x128xbf16> to vector<128x128xbf16>
    %142 = arith.truncf %137 : vector<8x128xf32> to vector<8x128xbf16>
    %cst_97 = arith.constant dense<0.000000e+00> : vector<8x128xf32>
    %143 = tpu.matmul %142, %141, %cst_97 {dimension_numbers = #tpu.dot_dimension_numbers<[1], [0], [0], [1], [0, 0, 1, 1], [], []>} : vector<8x128xbf16>, vector<128x128xbf16>, vector<8x128xf32> -> vector<8x128xf32>
    %144 = arith.truncf %139 : vector<8x128xf32> to vector<8x128xbf16>
    %cst_98 = arith.constant dense<0.000000e+00> : vector<8x128xf32>
    %145 = tpu.matmul %144, %141, %cst_98 {dimension_numbers = #tpu.dot_dimension_numbers<[1], [0], [0], [1], [0, 0, 1, 1], [], []>} : vector<8x128xbf16>, vector<128x128xbf16>, vector<8x128xf32> -> vector<8x128xf32>
    %c24 = arith.constant 24 : index
    %c0_99 = arith.constant 0 : index
    %c0_100 = arith.constant 0 : index
    %146 = vector.load %arg2[%c24, %c0_99, %c0_100] : memref<36x128x128xbf16, #tpu.memory_space<vmem>>, vector<1x128x128xbf16>
    %147 = vector.shape_cast %146 : vector<1x128x128xbf16> to vector<128x128xbf16>
    %148 = arith.truncf %143 : vector<8x128xf32> to vector<8x128xbf16>
    %cst_101 = arith.constant dense<0.000000e+00> : vector<8x128xf32>
    %149 = tpu.matmul %148, %147, %cst_101 {dimension_numbers = #tpu.dot_dimension_numbers<[1], [0], [0], [1], [0, 0, 1, 1], [], []>} : vector<8x128xbf16>, vector<128x128xbf16>, vector<8x128xf32> -> vector<8x128xf32>
    %150 = arith.truncf %145 : vector<8x128xf32> to vector<8x128xbf16>
    %cst_102 = arith.constant dense<0.000000e+00> : vector<8x128xf32>
    %151 = tpu.matmul %150, %147, %cst_102 {dimension_numbers = #tpu.dot_dimension_numbers<[1], [0], [0], [1], [0, 0, 1, 1], [], []>} : vector<8x128xbf16>, vector<128x128xbf16>, vector<8x128xf32> -> vector<8x128xf32>
    %c25 = arith.constant 25 : index
    %c0_103 = arith.constant 0 : index
    %c0_104 = arith.constant 0 : index
    %152 = vector.load %arg2[%c25, %c0_103, %c0_104] : memref<36x128x128xbf16, #tpu.memory_space<vmem>>, vector<1x128x128xbf16>
    %153 = vector.shape_cast %152 : vector<1x128x128xbf16> to vector<128x128xbf16>
    %154 = arith.truncf %149 : vector<8x128xf32> to vector<8x128xbf16>
    %cst_105 = arith.constant dense<0.000000e+00> : vector<8x128xf32>
    %155 = tpu.matmul %154, %153, %cst_105 {dimension_numbers = #tpu.dot_dimension_numbers<[1], [0], [0], [1], [0, 0, 1, 1], [], []>} : vector<8x128xbf16>, vector<128x128xbf16>, vector<8x128xf32> -> vector<8x128xf32>
    %156 = arith.truncf %151 : vector<8x128xf32> to vector<8x128xbf16>
    %cst_106 = arith.constant dense<0.000000e+00> : vector<8x128xf32>
    %157 = tpu.matmul %156, %153, %cst_106 {dimension_numbers = #tpu.dot_dimension_numbers<[1], [0], [0], [1], [0, 0, 1, 1], [], []>} : vector<8x128xbf16>, vector<128x128xbf16>, vector<8x128xf32> -> vector<8x128xf32>
    %c26 = arith.constant 26 : index
    %c0_107 = arith.constant 0 : index
    %c0_108 = arith.constant 0 : index
    %158 = vector.load %arg2[%c26, %c0_107, %c0_108] : memref<36x128x128xbf16, #tpu.memory_space<vmem>>, vector<1x128x128xbf16>
    %159 = vector.shape_cast %158 : vector<1x128x128xbf16> to vector<128x128xbf16>
    %160 = arith.truncf %155 : vector<8x128xf32> to vector<8x128xbf16>
    %cst_109 = arith.constant dense<0.000000e+00> : vector<8x128xf32>
    %161 = tpu.matmul %160, %159, %cst_109 {dimension_numbers = #tpu.dot_dimension_numbers<[1], [0], [0], [1], [0, 0, 1, 1], [], []>} : vector<8x128xbf16>, vector<128x128xbf16>, vector<8x128xf32> -> vector<8x128xf32>
    %162 = arith.truncf %157 : vector<8x128xf32> to vector<8x128xbf16>
    %cst_110 = arith.constant dense<0.000000e+00> : vector<8x128xf32>
    %163 = tpu.matmul %162, %159, %cst_110 {dimension_numbers = #tpu.dot_dimension_numbers<[1], [0], [0], [1], [0, 0, 1, 1], [], []>} : vector<8x128xbf16>, vector<128x128xbf16>, vector<8x128xf32> -> vector<8x128xf32>
    %c27 = arith.constant 27 : index
    %c0_111 = arith.constant 0 : index
    %c0_112 = arith.constant 0 : index
    %164 = vector.load %arg2[%c27, %c0_111, %c0_112] : memref<36x128x128xbf16, #tpu.memory_space<vmem>>, vector<1x128x128xbf16>
    %165 = vector.shape_cast %164 : vector<1x128x128xbf16> to vector<128x128xbf16>
    %166 = arith.truncf %161 : vector<8x128xf32> to vector<8x128xbf16>
    %cst_113 = arith.constant dense<0.000000e+00> : vector<8x128xf32>
    %167 = tpu.matmul %166, %165, %cst_113 {dimension_numbers = #tpu.dot_dimension_numbers<[1], [0], [0], [1], [0, 0, 1, 1], [], []>} : vector<8x128xbf16>, vector<128x128xbf16>, vector<8x128xf32> -> vector<8x128xf32>
    %168 = arith.truncf %163 : vector<8x128xf32> to vector<8x128xbf16>
    %cst_114 = arith.constant dense<0.000000e+00> : vector<8x128xf32>
    %169 = tpu.matmul %168, %165, %cst_114 {dimension_numbers = #tpu.dot_dimension_numbers<[1], [0], [0], [1], [0, 0, 1, 1], [], []>} : vector<8x128xbf16>, vector<128x128xbf16>, vector<8x128xf32> -> vector<8x128xf32>
    %c28 = arith.constant 28 : index
    %c0_115 = arith.constant 0 : index
    %c0_116 = arith.constant 0 : index
    %170 = vector.load %arg2[%c28, %c0_115, %c0_116] : memref<36x128x128xbf16, #tpu.memory_space<vmem>>, vector<1x128x128xbf16>
    %171 = vector.shape_cast %170 : vector<1x128x128xbf16> to vector<128x128xbf16>
    %172 = arith.truncf %167 : vector<8x128xf32> to vector<8x128xbf16>
    %cst_117 = arith.constant dense<0.000000e+00> : vector<8x128xf32>
    %173 = tpu.matmul %172, %171, %cst_117 {dimension_numbers = #tpu.dot_dimension_numbers<[1], [0], [0], [1], [0, 0, 1, 1], [], []>} : vector<8x128xbf16>, vector<128x128xbf16>, vector<8x128xf32> -> vector<8x128xf32>
    %174 = arith.truncf %169 : vector<8x128xf32> to vector<8x128xbf16>
    %cst_118 = arith.constant dense<0.000000e+00> : vector<8x128xf32>
    %175 = tpu.matmul %174, %171, %cst_118 {dimension_numbers = #tpu.dot_dimension_numbers<[1], [0], [0], [1], [0, 0, 1, 1], [], []>} : vector<8x128xbf16>, vector<128x128xbf16>, vector<8x128xf32> -> vector<8x128xf32>
    %c29 = arith.constant 29 : index
    %c0_119 = arith.constant 0 : index
    %c0_120 = arith.constant 0 : index
    %176 = vector.load %arg2[%c29, %c0_119, %c0_120] : memref<36x128x128xbf16, #tpu.memory_space<vmem>>, vector<1x128x128xbf16>
    %177 = vector.shape_cast %176 : vector<1x128x128xbf16> to vector<128x128xbf16>
    %178 = arith.truncf %173 : vector<8x128xf32> to vector<8x128xbf16>
    %cst_121 = arith.constant dense<0.000000e+00> : vector<8x128xf32>
    %179 = tpu.matmul %178, %177, %cst_121 {dimension_numbers = #tpu.dot_dimension_numbers<[1], [0], [0], [1], [0, 0, 1, 1], [], []>} : vector<8x128xbf16>, vector<128x128xbf16>, vector<8x128xf32> -> vector<8x128xf32>
    %180 = arith.truncf %175 : vector<8x128xf32> to vector<8x128xbf16>
    %cst_122 = arith.constant dense<0.000000e+00> : vector<8x128xf32>
    %181 = tpu.matmul %180, %177, %cst_122 {dimension_numbers = #tpu.dot_dimension_numbers<[1], [0], [0], [1], [0, 0, 1, 1], [], []>} : vector<8x128xbf16>, vector<128x128xbf16>, vector<8x128xf32> -> vector<8x128xf32>
    %c30 = arith.constant 30 : index
    %c0_123 = arith.constant 0 : index
    %c0_124 = arith.constant 0 : index
    %182 = vector.load %arg2[%c30, %c0_123, %c0_124] : memref<36x128x128xbf16, #tpu.memory_space<vmem>>, vector<1x128x128xbf16>
    %183 = vector.shape_cast %182 : vector<1x128x128xbf16> to vector<128x128xbf16>
    %184 = arith.truncf %179 : vector<8x128xf32> to vector<8x128xbf16>
    %cst_125 = arith.constant dense<0.000000e+00> : vector<8x128xf32>
    %185 = tpu.matmul %184, %183, %cst_125 {dimension_numbers = #tpu.dot_dimension_numbers<[1], [0], [0], [1], [0, 0, 1, 1], [], []>} : vector<8x128xbf16>, vector<128x128xbf16>, vector<8x128xf32> -> vector<8x128xf32>
    %186 = arith.truncf %181 : vector<8x128xf32> to vector<8x128xbf16>
    %cst_126 = arith.constant dense<0.000000e+00> : vector<8x128xf32>
    %187 = tpu.matmul %186, %183, %cst_126 {dimension_numbers = #tpu.dot_dimension_numbers<[1], [0], [0], [1], [0, 0, 1, 1], [], []>} : vector<8x128xbf16>, vector<128x128xbf16>, vector<8x128xf32> -> vector<8x128xf32>
    %c31 = arith.constant 31 : index
    %c0_127 = arith.constant 0 : index
    %c0_128 = arith.constant 0 : index
    %188 = vector.load %arg2[%c31, %c0_127, %c0_128] : memref<36x128x128xbf16, #tpu.memory_space<vmem>>, vector<1x128x128xbf16>
    %189 = vector.shape_cast %188 : vector<1x128x128xbf16> to vector<128x128xbf16>
    %190 = arith.truncf %185 : vector<8x128xf32> to vector<8x128xbf16>
    %cst_129 = arith.constant dense<0.000000e+00> : vector<8x128xf32>
    %191 = tpu.matmul %190, %189, %cst_129 {dimension_numbers = #tpu.dot_dimension_numbers<[1], [0], [0], [1], [0, 0, 1, 1], [], []>} : vector<8x128xbf16>, vector<128x128xbf16>, vector<8x128xf32> -> vector<8x128xf32>
    %192 = arith.truncf %187 : vector<8x128xf32> to vector<8x128xbf16>
    %cst_130 = arith.constant dense<0.000000e+00> : vector<8x128xf32>
    %193 = tpu.matmul %192, %189, %cst_130 {dimension_numbers = #tpu.dot_dimension_numbers<[1], [0], [0], [1], [0, 0, 1, 1], [], []>} : vector<8x128xbf16>, vector<128x128xbf16>, vector<8x128xf32> -> vector<8x128xf32>
    %c32 = arith.constant 32 : index
    %c0_131 = arith.constant 0 : index
    %c0_132 = arith.constant 0 : index
    %194 = vector.load %arg2[%c32, %c0_131, %c0_132] : memref<36x128x128xbf16, #tpu.memory_space<vmem>>, vector<1x128x128xbf16>
    %195 = vector.shape_cast %194 : vector<1x128x128xbf16> to vector<128x128xbf16>
    %196 = arith.truncf %191 : vector<8x128xf32> to vector<8x128xbf16>
    %cst_133 = arith.constant dense<0.000000e+00> : vector<8x128xf32>
    %197 = tpu.matmul %196, %195, %cst_133 {dimension_numbers = #tpu.dot_dimension_numbers<[1], [0], [0], [1], [0, 0, 1, 1], [], []>} : vector<8x128xbf16>, vector<128x128xbf16>, vector<8x128xf32> -> vector<8x128xf32>
    %198 = arith.truncf %193 : vector<8x128xf32> to vector<8x128xbf16>
    %cst_134 = arith.constant dense<0.000000e+00> : vector<8x128xf32>
    %199 = tpu.matmul %198, %195, %cst_134 {dimension_numbers = #tpu.dot_dimension_numbers<[1], [0], [0], [1], [0, 0, 1, 1], [], []>} : vector<8x128xbf16>, vector<128x128xbf16>, vector<8x128xf32> -> vector<8x128xf32>
    %c33 = arith.constant 33 : index
    %c0_135 = arith.constant 0 : index
    %c0_136 = arith.constant 0 : index
    %200 = vector.load %arg2[%c33, %c0_135, %c0_136] : memref<36x128x128xbf16, #tpu.memory_space<vmem>>, vector<1x128x128xbf16>
    %201 = vector.shape_cast %200 : vector<1x128x128xbf16> to vector<128x128xbf16>
    %202 = arith.truncf %197 : vector<8x128xf32> to vector<8x128xbf16>
    %cst_137 = arith.constant dense<0.000000e+00> : vector<8x128xf32>
    %203 = tpu.matmul %202, %201, %cst_137 {dimension_numbers = #tpu.dot_dimension_numbers<[1], [0], [0], [1], [0, 0, 1, 1], [], []>} : vector<8x128xbf16>, vector<128x128xbf16>, vector<8x128xf32> -> vector<8x128xf32>
    %204 = arith.truncf %199 : vector<8x128xf32> to vector<8x128xbf16>
    %cst_138 = arith.constant dense<0.000000e+00> : vector<8x128xf32>
    %205 = tpu.matmul %204, %201, %cst_138 {dimension_numbers = #tpu.dot_dimension_numbers<[1], [0], [0], [1], [0, 0, 1, 1], [], []>} : vector<8x128xbf16>, vector<128x128xbf16>, vector<8x128xf32> -> vector<8x128xf32>
    %c34 = arith.constant 34 : index
    %c0_139 = arith.constant 0 : index
    %c0_140 = arith.constant 0 : index
    %206 = vector.load %arg2[%c34, %c0_139, %c0_140] : memref<36x128x128xbf16, #tpu.memory_space<vmem>>, vector<1x128x128xbf16>
    %207 = vector.shape_cast %206 : vector<1x128x128xbf16> to vector<128x128xbf16>
    %208 = arith.truncf %203 : vector<8x128xf32> to vector<8x128xbf16>
    %cst_141 = arith.constant dense<0.000000e+00> : vector<8x128xf32>
    %209 = tpu.matmul %208, %207, %cst_141 {dimension_numbers = #tpu.dot_dimension_numbers<[1], [0], [0], [1], [0, 0, 1, 1], [], []>} : vector<8x128xbf16>, vector<128x128xbf16>, vector<8x128xf32> -> vector<8x128xf32>
    %210 = arith.truncf %205 : vector<8x128xf32> to vector<8x128xbf16>
    %cst_142 = arith.constant dense<0.000000e+00> : vector<8x128xf32>
    %211 = tpu.matmul %210, %207, %cst_142 {dimension_numbers = #tpu.dot_dimension_numbers<[1], [0], [0], [1], [0, 0, 1, 1], [], []>} : vector<8x128xbf16>, vector<128x128xbf16>, vector<8x128xf32> -> vector<8x128xf32>
    %c35 = arith.constant 35 : index
    %c0_143 = arith.constant 0 : index
    %c0_144 = arith.constant 0 : index
    %212 = vector.load %arg2[%c35, %c0_143, %c0_144] : memref<36x128x128xbf16, #tpu.memory_space<vmem>>, vector<1x128x128xbf16>
    %213 = vector.shape_cast %212 : vector<1x128x128xbf16> to vector<128x128xbf16>
    %214 = arith.truncf %209 : vector<8x128xf32> to vector<8x128xbf16>
    %cst_145 = arith.constant dense<0.000000e+00> : vector<8x128xf32>
    %215 = tpu.matmul %214, %213, %cst_145 {dimension_numbers = #tpu.dot_dimension_numbers<[1], [0], [0], [1], [0, 0, 1, 1], [], []>} : vector<8x128xbf16>, vector<128x128xbf16>, vector<8x128xf32> -> vector<8x128xf32>
    %216 = arith.truncf %211 : vector<8x128xf32> to vector<8x128xbf16>
    %cst_146 = arith.constant dense<0.000000e+00> : vector<8x128xf32>
    %217 = tpu.matmul %216, %213, %cst_146 {dimension_numbers = #tpu.dot_dimension_numbers<[1], [0], [0], [1], [0, 0, 1, 1], [], []>} : vector<8x128xbf16>, vector<128x128xbf16>, vector<8x128xf32> -> vector<8x128xf32>
    %c0_147 = arith.constant 0 : index
    %c0_148 = arith.constant 0 : index
    %218 = vector.load %arg3[%c0_147, %c0_148] : memref<16x128xf32, #tpu.memory_space<vmem>>, vector<8x128xf32>
    tpu.vector_store %arg3[%c0_147, %c0_148], %215 {strides = array<i32>} : memref<16x128xf32, #tpu.memory_space<vmem>>, vector<8x128xf32>,
    %c8_149 = arith.constant 8 : index
    %c0_150 = arith.constant 0 : index
    %219 = vector.load %arg3[%c8_149, %c0_150] : memref<16x128xf32, #tpu.memory_space<vmem>>, vector<8x128xf32>
    tpu.vector_store %arg3[%c8_149, %c0_150], %217 {strides = array<i32>} : memref<16x128xf32, #tpu.memory_space<vmem>>, vector<8x128xf32>,
    return
  }
  func.func @transform_0(%arg0: i32) -> (i32, i32) {
    %c0_i32 = arith.constant 0 : i32
    %c0_i32_0 = arith.constant 0 : i32
    return %arg0, %c0_i32 : i32, i32
  }
  func.func @transform_1(%arg0: i32) -> (i32, i32, i32) {
    %c0_i32 = arith.constant 0 : i32
    %c0_i32_0 = arith.constant 0 : i32
    %c0_i32_1 = arith.constant 0 : i32
    %c0_i32_2 = arith.constant 0 : i32
    return %c0_i32, %c0_i32_0, %c0_i32_1 : i32, i32, i32
  }
  func.func @transform_2(%arg0: i32) -> (i32, i32) {
    %c0_i32 = arith.constant 0 : i32
    %c0_i32_0 = arith.constant 0 : i32
    return %arg0, %c0_i32 : i32, i32
  }
}

</mosaic_0001>

<llo_original>
// kernel: _forward_impl.1
$region0: #{_forward_impl.1}
  #allocation0 [shape = 'u32[]', space=smem, size = 0x4, offset = 0x4, fixed_abs, tag = 'smem constant byte address 0x4 - core index']
  #allocation1 [shape = 'u32[144,128]{1,0:T(1,128)}', space=vmem, size = 0x12000, scoped, tag = 'internal scratch']
  %s0 = inlined_call_operand.hbm [shape: f32[16,128], index: 0, kind: input, shape index: {}]
  %s1 = inlined_call_operand.hbm [shape: bf16[36,128,128], index: 1, kind: input, shape index: {}]
  %s2 = inlined_call_operand.hbm [shape: f32[16,128], index: 2, kind: output, shape index: {}]
  %s3 = sld [smem:[#allocation0]]
  $region26: #{_forward_impl.1} parent=0
    _
  %s5 = ssub.s32 1, %s3
  %s6 = scalar_select 0, %s5, %s3
  $region1: #{_forward_impl.1} parent=0
    #allocation2 [shape = 'u8[8192]{0}', space=vmem, size = 0x2000, scoped, tag = 'input window, operand 0, single buffered']
    #allocation3 [shape = 's32[1]{0}', space=sflag, size = 0x4, scoped, tag = 'scoped memory for _forward_impl.1']
    #allocation4 [shape = 's32[1]{0}', space=sflag, size = 0x4, scoped, tag = 'scoped memory for _forward_impl.1']
    #allocation5 [shape = 'u8[1179648]{0}', space=vmem, size = 0x120000, scoped, tag = 'input window, operand 1, single buffered']
    #allocation6 [shape = 's32[1]{0}', space=sflag, size = 0x4, scoped, tag = 'scoped memory for _forward_impl.1']
    #allocation7 [shape = 'u8[8192]{0}', space=vmem, size = 0x2000, scoped, tag = 'output window, operand 0, single buffered']
    %7 = vsyncpa [#allocation3], 0
    %8 = vsyncpa [#allocation6], 0
    %9 = vsyncpa [#allocation4], 0
    // Predicated region
    $region2: #{_forward_impl.1} parent=1 // pred_check
      _
    $region3: #{_forward_impl.1} parent=1 // pred_check_branch
      %11 = sbr.rel (0) target = $region5
    $region4: #{_forward_impl.1} parent=1 // pred_region
      %s13 = ssub.s32 256, 256
      %14 = vsyncadd [#allocation3], %s13
      %s15 = sshll.u32 [#allocation2], 4
      %s16 = int_to_ptr.vmem [resolvable:$true] %s15
      %21 = dma.hbm_to_vmem [thread:$0]  %s0, 256, %s16, [#allocation3], 128, 128, 8
    $region5: #{_forward_impl.1} parent=1 // pred_fallthru
      _
    // Predicated region
    $region6: #{_forward_impl.1} parent=1 // pred_check
      _
    $region7: #{_forward_impl.1} parent=1 // pred_check_branch
      %23 = sbr.rel (0) target = $region9
    $region8: #{_forward_impl.1} parent=1 // pred_region
      %s25 = ssub.s32 36864, 36864
      %26 = vsyncadd [#allocation6], %s25
      %s27 = sshll.u32 [#allocation5], 4
      %s28 = int_to_ptr.vmem [resolvable:$true] %s27
      %33 = dma.hbm_to_vmem [thread:$0]  %s1, 36864, %s28, [#allocation6], 64, 64, 4
    $region9: #{_forward_impl.1} parent=1 // pred_fallthru
      _
    // Predicated region
    $region10: #{_forward_impl.1} parent=1 // pred_check
      _
    $region11: #{_forward_impl.1} parent=1 // pred_check_branch
      %35 = sbr.rel (0) target = $region13
    $region12: #{_forward_impl.1} parent=1 // pred_region
      %36 = dma.done [#allocation3], 256
    $region13: #{_forward_impl.1} parent=1 // pred_fallthru
      _
    // Predicated region
    $region14: #{_forward_impl.1} parent=1 // pred_check
      _
    $region15: #{_forward_impl.1} parent=1 // pred_check_branch
      %38 = sbr.rel (0) target = $region17
    $region16: #{_forward_impl.1} parent=1 // pred_region
      %39 = dma.done [#allocation6], 36864
    $region17: #{_forward_impl.1} parent=1 // pred_fallthru
      _
    %v41 = vld [vmem:[#allocation2] sm:$0xff]
    %v42 = vld [vmem:[#allocation2 + $0x8] sm:$0xff]
    %v43 = vld [vmem:[#allocation5] sm:$0xf]
    %v44 = vld [vmem:[#allocation5 + $0x4] sm:$0xf]
    %v45 = vld [vmem:[#allocation5 + $0x8] sm:$0xf]
    %v46 = vld [vmem:[#allocation5 + $0xc] sm:$0xf]
    %v47 = vld [vmem:[#allocation5 + $0x10] sm:$0xf]
    %v48 = vld [vmem:[#allocation5 + $0x14] sm:$0xf]
    %v49 = vld [vmem:[#allocation5 + $0x18] sm:$0xf]
    %v50 = vld [vmem:[#allocation5 + $0x1c] sm:$0xf]
    %v51 = vld [vmem:[#allocation5 + $0x20] sm:$0xf]
    %v52 = vld [vmem:[#allocation5 + $0x24] sm:$0xf]
    %v53 = vld [vmem:[#allocation5 + $0x28] sm:$0xf]
    %v54 = vld [vmem:[#allocation5 + $0x2c] sm:$0xf]
    %v55 = vld [vmem:[#allocation5 + $0x30] sm:$0xf]
    %v56 = vld [vmem:[#allocation5 + $0x34] sm:$0xf]
    %v57 = vld [vmem:[#allocation5 + $0x38] sm:$0xf]
    %v58 = vld [vmem:[#allocation5 + $0x3c] sm:$0xf]
    %v59 = vpack.c.bf16 %v41, %v41
    %v76 = vunpack.c.l.b16 %v43
    %v77 = vunpack.c.l.b16 %v44
    %v78 = vunpack.c.l.b16 %v45
    %v79 = vunpack.c.l.b16 %v46
    %v80 = vunpack.c.l.b16 %v47
    %v81 = vunpack.c.l.b16 %v48
    %v82 = vunpack.c.l.b16 %v49
    %v83 = vunpack.c.l.b16 %v50
    %v84 = vunpack.c.l.b16 %v51
    %v85 = vunpack.c.l.b16 %v52
    %v86 = vunpack.c.l.b16 %v53
    %v87 = vunpack.c.l.b16 %v54
    %v88 = vunpack.c.l.b16 %v55
    %v89 = vunpack.c.l.b16 %v56
    %v90 = vunpack.c.l.b16 %v57
    %v91 = vunpack.c.l.b16 %v58
    %v92 = vpack.c.b16 %v77, %v76
    %v93 = vpack.c.b16 %v79, %v78
    %v94 = vpack.c.b16 %v81, %v80
    %v95 = vpack.c.b16 %v83, %v82
    %v96 = vpack.c.b16 %v85, %v84
    %v97 = vpack.c.b16 %v87, %v86
    %v98 = vpack.c.b16 %v89, %v88
    %v99 = vpack.c.b16 %v91, %v90
    %108 = vmatprep.subr.bf16.mxu0 0
    %109 = vmatpush1.bf16.msra.mxu0 %v99
    %110 = vmatprep.subr.bf16.mxu0 0
    %111 = vmatpush1.bf16.msra.mxu0 %v98
    %112 = vmatprep.subr.bf16.mxu0 0
    %113 = vmatpush1.bf16.msra.mxu0 %v97
    %114 = vmatprep.subr.bf16.mxu0 0
    %115 = vmatpush1.bf16.msra.mxu0 %v96
    %116 = vmatprep.subr.bf16.mxu0 0
    %117 = vmatpush1.bf16.msra.mxu0 %v95
    %118 = vmatprep.subr.bf16.mxu0 0
    %119 = vmatpush1.bf16.msra.mxu0 %v94
    %120 = vmatprep.subr.bf16.mxu0 0
    %121 = vmatpush1.bf16.msra.mxu0 %v93
    %122 = vmatprep.subr.bf16.mxu0 0
    %123 = vmatpush1.bf16.msra.mxu0 %v92
    %124 = vmatprep.subr.bf16.mxu0 0
    %125 = vmatpush2.bf16.msra.mxu0 0
    %126 = vmatprep.subr.bf16.mxu0 0
    %127 = vmatpush2.bf16.msra.mxu0 0
    %128 = vmatprep.subr.bf16.mxu0 0
    %129 = vmatpush2.bf16.msra.mxu0 0
    %130 = vmatprep.subr.bf16.mxu0 0
    %131 = vmatpush2.bf16.msra.mxu0 0
    %132 = vmatprep.subr.bf16.mxu0 0
    %133 = vmatpush2.bf16.msra.mxu0 0
    %134 = vmatprep.subr.bf16.mxu0 0
    %135 = vmatpush2.bf16.msra.mxu0 0
    %136 = vmatprep.subr.bf16.mxu0 0
    %137 = vmatpush2.bf16.msra.mxu0 0
    %138 = vmatprep.subr.bf16.mxu0 0
    %139 = vmatpush2.bf16.msra.mxu0 0
    %140 = vmatprep.mubr.bf16.mxu0 0
    %141 = vmatmul.mubr.bf16.gmra.mxu0 %v59
    %v142 = vpop.f32.mrf.mxu0
    %v143 = vadd.f32 0.0, %v142
    %v144 = vpop.f32.mrf.mxu0
    %v145 = vpop.f32.mrf.mxu0
    %v146 = vpop.f32.mrf.mxu0
    %147 = vdwg.mxu0
    %v148 = vpack.c.bf16 %v42, %v42
    %149 = vmatprep.subr.bf16.mxu0 0
    %150 = vmatpush1.bf16.msra.mxu0 %v99
    %151 = vmatprep.subr.bf16.mxu0 0
    %152 = vmatpush1.bf16.msra.mxu0 %v98
    %153 = vmatprep.subr.bf16.mxu0 0
    %154 = vmatpush1.bf16.msra.mxu0 %v97
    %155 = vmatprep.subr.bf16.mxu0 0
    %156 = vmatpush1.bf16.msra.mxu0 %v96
    %157 = vmatprep.subr.bf16.mxu0 0
    %158 = vmatpush1.bf16.msra.mxu0 %v95
    %159 = vmatprep.subr.bf16.mxu0 0
    %160 = vmatpush1.bf16.msra.mxu0 %v94
    %161 = vmatprep.subr.bf16.mxu0 0
    %162 = vmatpush1.bf16.msra.mxu0 %v93
    %163 = vmatprep.subr.bf16.mxu0 0
    %164 = vmatpush1.bf16.msra.mxu0 %v92
    %165 = vmatprep.subr.bf16.mxu0 0
    %166 = vmatpush2.bf16.msra.mxu0 0
    %167 = vmatprep.subr.bf16.mxu0 0
    %168 = vmatpush2.bf16.msra.mxu0 0
    %169 = vmatprep.subr.bf16.mxu0 0
    %170 = vmatpush2.bf16.msra.mxu0 0
    %171 = vmatprep.subr.bf16.mxu0 0
    %172 = vmatpush2.bf16.msra.mxu0 0
    %173 = vmatprep.subr.bf16.mxu0 0
    %174 = vmatpush2.bf16.msra.mxu0 0
    %175 = vmatprep.subr.bf16.mxu0 0
    %176 = vmatpush2.bf16.msra.mxu0 0
    %177 = vmatprep.subr.bf16.mxu0 0
    %178 = vmatpush2.bf16.msra.mxu0 0
    %179 = vmatprep.subr.bf16.mxu0 0
    %180 = vmatpush2.bf16.msra.mxu0 0
    %181 = vmatprep.mubr.bf16.mxu0 0
    %182 = vmatmul.mubr.bf16.gmra.mxu0 %v148
    %v183 = vpop.f32.mrf.mxu0
    %v184 = vadd.f32 0.0, %v183
    %v185 = vpop.f32.mrf.mxu0
    %v186 = vpop.f32.mrf.mxu0
    %v187 = vpop.f32.mrf.mxu0
    %188 = vdwg.mxu0
    %s189 = scalar_lea.vmem [#allocation5], 64
    %v190 = vld [vmem:[%s189] sm:$0xf]
    %v191 = vld [vmem:[%s189 + $0x4] sm:$0xf]
    %v192 = vld [vmem:[%s189 + $0x8] sm:$0xf]
    %v193 = vld [vmem:[%s189 + $0xc] sm:$0xf]
    %v194 = vld [vmem:[%s189 + $0x10] sm:$0xf]
    %v195 = vld [vmem:[%s189 + $0x14] sm:$0xf]
    %v196 = vld [vmem:[%s189 + $0x18] sm:$0xf]
    %v197 = vld [vmem:[%s189 + $0x1c] sm:$0xf]
    %v198 = vld [vmem:[%s189 + $0x20] sm:$0xf]
    %v199 = vld [vmem:[%s189 + $0x24] sm:$0xf]
    %v200 = vld [vmem:[%s189 + $0x28] sm:$0xf]
    %v201 = vld [vmem:[%s189 + $0x2c] sm:$0xf]
    %v202 = vld [vmem:[%s189 + $0x30] sm:$0xf]
    %v203 = vld [vmem:[%s189 + $0x34] sm:$0xf]
    %v204 = vld [vmem:[%s189 + $0x38] sm:$0xf]
    %v205 = vld [vmem:[%s189 + $0x3c] sm:$0xf]
    %v206 = vpack.c.bf16 %v143, %v143
    %v223 = vunpack.c.l.b16 %v190
    %v224 = vunpack.c.l.b16 %v191
    %v225 = vunpack.c.l.b16 %v192
    %v226 = vunpack.c.l.b16 %v193
    %v227 = vunpack.c.l.b16 %v194
    %v228 = vunpack.c.l.b16 %v195
    %v229 = vunpack.c.l.b16 %v196
    %v230 = vunpack.c.l.b16 %v197
    %v231 = vunpack.c.l.b16 %v198
    %v232 = vunpack.c.l.b16 %v199
    %v233 = vunpack.c.l.b16 %v200
    %v234 = vunpack.c.l.b16 %v201
    %v235 = vunpack.c.l.b16 %v202
    %v236 = vunpack.c.l.b16 %v203
    %v237 = vunpack.c.l.b16 %v204
    %v238 = vunpack.c.l.b16 %v205
    %v239 = vpack.c.b16 %v224, %v223
    %v240 = vpack.c.b16 %v226, %v225
    %v241 = vpack.c.b16 %v228, %v227
    %v242 = vpack.c.b16 %v230, %v229
    %v243 = vpack.c.b16 %v232, %v231
    %v244 = vpack.c.b16 %v234, %v233
    %v245 = vpack.c.b16 %v236, %v235
    %v246 = vpack.c.b16 %v238, %v237
    %255 = vmatprep.subr.bf16.mxu0 0
    %256 = vmatpush1.bf16.msra.mxu0 %v246
    %257 = vmatprep.subr.bf16.mxu0 0
    %258 = vmatpush1.bf16.msra.mxu0 %v245
    %259 = vmatprep.subr.bf16.mxu0 0
    %260 = vmatpush1.bf16.msra.mxu0 %v244
    %261 = vmatprep.subr.bf16.mxu0 0
    %262 = vmatpush1.bf16.msra.mxu0 %v243
    %263 = vmatprep.subr.bf16.mxu0 0
    %264 = vmatpush1.bf16.msra.mxu0 %v242
    %265 = vmatprep.subr.bf16.mxu0 0
    %266 = vmatpush1.bf16.msra.mxu0 %v241
    %267 = vmatprep.subr.bf16.mxu0 0
    %268 = vmatpush1.bf16.msra.mxu0 %v240
    %269 = vmatprep.subr.bf16.mxu0 0
    %270 = vmatpush1.bf16.msra.mxu0 %v239
    %271 = vmatprep.subr.bf16.mxu0 0
    %272 = vmatpush2.bf16.msra.mxu0 0
    %273 = vmatprep.subr.bf16.mxu0 0
    %274 = vmatpush2.bf16.msra.mxu0 0
    %275 = vmatprep.subr.bf16.mxu0 0
    %276 = vmatpush2.bf16.msra.mxu0 0
    %277 = vmatprep.subr.bf16.mxu0 0
    %278 = vmatpush2.bf16.msra.mxu0 0
    %279 = vmatprep.subr.bf16.mxu0 0
    %280 = vmatpush2.bf16.msra.mxu0 0
    %281 = vmatprep.subr.bf16.mxu0 0
    %282 = vmatpush2.bf16.msra.mxu0 0
    %283 = vmatprep.subr.bf16.mxu0 0
    %284 = vmatpush2.bf16.msra.mxu0 0
    %285 = vmatprep.subr.bf16.mxu0 0
    %286 = vmatpush2.bf16.msra.mxu0 0
    %287 = vmatprep.mubr.bf16.mxu0 0
    %288 = vmatmul.mubr.bf16.gmra.mxu0 %v206
    %v289 = vpop.f32.mrf.mxu0
    %v290 = vadd.f32 0.0, %v289
    %v291 = vpop.f32.mrf.mxu0
    %v292 = vpop.f32.mrf.mxu0
    %v293 = vpop.f32.mrf.mxu0
    %294 = vdwg.mxu0
    %v295 = vpack.c.bf16 %v184, %v184
    %296 = vmatprep.subr.bf16.mxu0 0
    %297 = vmatpush1.bf16.msra.mxu0 %v246
    %298 = vmatprep.subr.bf16.mxu0 0
    %299 = vmatpush1.bf16.msra.mxu0 %v245
    %300 = vmatprep.subr.bf16.mxu0 0
    %301 = vmatpush1.bf16.msra.mxu0 %v244
    %302 = vmatprep.subr.bf16.mxu0 0
    %303 = vmatpush1.bf16.msra.mxu0 %v243
    %304 = vmatprep.subr.bf16.mxu0 0
    %305 = vmatpush1.bf16.msra.mxu0 %v242
    %306 = vmatprep.subr.bf16.mxu0 0
    %307 = vmatpush1.bf16.msra.mxu0 %v241
    %308 = vmatprep.subr.bf16.mxu0 0
    %309 = vmatpush1.bf16.msra.mxu0 %v240
    %310 = vmatprep.subr.bf16.mxu0 0
    %311 = vmatpush1.bf16.msra.mxu0 %v239
    %312 = vmatprep.subr.bf16.mxu0 0
    %313 = vmatpush2.bf16.msra.mxu0 0
    %314 = vmatprep.subr.bf16.mxu0 0
    %315 = vmatpush2.bf16.msra.mxu0 0
    %316 = vmatprep.subr.bf16.mxu0 0
    %317 = vmatpush2.bf16.msra.mxu0 0
    %318 = vmatprep.subr.bf16.mxu0 0
    %319 = vmatpush2.bf16.msra.mxu0 0
    %320 = vmatprep.subr.bf16.mxu0 0
    %321 = vmatpush2.bf16.msra.mxu0 0
    %322 = vmatprep.subr.bf16.mxu0 0
    %323 = vmatpush2.bf16.msra.mxu0 0
    %324 = vmatprep.subr.bf16.mxu0 0
    %325 = vmatpush2.bf16.msra.mxu0 0
    %326 = vmatprep.subr.bf16.mxu0 0
    %327 = vmatpush2.bf16.msra.mxu0 0
    %328 = vmatprep.mubr.bf16.mxu0 0
    %329 = vmatmul.mubr.bf16.gmra.mxu0 %v295
    %v330 = vpop.f32.mrf.mxu0
    %v331 = vadd.f32 0.0, %v330
    %v332 = vpop.f32.mrf.mxu0
    %v333 = vpop.f32.mrf.mxu0
    %v334 = vpop.f32.mrf.mxu0
    %335 = vdwg.mxu0
    %s336 = scalar_lea.vmem [#allocation5], 128
    %v337 = vld [vmem:[%s336] sm:$0xf]
    %v338 = vld [vmem:[%s336 + $0x4] sm:$0xf]
    %v339 = vld [vmem:[%s336 + $0x8] sm:$0xf]
    %v340 = vld [vmem:[%s336 + $0xc] sm:$0xf]
    %v341 = vld [vmem:[%s336 + $0x10] sm:$0xf]
    %v342 = vld [vmem:[%s336 + $0x14] sm:$0xf]
    %v343 = vld [vmem:[%s336 + $0x18] sm:$0xf]
    %v344 = vld [vmem:[%s336 + $0x1c] sm:$0xf]
    %v345 = vld [vmem:[%s336 + $0x20] sm:$0xf]
    %v346 = vld [vmem:[%s336 + $0x24] sm:$0xf]
    %v347 = vld [vmem:[%s336 + $0x28] sm:$0xf]
    %v348 = vld [vmem:[%s336 + $0x2c] sm:$0xf]
    %v349 = vld [vmem:[%s336 + $0x30] sm:$0xf]
    %v350 = vld [vmem:[%s336 + $0x34] sm:$0xf]
    %v351 = vld [vmem:[%s336 + $0x38] sm:$0xf]
    %v352 = vld [vmem:[%s336 + $0x3c] sm:$0xf]
    %v353 = vpack.c.bf16 %v290, %v290
    %v370 = vunpack.c.l.b16 %v337
    %v371 = vunpack.c.l.b16 %v338
    %v372 = vunpack.c.l.b16 %v339
    %v373 = vunpack.c.l.b16 %v340
    %v374 = vunpack.c.l.b16 %v341
    %v375 = vunpack.c.l.b16 %v342
    %v376 = vunpack.c.l.b16 %v343
    %v377 = vunpack.c.l.b16 %v344
    %v378 = vunpack.c.l.b16 %v345
    %v379 = vunpack.c.l.b16 %v346
    %v380 = vunpack.c.l.b16 %v347
    %v381 = vunpack.c.l.b16 %v348
    %v382 = vunpack.c.l.b16 %v349
    %v383 = vunpack.c.l.b16 %v350
    %v384 = vunpack.c.l.b16 %v351
    %v385 = vunpack.c.l.b16 %v352
    %v386 = vpack.c.b16 %v371, %v370
    %v387 = vpack.c.b16 %v373, %v372
    %v388 = vpack.c.b16 %v375, %v374
    %v389 = vpack.c.b16 %v377, %v376
    %v390 = vpack.c.b16 %v379, %v378
    %v391 = vpack.c.b16 %v381, %v380
    %v392 = vpack.c.b16 %v383, %v382
    %v393 = vpack.c.b16 %v385, %v384
    %402 = vmatprep.subr.bf16.mxu0 0
    %403 = vmatpush1.bf16.msra.mxu0 %v393
    %404 = vmatprep.subr.bf16.mxu0 0
    %405 = vmatpush1.bf16.msra.mxu0 %v392
    %406 = vmatprep.subr.bf16.mxu0 0
    %407 = vmatpush1.bf16.msra.mxu0 %v391
    %408 = vmatprep.subr.bf16.mxu0 0
    %409 = vmatpush1.bf16.msra.mxu0 %v390
    %410 = vmatprep.subr.bf16.mxu0 0
    %411 = vmatpush1.bf16.msra.mxu0 %v389
    %412 = vmatprep.subr.bf16.mxu0 0
    %413 = vmatpush1.bf16.msra.mxu0 %v388
    %414 = vmatprep.subr.bf16.mxu0 0
    %415 = vmatpush1.bf16.msra.mxu0 %v387
    %416 = vmatprep.subr.bf16.mxu0 0
    %417 = vmatpush1.bf16.msra.mxu0 %v386
    %418 = vmatprep.subr.bf16.mxu0 0
    %419 = vmatpush2.bf16.msra.mxu0 0
    %420 = vmatprep.subr.bf16.mxu0 0
    %421 = vmatpush2.bf16.msra.mxu0 0
    %422 = vmatprep.subr.bf16.mxu0 0
    %423 = vmatpush2.bf16.msra.mxu0 0
    %424 = vmatprep.subr.bf16.mxu0 0
    %425 = vmatpush2.bf16.msra.mxu0 0
    %426 = vmatprep.subr.bf16.mxu0 0
    %427 = vmatpush2.bf16.msra.mxu0 0
    %428 = vmatprep.subr.bf16.mxu0 0
    %429 = vmatpush2.bf16.msra.mxu0 0
    %430 = vmatprep.subr.bf16.mxu0 0
    %431 = vmatpush2.bf16.msra.mxu0 0
    %432 = vmatprep.subr.bf16.mxu0 0
    %433 = vmatpush2.bf16.msra.mxu0 0
    %434 = vmatprep.mubr.bf16.mxu0 0
    %435 = vmatmul.mubr.bf16.gmra.mxu0 %v353
    %v436 = vpop.f32.mrf.mxu0
    %v437 = vadd.f32 0.0, %v436
    %v438 = vpop.f32.mrf.mxu0
    %v439 = vpop.f32.mrf.mxu0
    %v440 = vpop.f32.mrf.mxu0
    %441 = vdwg.mxu0
    %v442 = vpack.c.bf16 %v331, %v331
    %443 = vmatprep.subr.bf16.mxu0 0
    %444 = vmatpush1.bf16.msra.mxu0 %v393
    %445 = vmatprep.subr.bf16.mxu0 0
    %446 = vmatpush1.bf16.msra.mxu0 %v392
    %447 = vmatprep.subr.bf16.mxu0 0
    %448 = vmatpush1.bf16.msra.mxu0 %v391
    %449 = vmatprep.subr.bf16.mxu0 0
    %450 = vmatpush1.bf16.msra.mxu0 %v390
    %451 = vmatprep.subr.bf16.mxu0 0
    %452 = vmatpush1.bf16.msra.mxu0 %v389
    %453 = vmatprep.subr.bf16.mxu0 0
    %454 = vmatpush1.bf16.msra.mxu0 %v388
    %455 = vmatprep.subr.bf16.mxu0 0
    %456 = vmatpush1.bf16.msra.mxu0 %v387
    %457 = vmatprep.subr.bf16.mxu0 0
    %458 = vmatpush1.bf16.msra.mxu0 %v386
    %459 = vmatprep.subr.bf16.mxu0 0
    %460 = vmatpush2.bf16.msra.mxu0 0
    %461 = vmatprep.subr.bf16.mxu0 0
    %462 = vmatpush2.bf16.msra.mxu0 0
    %463 = vmatprep.subr.bf16.mxu0 0
    %464 = vmatpush2.bf16.msra.mxu0 0
    %465 = vmatprep.subr.bf16.mxu0 0
    %466 = vmatpush2.bf16.msra.mxu0 0
    %467 = vmatprep.subr.bf16.mxu0 0
    %468 = vmatpush2.bf16.msra.mxu0 0
    %469 = vmatprep.subr.bf16.mxu0 0
    %470 = vmatpush2.bf16.msra.mxu0 0
    %471 = vmatprep.subr.bf16.mxu0 0
    %472 = vmatpush2.bf16.msra.mxu0 0
    %473 = vmatprep.subr.bf16.mxu0 0
    %474 = vmatpush2.bf16.msra.mxu0 0
    %475 = vmatprep.mubr.bf16.mxu0 0
    %476 = vmatmul.mubr.bf16.gmra.mxu0 %v442
    %v477 = vpop.f32.mrf.mxu0
    %v478 = vadd.f32 0.0, %v477
    %v479 = vpop.f32.mrf.mxu0
    %v480 = vpop.f32.mrf.mxu0
    %v481 = vpop.f32.mrf.mxu0
    %482 = vdwg.mxu0
    %s483 = scalar_lea.vmem [#allocation5], 192
    %v484 = vld [vmem:[%s483] sm:$0xf]
    %v485 = vld [vmem:[%s483 + $0x4] sm:$0xf]
    %v486 = vld [vmem:[%s483 + $0x8] sm:$0xf]
    %v487 = vld [vmem:[%s483 + $0xc] sm:$0xf]
    %v488 = vld [vmem:[%s483 + $0x10] sm:$0xf]
    %v489 = vld [vmem:[%s483 + $0x14] sm:$0xf]
    %v490 = vld [vmem:[%s483 + $0x18] sm:$0xf]
    %v491 = vld [vmem:[%s483 + $0x1c] sm:$0xf]
    %v492 = vld [vmem:[%s483 + $0x20] sm:$0xf]
    %v493 = vld [vmem:[%s483 + $0x24] sm:$0xf]
    %v494 = vld [vmem:[%s483 + $0x28] sm:$0xf]
    %v495 = vld [vmem:[%s483 + $0x2c] sm:$0xf]
    %v496 = vld [vmem:[%s483 + $0x30] sm:$0xf]
    %v497 = vld [vmem:[%s483 + $0x34] sm:$0xf]
    %v498 = vld [vmem:[%s483 + $0x38] sm:$0xf]
    %v499 = vld [vmem:[%s483 + $0x3c] sm:$0xf]
    %v500 = vpack.c.bf16 %v437, %v437
    %v517 = vunpack.c.l.b16 %v484
    %v518 = vunpack.c.l.b16 %v485
    %v519 = vunpack.c.l.b16 %v486
    %v520 = vunpack.c.l.b16 %v487
    %v521 = vunpack.c.l.b16 %v488
    %v522 = vunpack.c.l.b16 %v489
    %v523 = vunpack.c.l.b16 %v490
    %v524 = vunpack.c.l.b16 %v491
    %v525 = vunpack.c.l.b16 %v492
    %v526 = vunpack.c.l.b16 %v493
    %v527 = vunpack.c.l.b16 %v494
    %v528 = vunpack.c.l.b16 %v495
    %v529 = vunpack.c.l.b16 %v496
    %v530 = vunpack.c.l.b16 %v497
    %v531 = vunpack.c.l.b16 %v498
    %v532 = vunpack.c.l.b16 %v499
    %v533 = vpack.c.b16 %v518, %v517
    %v534 = vpack.c.b16 %v520, %v519
    %v535 = vpack.c.b16 %v522, %v521
    %v536 = vpack.c.b16 %v524, %v523
    %v537 = vpack.c.b16 %v526, %v525
    %v538 = vpack.c.b16 %v528, %v527
    %v539 = vpack.c.b16 %v530, %v529
    %v540 = vpack.c.b16 %v532, %v531
    %549 = vmatprep.subr.bf16.mxu0 0
    %550 = vmatpush1.bf16.msra.mxu0 %v540
    %551 = vmatprep.subr.bf16.mxu0 0
    %552 = vmatpush1.bf16.msra.mxu0 %v539
    %553 = vmatprep.subr.bf16.mxu0 0
    %554 = vmatpush1.bf16.msra.mxu0 %v538
    %555 = vmatprep.subr.bf16.mxu0 0
    %556 = vmatpush1.bf16.msra.mxu0 %v537
    %557 = vmatprep.subr.bf16.mxu0 0
    %558 = vmatpush1.bf16.msra.mxu0 %v536
    %559 = vmatprep.subr.bf16.mxu0 0
    %560 = vmatpush1.bf16.msra.mxu0 %v535
    %561 = vmatprep.subr.bf16.mxu0 0
    %562 = vmatpush1.bf16.msra.mxu0 %v534
    %563 = vmatprep.subr.bf16.mxu0 0
    %564 = vmatpush1.bf16.msra.mxu0 %v533
    %565 = vmatprep.subr.bf16.mxu0 0
    %566 = vmatpush2.bf16.msra.mxu0 0
    %567 = vmatprep.subr.bf16.mxu0 0
    %568 = vmatpush2.bf16.msra.mxu0 0
    %569 = vmatprep.subr.bf16.mxu0 0
    %570 = vmatpush2.bf16.msra.mxu0 0
    %571 = vmatprep.subr.bf16.mxu0 0
    %572 = vmatpush2.bf16.msra.mxu0 0
    %573 = vmatprep.subr.bf16.mxu0 0
    %574 = vmatpush2.bf16.msra.mxu0 0
    %575 = vmatprep.subr.bf16.mxu0 0
    %576 = vmatpush2.bf16.msra.mxu0 0
    %577 = vmatprep.subr.bf16.mxu0 0
    %578 = vmatpush2.bf16.msra.mxu0 0
    %579 = vmatprep.subr.bf16.mxu0 0
    %580 = vmatpush2.bf16.msra.mxu0 0
    %581 = vmatprep.mubr.bf16.mxu0 0
    %582 = vmatmul.mubr.bf16.gmra.mxu0 %v500
    %v583 = vpop.f32.mrf.mxu0
    %v584 = vadd.f32 0.0, %v583
    %v585 = vpop.f32.mrf.mxu0
    %v586 = vpop.f32.mrf.mxu0
    %v587 = vpop.f32.mrf.mxu0
    %588 = vdwg.mxu0
    %v589 = vpack.c.bf16 %v478, %v478
    %590 = vmatprep.subr.bf16.mxu0 0
    %591 = vmatpush1.bf16.msra.mxu0 %v540
    %592 = vmatprep.subr.bf16.mxu0 0
    %593 = vmatpush1.bf16.msra.mxu0 %v539
    %594 = vmatprep.subr.bf16.mxu0 0
    %595 = vmatpush1.bf16.msra.mxu0 %v538
    %596 = vmatprep.subr.bf16.mxu0 0
    %597 = vmatpush1.bf16.msra.mxu0 %v537
    %598 = vmatprep.subr.bf16.mxu0 0
    %599 = vmatpush1.bf16.msra.mxu0 %v536
    %600 = vmatprep.subr.bf16.mxu0 0
    %601 = vmatpush1.bf16.msra.mxu0 %v535
    %602 = vmatprep.subr.bf16.mxu0 0
    %603 = vmatpush1.bf16.msra.mxu0 %v534
    %604 = vmatprep.subr.bf16.mxu0 0
    %605 = vmatpush1.bf16.msra.mxu0 %v533
    %606 = vmatprep.subr.bf16.mxu0 0
    %607 = vmatpush2.bf16.msra.mxu0 0
    %608 = vmatprep.subr.bf16.mxu0 0
    %609 = vmatpush2.bf16.msra.mxu0 0
    %610 = vmatprep.subr.bf16.mxu0 0
    %611 = vmatpush2.bf16.msra.mxu0 0
    %612 = vmatprep.subr.bf16.mxu0 0
    %613 = vmatpush2.bf16.msra.mxu0 0
    %614 = vmatprep.subr.bf16.mxu0 0
    %615 = vmatpush2.bf16.msra.mxu0 0
    %616 = vmatprep.subr.bf16.mxu0 0
    %617 = vmatpush2.bf16.msra.mxu0 0
    %618 = vmatprep.subr.bf16.mxu0 0
    %619 = vmatpush2.bf16.msra.mxu0 0
    %620 = vmatprep.subr.bf16.mxu0 0
    %621 = vmatpush2.bf16.msra.mxu0 0
    %622 = vmatprep.mubr.bf16.mxu0 0
    %623 = vmatmul.mubr.bf16.gmra.mxu0 %v589
    %v624 = vpop.f32.mrf.mxu0
    %v625 = vadd.f32 0.0, %v624
    %v626 = vpop.f32.mrf.mxu0
    %v627 = vpop.f32.mrf.mxu0
    %v628 = vpop.f32.mrf.mxu0
    %629 = vdwg.mxu0
    %s630 = scalar_lea.vmem [#allocation5], 256
    %v631 = vld [vmem:[%s630] sm:$0xf]
    %v632 = vld [vmem:[%s630 + $0x4] sm:$0xf]
    %v633 = vld [vmem:[%s630 + $0x8] sm:$0xf]
    %v634 = vld [vmem:[%s630 + $0xc] sm:$0xf]
    %v635 = vld [vmem:[%s630 + $0x10] sm:$0xf]
    %v636 = vld [vmem:[%s630 + $0x14] sm:$0xf]
    %v637 = vld [vmem:[%s630 + $0x18] sm:$0xf]
    %v638 = vld [vmem:[%s630 + $0x1c] sm:$0xf]
    %v639 = vld [vmem:[%s630 + $0x20] sm:$0xf]
    %v640 = vld [vmem:[%s630 + $0x24] sm:$0xf]
    %v641 = vld [vmem:[%s630 + $0x28] sm:$0xf]
    %v642 = vld [vmem:[%s630 + $0x2c] sm:$0xf]
    %v643 = vld [vmem:[%s630 + $0x30] sm:$0xf]
    %v644 = vld [vmem:[%s630 + $0x34] sm:$0xf]
    %v645 = vld [vmem:[%s630 + $0x38] sm:$0xf]
    %v646 = vld [vmem:[%s630 + $0x3c] sm:$0xf]
    %v647 = vpack.c.bf16 %v584, %v584
    %v664 = vunpack.c.l.b16 %v631
    %v665 = vunpack.c.l.b16 %v632
    %v666 = vunpack.c.l.b16 %v633
    %v667 = vunpack.c.l.b16 %v634
    %v668 = vunpack.c.l.b16 %v635
    %v669 = vunpack.c.l.b16 %v636
    %v670 = vunpack.c.l.b16 %v637
    %v671 = vunpack.c.l.b16 %v638
    %v672 = vunpack.c.l.b16 %v639
    %v673 = vunpack.c.l.b16 %v640
    %v674 = vunpack.c.l.b16 %v641
    %v675 = vunpack.c.l.b16 %v642
    %v676 = vunpack.c.l.b16 %v643
    %v677 = vunpack.c.l.b16 %v644
    %v678 = vunpack.c.l.b16 %v645
    %v679 = vunpack.c.l.b16 %v646
    %v680 = vpack.c.b16 %v665, %v664
    %v681 = vpack.c.b16 %v667, %v666
    %v682 = vpack.c.b16 %v669, %v668
    %v683 = vpack.c.b16 %v671, %v670
    %v684 = vpack.c.b16 %v673, %v672
    %v685 = vpack.c.b16 %v675, %v674
    %v686 = vpack.c.b16 %v677, %v676
    %v687 = vpack.c.b16 %v679, %v678
    %696 = vmatprep.subr.bf16.mxu0 0
    %697 = vmatpush1.bf16.msra.mxu0 %v687
    %698 = vmatprep.subr.bf16.mxu0 0
    %699 = vmatpush1.bf16.msra.mxu0 %v686
    %700 = vmatprep.subr.bf16.mxu0 0
    %701 = vmatpush1.bf16.msra.mxu0 %v685
    %702 = vmatprep.subr.bf16.mxu0 0
    %703 = vmatpush1.bf16.msra.mxu0 %v684
    %704 = vmatprep.subr.bf16.mxu0 0
    %705 = vmatpush1.bf16.msra.mxu0 %v683
    %706 = vmatprep.subr.bf16.mxu0 0
    %707 = vmatpush1.bf16.msra.mxu0 %v682
    %708 = vmatprep.subr.bf16.mxu0 0
    %709 = vmatpush1.bf16.msra.mxu0 %v681
    %710 = vmatprep.subr.bf16.mxu0 0
    %711 = vmatpush1.bf16.msra.mxu0 %v680
    %712 = vmatprep.subr.bf16.mxu0 0
    %713 = vmatpush2.bf16.msra.mxu0 0
    %714 = vmatprep.subr.bf16.mxu0 0
    %715 = vmatpush2.bf16.msra.mxu0 0
    %716 = vmatprep.subr.bf16.mxu0 0
    %717 = vmatpush2.bf16.msra.mxu0 0
    %718 = vmatprep.subr.bf16.mxu0 0
    %719 = vmatpush2.bf16.msra.mxu0 0
    %720 = vmatprep.subr.bf16.mxu0 0
    %721 = vmatpush2.bf16.msra.mxu0 0
    %722 = vmatprep.subr.bf16.mxu0 0
    %723 = vmatpush2.bf16.msra.mxu0 0
    %724 = vmatprep.subr.bf16.mxu0 0
    %725 = vmatpush2.bf16.msra.mxu0 0
    %726 = vmatprep.subr.bf16.mxu0 0
    %727 = vmatpush2.bf16.msra.mxu0 0
    %728 = vmatprep.mubr.bf16.mxu0 0
    %729 = vmatmul.mubr.bf16.gmra.mxu0 %v647
    %v730 = vpop.f32.mrf.mxu0
    %v731 = vadd.f32 0.0, %v730
    %v732 = vpop.f32.mrf.mxu0
    %v733 = vpop.f32.mrf.mxu0
    %v734 = vpop.f32.mrf.mxu0
    %735 = vdwg.mxu0
    %v736 = vpack.c.bf16 %v625, %v625
    %737 = vmatprep.subr.bf16.mxu0 0
    %738 = vmatpush1.bf16.msra.mxu0 %v687
    %739 = vmatprep.subr.bf16.mxu0 0
    %740 = vmatpush1.bf16.msra.mxu0 %v686
    %741 = vmatprep.subr.bf16.mxu0 0
    %742 = vmatpush1.bf16.msra.mxu0 %v685
    %743 = vmatprep.subr.bf16.mxu0 0
    %744 = vmatpush1.bf16.msra.mxu0 %v684
    %745 = vmatprep.subr.bf16.mxu0 0
    %746 = vmatpush1.bf16.msra.mxu0 %v683
    %747 = vmatprep.subr.bf16.mxu0 0
    %748 = vmatpush1.bf16.msra.mxu0 %v682
    %749 = vmatprep.subr.bf16.mxu0 0
    %750 = vmatpush1.bf16.msra.mxu0 %v681
    %751 = vmatprep.subr.bf16.mxu0 0
    %752 = vmatpush1.bf16.msra.mxu0 %v680
    %753 = vmatprep.subr.bf16.mxu0 0
    %754 = vmatpush2.bf16.msra.mxu0 0
    %755 = vmatprep.subr.bf16.mxu0 0
    %756 = vmatpush2.bf16.msra.mxu0 0
    %757 = vmatprep.subr.bf16.mxu0 0
    %758 = vmatpush2.bf16.msra.mxu0 0
    %759 = vmatprep.subr.bf16.mxu0 0
    %760 = vmatpush2.bf16.msra.mxu0 0
    %761 = vmatprep.subr.bf16.mxu0 0
    %762 = vmatpush2.bf16.msra.mxu0 0
    %763 = vmatprep.subr.bf16.mxu0 0
    %764 = vmatpush2.bf16.msra.mxu0 0
    %765 = vmatprep.subr.bf16.mxu0 0
    %766 = vmatpush2.bf16.msra.mxu0 0
    %767 = vmatprep.subr.bf16.mxu0 0
    %768 = vmatpush2.bf16.msra.mxu0 0
    %769 = vmatprep.mubr.bf16.mxu0 0
    %770 = vmatmul.mubr.bf16.gmra.mxu0 %v736
    %v771 = vpop.f32.mrf.mxu0
    %v772 = vadd.f32 0.0, %v771
    %v773 = vpop.f32.mrf.mxu0
    %v774 = vpop.f32.mrf.mxu0
    %v775 = vpop.f32.mrf.mxu0
    %776 = vdwg.mxu0
    %s777 = scalar_lea.vmem [#allocation5], 320
    %v778 = vld [vmem:[%s777] sm:$0xf]
    %v779 = vld [vmem:[%s777 + $0x4] sm:$0xf]
    %v780 = vld [vmem:[%s777 + $0x8] sm:$0xf]
    %v781 = vld [vmem:[%s777 + $0xc] sm:$0xf]
    %v782 = vld [vmem:[%s777 + $0x10] sm:$0xf]
    %v783 = vld [vmem:[%s777 + $0x14] sm:$0xf]
    %v784 = vld [vmem:[%s777 + $0x18] sm:$0xf]
    %v785 = vld [vmem:[%s777 + $0x1c] sm:$0xf]
    %v786 = vld [vmem:[%s777 + $0x20] sm:$0xf]
    %v787 = vld [vmem:[%s777 + $0x24] sm:$0xf]
    %v788 = vld [vmem:[%s777 + $0x28] sm:$0xf]
    %v789 = vld [vmem:[%s777 + $0x2c] sm:$0xf]
    %v790 = vld [vmem:[%s777 + $0x30] sm:$0xf]
    %v791 = vld [vmem:[%s777 + $0x34] sm:$0xf]
    %v792 = vld [vmem:[%s777 + $0x38] sm:$0xf]
    %v793 = vld [vmem:[%s777 + $0x3c] sm:$0xf]
    %v794 = vpack.c.bf16 %v731, %v731
    %v811 = vunpack.c.l.b16 %v778
    %v812 = vunpack.c.l.b16 %v779
    %v813 = vunpack.c.l.b16 %v780
    %v814 = vunpack.c.l.b16 %v781
    %v815 = vunpack.c.l.b16 %v782
    %v816 = vunpack.c.l.b16 %v783
    %v817 = vunpack.c.l.b16 %v784
    %v818 = vunpack.c.l.b16 %v785
    %v819 = vunpack.c.l.b16 %v786
    %v820 = vunpack.c.l.b16 %v787
    %v821 = vunpack.c.l.b16 %v788
    %v822 = vunpack.c.l.b16 %v789
    %v823 = vunpack.c.l.b16 %v790
    %v824 = vunpack.c.l.b16 %v791
    %v825 = vunpack.c.l.b16 %v792
    %v826 = vunpack.c.l.b16 %v793
    %v827 = vpack.c.b16 %v812, %v811
    %v828 = vpack.c.b16 %v814, %v813
    %v829 = vpack.c.b16 %v816, %v815
    %v830 = vpack.c.b16 %v818, %v817
    %v831 = vpack.c.b16 %v820, %v819
    %v832 = vpack.c.b16 %v822, %v821
    %v833 = vpack.c.b16 %v824, %v823
    %v834 = vpack.c.b16 %v826, %v825
    %843 = vmatprep.subr.bf16.mxu0 0
    %844 = vmatpush1.bf16.msra.mxu0 %v834
    %845 = vmatprep.subr.bf16.mxu0 0
    %846 = vmatpush1.bf16.msra.mxu0 %v833
    %847 = vmatprep.subr.bf16.mxu0 0
    %848 = vmatpush1.bf16.msra.mxu0 %v832
    %849 = vmatprep.subr.bf16.mxu0 0
    %850 = vmatpush1.bf16.msra.mxu0 %v831
    %851 = vmatprep.subr.bf16.mxu0 0
    %852 = vmatpush1.bf16.msra.mxu0 %v830
    %853 = vmatprep.subr.bf16.mxu0 0
    %854 = vmatpush1.bf16.msra.mxu0 %v829
    %855 = vmatprep.subr.bf16.mxu0 0
    %856 = vmatpush1.bf16.msra.mxu0 %v828
    %857 = vmatprep.subr.bf16.mxu0 0
    %858 = vmatpush1.bf16.msra.mxu0 %v827
    %859 = vmatprep.subr.bf16.mxu0 0
    %860 = vmatpush2.bf16.msra.mxu0 0
    %861 = vmatprep.subr.bf16.mxu0 0
    %862 = vmatpush2.bf16.msra.mxu0 0
    %863 = vmatprep.subr.bf16.mxu0 0
    %864 = vmatpush2.bf16.msra.mxu0 0
    %865 = vmatprep.subr.bf16.mxu0 0
    %866 = vmatpush2.bf16.msra.mxu0 0
    %867 = vmatprep.subr.bf16.mxu0 0
    %868 = vmatpush2.bf16.msra.mxu0 0
    %869 = vmatprep.subr.bf16.mxu0 0
    %870 = vmatpush2.bf16.msra.mxu0 0
    %871 = vmatprep.subr.bf16.mxu0 0
    %872 = vmatpush2.bf16.msra.mxu0 0
    %873 = vmatprep.subr.bf16.mxu0 0
    %874 = vmatpush2.bf16.msra.mxu0 0
    %875 = vmatprep.mubr.bf16.mxu0 0
    %876 = vmatmul.mubr.bf16.gmra.mxu0 %v794
    %v877 = vpop.f32.mrf.mxu0
    %v878 = vadd.f32 0.0, %v877
    %v879 = vpop.f32.mrf.mxu0
    %v880 = vpop.f32.mrf.mxu0
    %v881 = vpop.f32.mrf.mxu0
    %882 = vdwg.mxu0
    %v883 = vpack.c.bf16 %v772, %v772
    %884 = vmatprep.subr.bf16.mxu0 0
    %885 = vmatpush1.bf16.msra.mxu0 %v834
    %886 = vmatprep.subr.bf16.mxu0 0
    %887 = vmatpush1.bf16.msra.mxu0 %v833
    %888 = vmatprep.subr.bf16.mxu0 0
    %889 = vmatpush1.bf16.msra.mxu0 %v832
    %890 = vmatprep.subr.bf16.mxu0 0
    %891 = vmatpush1.bf16.msra.mxu0 %v831
    %892 = vmatprep.subr.bf16.mxu0 0
    %893 = vmatpush1.bf16.msra.mxu0 %v830
    %894 = vmatprep.subr.bf16.mxu0 0
    %895 = vmatpush1.bf16.msra.mxu0 %v829
    %896 = vmatprep.subr.bf16.mxu0 0
    %897 = vmatpush1.bf16.msra.mxu0 %v828
    %898 = vmatprep.subr.bf16.mxu0 0
    %899 = vmatpush1.bf16.msra.mxu0 %v827
    %900 = vmatprep.subr.bf16.mxu0 0
    %901 = vmatpush2.bf16.msra.mxu0 0
    %902 = vmatprep.subr.bf16.mxu0 0
    %903 = vmatpush2.bf16.msra.mxu0 0
    %904 = vmatprep.subr.bf16.mxu0 0
    %905 = vmatpush2.bf16.msra.mxu0 0
    %906 = vmatprep.subr.bf16.mxu0 0
    %907 = vmatpush2.bf16.msra.mxu0 0
    %908 = vmatprep.subr.bf16.mxu0 0
    %909 = vmatpush2.bf16.msra.mxu0 0
    %910 = vmatprep.subr.bf16.mxu0 0
    %911 = vmatpush2.bf16.msra.mxu0 0
    %912 = vmatprep.subr.bf16.mxu0 0
    %913 = vmatpush2.bf16.msra.mxu0 0
    %914 = vmatprep.subr.bf16.mxu0 0
    %915 = vmatpush2.bf16.msra.mxu0 0
    %916 = vmatprep.mubr.bf16.mxu0 0
    %917 = vmatmul.mubr.bf16.gmra.mxu0 %v883
    %v918 = vpop.f32.mrf.mxu0
    %v919 = vadd.f32 0.0, %v918
    %v920 = vpop.f32.mrf.mxu0
    %v921 = vpop.f32.mrf.mxu0
    %v922 = vpop.f32.mrf.mxu0
    %923 = vdwg.mxu0
    %s924 = scalar_lea.vmem [#allocation5], 384
    %v925 = vld [vmem:[%s924] sm:$0xf]
    %v926 = vld [vmem:[%s924 + $0x4] sm:$0xf]
    %v927 = vld [vmem:[%s924 + $0x8] sm:$0xf]
    %v928 = vld [vmem:[%s924 + $0xc] sm:$0xf]
    %v929 = vld [vmem:[%s924 + $0x10] sm:$0xf]
    %v930 = vld [vmem:[%s924 + $0x14] sm:$0xf]
    %v931 = vld [vmem:[%s924 + $0x18] sm:$0xf]
    %v932 = vld [vmem:[%s924 + $0x1c] sm:$0xf]
    %v933 = vld [vmem:[%s924 + $0x20] sm:$0xf]
    %v934 = vld [vmem:[%s924 + $0x24] sm:$0xf]
    %v935 = vld [vmem:[%s924 + $0x28] sm:$0xf]
    %v936 = vld [vmem:[%s924 + $0x2c] sm:$0xf]
    %v937 = vld [vmem:[%s924 + $0x30] sm:$0xf]
    %v938 = vld [vmem:[%s924 + $0x34] sm:$0xf]
    %v939 = vld [vmem:[%s924 + $0x38] sm:$0xf]
    %v940 = vld [vmem:[%s924 + $0x3c] sm:$0xf]
    %v941 = vpack.c.bf16 %v878, %v878
    %v958 = vunpack.c.l.b16 %v925
    %v959 = vunpack.c.l.b16 %v926
    %v960 = vunpack.c.l.b16 %v927
    %v961 = vunpack.c.l.b16 %v928
    %v962 = vunpack.c.l.b16 %v929
    %v963 = vunpack.c.l.b16 %v930
    %v964 = vunpack.c.l.b16 %v931
    %v965 = vunpack.c.l.b16 %v932
    %v966 = vunpack.c.l.b16 %v933
    %v967 = vunpack.c.l.b16 %v934
    %v968 = vunpack.c.l.b16 %v935
    %v969 = vunpack.c.l.b16 %v936
    %v970 = vunpack.c.l.b16 %v937
    %v971 = vunpack.c.l.b16 %v938
    %v972 = vunpack.c.l.b16 %v939
    %v973 = vunpack.c.l.b16 %v940
    %v974 = vpack.c.b16 %v959, %v958
    %v975 = vpack.c.b16 %v961, %v960
    %v976 = vpack.c.b16 %v963, %v962
    %v977 = vpack.c.b16 %v965, %v964
    %v978 = vpack.c.b16 %v967, %v966
    %v979 = vpack.c.b16 %v969, %v968
    %v980 = vpack.c.b16 %v971, %v970
    %v981 = vpack.c.b16 %v973, %v972
    %990 = vmatprep.subr.bf16.mxu0 0
    %991 = vmatpush1.bf16.msra.mxu0 %v981
    %992 = vmatprep.subr.bf16.mxu0 0
    %993 = vmatpush1.bf16.msra.mxu0 %v980
    %994 = vmatprep.subr.bf16.mxu0 0
    %995 = vmatpush1.bf16.msra.mxu0 %v979
    %996 = vmatprep.subr.bf16.mxu0 0
    %997 = vmatpush1.bf16.msra.mxu0 %v978
    %998 = vmatprep.subr.bf16.mxu0 0
    %999 = vmatpush1.bf16.msra.mxu0 %v977
    %1000 = vmatprep.subr.bf16.mxu0 0
    %1001 = vmatpush1.bf16.msra.mxu0 %v976
    %1002 = vmatprep.subr.bf16.mxu0 0
    %1003 = vmatpush1.bf16.msra.mxu0 %v975
    %1004 = vmatprep.subr.bf16.mxu0 0
    %1005 = vmatpush1.bf16.msra.mxu0 %v974
    %1006 = vmatprep.subr.bf16.mxu0 0
    %1007 = vmatpush2.bf16.msra.mxu0 0
    %1008 = vmatprep.subr.bf16.mxu0 0
    %1009 = vmatpush2.bf16.msra.mxu0 0
    %1010 = vmatprep.subr.bf16.mxu0 0
    %1011 = vmatpush2.bf16.msra.mxu0 0
    %1012 = vmatprep.subr.bf16.mxu0 0
    %1013 = vmatpush2.bf16.msra.mxu0 0
    %1014 = vmatprep.subr.bf16.mxu0 0
    %1015 = vmatpush2.bf16.msra.mxu0 0
    %1016 = vmatprep.subr.bf16.mxu0 0
    %1017 = vmatpush2.bf16.msra.mxu0 0
    %1018 = vmatprep.subr.bf16.mxu0 0
    %1019 = vmatpush2.bf16.msra.mxu0 0
    %1020 = vmatprep.subr.bf16.mxu0 0
    %1021 = vmatpush2.bf16.msra.mxu0 0
    %1022 = vmatprep.mubr.bf16.mxu0 0
    %1023 = vmatmul.mubr.bf16.gmra.mxu0 %v941
    %v1024 = vpop.f32.mrf.mxu0
    %v1025 = vadd.f32 0.0, %v1024
    %v1026 = vpop.f32.mrf.mxu0
    %v1027 = vpop.f32.mrf.mxu0
    %v1028 = vpop.f32.mrf.mxu0
    %1029 = vdwg.mxu0
    %v1030 = vpack.c.bf16 %v919, %v919
    %1031 = vmatprep.subr.bf16.mxu0 0
    %1032 = vmatpush1.bf16.msra.mxu0 %v981
    %1033 = vmatprep.subr.bf16.mxu0 0
    %1034 = vmatpush1.bf16.msra.mxu0 %v980
    %1035 = vmatprep.subr.bf16.mxu0 0
    %1036 = vmatpush1.bf16.msra.mxu0 %v979
    %1037 = vmatprep.subr.bf16.mxu0 0
    %1038 = vmatpush1.bf16.msra.mxu0 %v978
    %1039 = vmatprep.subr.bf16.mxu0 0
    %1040 = vmatpush1.bf16.msra.mxu0 %v977
    %1041 = vmatprep.subr.bf16.mxu0 0
    %1042 = vmatpush1.bf16.msra.mxu0 %v976
    %1043 = vmatprep.subr.bf16.mxu0 0
    %1044 = vmatpush1.bf16.msra.mxu0 %v975
    %1045 = vmatprep.subr.bf16.mxu0 0
    %1046 = vmatpush1.bf16.msra.mxu0 %v974
    %1047 = vmatprep.subr.bf16.mxu0 0
    %1048 = vmatpush2.bf16.msra.mxu0 0
    %1049 = vmatprep.subr.bf16.mxu0 0
    %1050 = vmatpush2.bf16.msra.mxu0 0
    %1051 = vmatprep.subr.bf16.mxu0 0
    %1052 = vmatpush2.bf16.msra.mxu0 0
    %1053 = vmatprep.subr.bf16.mxu0 0
    %1054 = vmatpush2.bf16.msra.mxu0 0
    %1055 = vmatprep.subr.bf16.mxu0 0
    %1056 = vmatpush2.bf16.msra.mxu0 0
    %1057 = vmatprep.subr.bf16.mxu0 0
    %1058 = vmatpush2.bf16.msra.mxu0 0
    %1059 = vmatprep.subr.bf16.mxu0 0
    %1060 = vmatpush2.bf16.msra.mxu0 0
    %1061 = vmatprep.subr.bf16.mxu0 0
    %1062 = vmatpush2.bf16.msra.mxu0 0
    %1063 = vmatprep.mubr.bf16.mxu0 0
    %1064 = vmatmul.mubr.bf16.gmra.mxu0 %v1030
    %v1065 = vpop.f32.mrf.mxu0
    %v1066 = vadd.f32 0.0, %v1065
    %v1067 = vpop.f32.mrf.mxu0
    %v1068 = vpop.f32.mrf.mxu0
    %v1069 = vpop.f32.mrf.mxu0
    %1070 = vdwg.mxu0
    %s1071 = scalar_lea.vmem [#allocation5], 448
    %v1072 = vld [vmem:[%s1071] sm:$0xf]
    %v1073 = vld [vmem:[%s1071 + $0x4] sm:$0xf]
    %v1074 = vld [vmem:[%s1071 + $0x8] sm:$0xf]
    %v1075 = vld [vmem:[%s1071 + $0xc] sm:$0xf]
    %v1076 = vld [vmem:[%s1071 + $0x10] sm:$0xf]
    %v1077 = vld [vmem:[%s1071 + $0x14] sm:$0xf]
    %v1078 = vld [vmem:[%s1071 + $0x18] sm:$0xf]
    %v1079 = vld [vmem:[%s1071 + $0x1c] sm:$0xf]
    %v1080 = vld [vmem:[%s1071 + $0x20] sm:$0xf]
    %v1081 = vld [vmem:[%s1071 + $0x24] sm:$0xf]
    %v1082 = vld [vmem:[%s1071 + $0x28] sm:$0xf]
    %v1083 = vld [vmem:[%s1071 + $0x2c] sm:$0xf]
    %v1084 = vld [vmem:[%s1071 + $0x30] sm:$0xf]
    %v1085 = vld [vmem:[%s1071 + $0x34] sm:$0xf]
    %v1086 = vld [vmem:[%s1071 + $0x38] sm:$0xf]
    %v1087 = vld [vmem:[%s1071 + $0x3c] sm:$0xf]
    %v1088 = vpack.c.bf16 %v1025, %v1025
    %v1105 = vunpack.c.l.b16 %v1072
    %v1106 = vunpack.c.l.b16 %v1073
    %v1107 = vunpack.c.l.b16 %v1074
    %v1108 = vunpack.c.l.b16 %v1075
    %v1109 = vunpack.c.l.b16 %v1076
    %v1110 = vunpack.c.l.b16 %v1077
    %v1111 = vunpack.c.l.b16 %v1078
    %v1112 = vunpack.c.l.b16 %v1079
    %v1113 = vunpack.c.l.b16 %v1080
    %v1114 = vunpack.c.l.b16 %v1081
    %v1115 = vunpack.c.l.b16 %v1082
    %v1116 = vunpack.c.l.b16 %v1083
    %v1117 = vunpack.c.l.b16 %v1084
    %v1118 = vunpack.c.l.b16 %v1085
    %v1119 = vunpack.c.l.b16 %v1086
    %v1120 = vunpack.c.l.b16 %v1087
    %v1121 = vpack.c.b16 %v1106, %v1105
    %v1122 = vpack.c.b16 %v1108, %v1107
    %v1123 = vpack.c.b16 %v1110, %v1109
    %v1124 = vpack.c.b16 %v1112, %v1111
    %v1125 = vpack.c.b16 %v1114, %v1113
    %v1126 = vpack.c.b16 %v1116, %v1115
    %v1127 = vpack.c.b16 %v1118, %v1117
    %v1128 = vpack.c.b16 %v1120, %v1119
    %1137 = vmatprep.subr.bf16.mxu0 0
    %1138 = vmatpush1.bf16.msra.mxu0 %v1128
    %1139 = vmatprep.subr.bf16.mxu0 0
    %1140 = vmatpush1.bf16.msra.mxu0 %v1127
    %1141 = vmatprep.subr.bf16.mxu0 0
    %1142 = vmatpush1.bf16.msra.mxu0 %v1126
    %1143 = vmatprep.subr.bf16.mxu0 0
    %1144 = vmatpush1.bf16.msra.mxu0 %v1125
    %1145 = vmatprep.subr.bf16.mxu0 0
    %1146 = vmatpush1.bf16.msra.mxu0 %v1124
    %1147 = vmatprep.subr.bf16.mxu0 0
    %1148 = vmatpush1.bf16.msra.mxu0 %v1123
    %1149 = vmatprep.subr.bf16.mxu0 0
    %1150 = vmatpush1.bf16.msra.mxu0 %v1122
    %1151 = vmatprep.subr.bf16.mxu0 0
    %1152 = vmatpush1.bf16.msra.mxu0 %v1121
    %1153 = vmatprep.subr.bf16.mxu0 0
    %1154 = vmatpush2.bf16.msra.mxu0 0
    %1155 = vmatprep.subr.bf16.mxu0 0
    %1156 = vmatpush2.bf16.msra.mxu0 0
    %1157 = vmatprep.subr.bf16.mxu0 0
    %1158 = vmatpush2.bf16.msra.mxu0 0
    %1159 = vmatprep.subr.bf16.mxu0 0
    %1160 = vmatpush2.bf16.msra.mxu0 0
    %1161 = vmatprep.subr.bf16.mxu0 0
    %1162 = vmatpush2.bf16.msra.mxu0 0
    %1163 = vmatprep.subr.bf16.mxu0 0
    %1164 = vmatpush2.bf16.msra.mxu0 0
    %1165 = vmatprep.subr.bf16.mxu0 0
    %1166 = vmatpush2.bf16.msra.mxu0 0
    %1167 = vmatprep.subr.bf16.mxu0 0
    %1168 = vmatpush2.bf16.msra.mxu0 0
    %1169 = vmatprep.mubr.bf16.mxu0 0
    %1170 = vmatmul.mubr.bf16.gmra.mxu0 %v1088
    %v1171 = vpop.f32.mrf.mxu0
    %v1172 = vadd.f32 0.0, %v1171
    %v1173 = vpop.f32.mrf.mxu0
    %v1174 = vpop.f32.mrf.mxu0
    %v1175 = vpop.f32.mrf.mxu0
    %1176 = vdwg.mxu0
    %v1177 = vpack.c.bf16 %v1066, %v1066
    %1178 = vmatprep.subr.bf16.mxu0 0
    %1179 = vmatpush1.bf16.msra.mxu0 %v1128
    %1180 = vmatprep.subr.bf16.mxu0 0
    %1181 = vmatpush1.bf16.msra.mxu0 %v1127
    %1182 = vmatprep.subr.bf16.mxu0 0
    %1183 = vmatpush1.bf16.msra.mxu0 %v1126
    %1184 = vmatprep.subr.bf16.mxu0 0
    %1185 = vmatpush1.bf16.msra.mxu0 %v1125
    %1186 = vmatprep.subr.bf16.mxu0 0
    %1187 = vmatpush1.bf16.msra.mxu0 %v1124
    %1188 = vmatprep.subr.bf16.mxu0 0
    %1189 = vmatpush1.bf16.msra.mxu0 %v1123
    %1190 = vmatprep.subr.bf16.mxu0 0
    %1191 = vmatpush1.bf16.msra.mxu0 %v1122
    %1192 = vmatprep.subr.bf16.mxu0 0
    %1193 = vmatpush1.bf16.msra.mxu0 %v1121
    %1194 = vmatprep.subr.bf16.mxu0 0
    %1195 = vmatpush2.bf16.msra.mxu0 0
    %1196 = vmatprep.subr.bf16.mxu0 0
    %1197 = vmatpush2.bf16.msra.mxu0 0
    %1198 = vmatprep.subr.bf16.mxu0 0
    %1199 = vmatpush2.bf16.msra.mxu0 0
    %1200 = vmatprep.subr.bf16.mxu0 0
    %1201 = vmatpush2.bf16.msra.mxu0 0
    %1202 = vmatprep.subr.bf16.mxu0 0
    %1203 = vmatpush2.bf16.msra.mxu0 0
    %1204 = vmatprep.subr.bf16.mxu0 0
    %1205 = vmatpush2.bf16.msra.mxu0 0
    %1206 = vmatprep.subr.bf16.mxu0 0
    %1207 = vmatpush2.bf16.msra.mxu0 0
    %1208 = vmatprep.subr.bf16.mxu0 0
    %1209 = vmatpush2.bf16.msra.mxu0 0
    %1210 = vmatprep.mubr.bf16.mxu0 0
    %1211 = vmatmul.mubr.bf16.gmra.mxu0 %v1177
    %v1212 = vpop.f32.mrf.mxu0
    %v1213 = vadd.f32 0.0, %v1212
    %v1214 = vpop.f32.mrf.mxu0
    %v1215 = vpop.f32.mrf.mxu0
    %v1216 = vpop.f32.mrf.mxu0
    %1217 = vdwg.mxu0
    %s1218 = scalar_lea.vmem [#allocation5], 512
    %v1219 = vld [vmem:[%s1218] sm:$0xf]
    %v1220 = vld [vmem:[%s1218 + $0x4] sm:$0xf]
    %v1221 = vld [vmem:[%s1218 + $0x8] sm:$0xf]
    %v1222 = vld [vmem:[%s1218 + $0xc] sm:$0xf]
    %v1223 = vld [vmem:[%s1218 + $0x10] sm:$0xf]
    %v1224 = vld [vmem:[%s1218 + $0x14] sm:$0xf]
    %v1225 = vld [vmem:[%s1218 + $0x18] sm:$0xf]
    %v1226 = vld [vmem:[%s1218 + $0x1c] sm:$0xf]
    %v1227 = vld [vmem:[%s1218 + $0x20] sm:$0xf]
    %v1228 = vld [vmem:[%s1218 + $0x24] sm:$0xf]
    %v1229 = vld [vmem:[%s1218 + $0x28] sm:$0xf]
    %v1230 = vld [vmem:[%s1218 + $0x2c] sm:$0xf]
    %v1231 = vld [vmem:[%s1218 + $0x30] sm:$0xf]
    %v1232 = vld [vmem:[%s1218 + $0x34] sm:$0xf]
    %v1233 = vld [vmem:[%s1218 + $0x38] sm:$0xf]
    %v1234 = vld [vmem:[%s1218 + $0x3c] sm:$0xf]
    %v1235 = vpack.c.bf16 %v1172, %v1172
    %v1252 = vunpack.c.l.b16 %v1219
    %v1253 = vunpack.c.l.b16 %v1220
    %v1254 = vunpack.c.l.b16 %v1221
    %v1255 = vunpack.c.l.b16 %v1222
    %v1256 = vunpack.c.l.b16 %v1223
    %v1257 = vunpack.c.l.b16 %v1224
    %v1258 = vunpack.c.l.b16 %v1225
    %v1259 = vunpack.c.l.b16 %v1226
    %v1260 = vunpack.c.l.b16 %v1227
    %v1261 = vunpack.c.l.b16 %v1228
    %v1262 = vunpack.c.l.b16 %v1229
    %v1263 = vunpack.c.l.b16 %v1230
    %v1264 = vunpack.c.l.b16 %v1231
    %v1265 = vunpack.c.l.b16 %v1232
    %v1266 = vunpack.c.l.b16 %v1233
    %v1267 = vunpack.c.l.b16 %v1234
    %v1268 = vpack.c.b16 %v1253, %v1252
    %v1269 = vpack.c.b16 %v1255, %v1254
    %v1270 = vpack.c.b16 %v1257, %v1256
    %v1271 = vpack.c.b16 %v1259, %v1258
    %v1272 = vpack.c.b16 %v1261, %v1260
    %v1273 = vpack.c.b16 %v1263, %v1262
    %v1274 = vpack.c.b16 %v1265, %v1264
    %v1275 = vpack.c.b16 %v1267, %v1266
    %1284 = vmatprep.subr.bf16.mxu0 0
    %1285 = vmatpush1.bf16.msra.mxu0 %v1275
    %1286 = vmatprep.subr.bf16.mxu0 0
    %1287 = vmatpush1.bf16.msra.mxu0 %v1274
    %1288 = vmatprep.subr.bf16.mxu0 0
    %1289 = vmatpush1.bf16.msra.mxu0 %v1273
    %1290 = vmatprep.subr.bf16.mxu0 0
    %1291 = vmatpush1.bf16.msra.mxu0 %v1272
    %1292 = vmatprep.subr.bf16.mxu0 0
    %1293 = vmatpush1.bf16.msra.mxu0 %v1271
    %1294 = vmatprep.subr.bf16.mxu0 0
    %1295 = vmatpush1.bf16.msra.mxu0 %v1270
    %1296 = vmatprep.subr.bf16.mxu0 0
    %1297 = vmatpush1.bf16.msra.mxu0 %v1269
    %1298 = vmatprep.subr.bf16.mxu0 0
    %1299 = vmatpush1.bf16.msra.mxu0 %v1268
    %1300 = vmatprep.subr.bf16.mxu0 0
    %1301 = vmatpush2.bf16.msra.mxu0 0
    %1302 = vmatprep.subr.bf16.mxu0 0
    %1303 = vmatpush2.bf16.msra.mxu0 0
    %1304 = vmatprep.subr.bf16.mxu0 0
    %1305 = vmatpush2.bf16.msra.mxu0 0
    %1306 = vmatprep.subr.bf16.mxu0 0
    %1307 = vmatpush2.bf16.msra.mxu0 0
    %1308 = vmatprep.subr.bf16.mxu0 0
    %1309 = vmatpush2.bf16.msra.mxu0 0
    %1310 = vmatprep.subr.bf16.mxu0 0
    %1311 = vmatpush2.bf16.msra.mxu0 0
    %1312 = vmatprep.subr.bf16.mxu0 0
    %1313 = vmatpush2.bf16.msra.mxu0 0
    %1314 = vmatprep.subr.bf16.mxu0 0
    %1315 = vmatpush2.bf16.msra.mxu0 0
    %1316 = vmatprep.mubr.bf16.mxu0 0
    %1317 = vmatmul.mubr.bf16.gmra.mxu0 %v1235
    %v1318 = vpop.f32.mrf.mxu0
    %v1319 = vadd.f32 0.0, %v1318
    %v1320 = vpop.f32.mrf.mxu0
    %v1321 = vpop.f32.mrf.mxu0
    %v1322 = vpop.f32.mrf.mxu0
    %1323 = vdwg.mxu0
    %v1324 = vpack.c.bf16 %v1213, %v1213
    %1325 = vmatprep.subr.bf16.mxu0 0
    %1326 = vmatpush1.bf16.msra.mxu0 %v1275
    %1327 = vmatprep.subr.bf16.mxu0 0
    %1328 = vmatpush1.bf16.msra.mxu0 %v1274
    %1329 = vmatprep.subr.bf16.mxu0 0
    %1330 = vmatpush1.bf16.msra.mxu0 %v1273
    %1331 = vmatprep.subr.bf16.mxu0 0
    %1332 = vmatpush1.bf16.msra.mxu0 %v1272
    %1333 = vmatprep.subr.bf16.mxu0 0
    %1334 = vmatpush1.bf16.msra.mxu0 %v1271
    %1335 = vmatprep.subr.bf16.mxu0 0
    %1336 = vmatpush1.bf16.msra.mxu0 %v1270
    %1337 = vmatprep.subr.bf16.mxu0 0
    %1338 = vmatpush1.bf16.msra.mxu0 %v1269
    %1339 = vmatprep.subr.bf16.mxu0 0
    %1340 = vmatpush1.bf16.msra.mxu0 %v1268
    %1341 = vmatprep.subr.bf16.mxu0 0
    %1342 = vmatpush2.bf16.msra.mxu0 0
    %1343 = vmatprep.subr.bf16.mxu0 0
    %1344 = vmatpush2.bf16.msra.mxu0 0
    %1345 = vmatprep.subr.bf16.mxu0 0
    %1346 = vmatpush2.bf16.msra.mxu0 0
    %1347 = vmatprep.subr.bf16.mxu0 0
    %1348 = vmatpush2.bf16.msra.mxu0 0
    %1349 = vmatprep.subr.bf16.mxu0 0
    %1350 = vmatpush2.bf16.msra.mxu0 0
    %1351 = vmatprep.subr.bf16.mxu0 0
    %1352 = vmatpush2.bf16.msra.mxu0 0
    %1353 = vmatprep.subr.bf16.mxu0 0
    %1354 = vmatpush2.bf16.msra.mxu0 0
    %1355 = vmatprep.subr.bf16.mxu0 0
    %1356 = vmatpush2.bf16.msra.mxu0 0
    %1357 = vmatprep.mubr.bf16.mxu0 0
    %1358 = vmatmul.mubr.bf16.gmra.mxu0 %v1324
    %v1359 = vpop.f32.mrf.mxu0
    %v1360 = vadd.f32 0.0, %v1359
    %v1361 = vpop.f32.mrf.mxu0
    %v1362 = vpop.f32.mrf.mxu0
    %v1363 = vpop.f32.mrf.mxu0
    %1364 = vdwg.mxu0
    %s1365 = scalar_lea.vmem [#allocation5], 576
    %v1366 = vld [vmem:[%s1365] sm:$0xf]
    %v1367 = vld [vmem:[%s1365 + $0x4] sm:$0xf]
    %v1368 = vld [vmem:[%s1365 + $0x8] sm:$0xf]
    %v1369 = vld [vmem:[%s1365 + $0xc] sm:$0xf]
    %v1370 = vld [vmem:[%s1365 + $0x10] sm:$0xf]
    %v1371 = vld [vmem:[%s1365 + $0x14] sm:$0xf]
    %v1372 = vld [vmem:[%s1365 + $0x18] sm:$0xf]
    %v1373 = vld [vmem:[%s1365 + $0x1c] sm:$0xf]
    %v1374 = vld [vmem:[%s1365 + $0x20] sm:$0xf]
    %v1375 = vld [vmem:[%s1365 + $0x24] sm:$0xf]
    %v1376 = vld [vmem:[%s1365 + $0x28] sm:$0xf]
    %v1377 = vld [vmem:[%s1365 + $0x2c] sm:$0xf]
    %v1378 = vld [vmem:[%s1365 + $0x30] sm:$0xf]
    %v1379 = vld [vmem:[%s1365 + $0x34] sm:$0xf]
    %v1380 = vld [vmem:[%s1365 + $0x38] sm:$0xf]
    %v1381 = vld [vmem:[%s1365 + $0x3c] sm:$0xf]
    %v1382 = vpack.c.bf16 %v1319, %v1319
    %v1399 = vunpack.c.l.b16 %v1366
    %v1400 = vunpack.c.l.b16 %v1367
    %v1401 = vunpack.c.l.b16 %v1368
    %v1402 = vunpack.c.l.b16 %v1369
    %v1403 = vunpack.c.l.b16 %v1370
    %v1404 = vunpack.c.l.b16 %v1371
    %v1405 = vunpack.c.l.b16 %v1372
    %v1406 = vunpack.c.l.b16 %v1373
    %v1407 = vunpack.c.l.b16 %v1374
    %v1408 = vunpack.c.l.b16 %v1375
    %v1409 = vunpack.c.l.b16 %v1376
    %v1410 = vunpack.c.l.b16 %v1377
    %v1411 = vunpack.c.l.b16 %v1378
    %v1412 = vunpack.c.l.b16 %v1379
    %v1413 = vunpack.c.l.b16 %v1380
    %v1414 = vunpack.c.l.b16 %v1381
    %v1415 = vpack.c.b16 %v1400, %v1399
    %v1416 = vpack.c.b16 %v1402, %v1401
    %v1417 = vpack.c.b16 %v1404, %v1403
    %v1418 = vpack.c.b16 %v1406, %v1405
    %v1419 = vpack.c.b16 %v1408, %v1407
    %v1420 = vpack.c.b16 %v1410, %v1409
    %v1421 = vpack.c.b16 %v1412, %v1411
    %v1422 = vpack.c.b16 %v1414, %v1413
    %1431 = vmatprep.subr.bf16.mxu0 0
    %1432 = vmatpush1.bf16.msra.mxu0 %v1422
    %1433 = vmatprep.subr.bf16.mxu0 0
    %1434 = vmatpush1.bf16.msra.mxu0 %v1421
    %1435 = vmatprep.subr.bf16.mxu0 0
    %1436 = vmatpush1.bf16.msra.mxu0 %v1420
    %1437 = vmatprep.subr.bf16.mxu0 0
    %1438 = vmatpush1.bf16.msra.mxu0 %v1419
    %1439 = vmatprep.subr.bf16.mxu0 0
    %1440 = vmatpush1.bf16.msra.mxu0 %v1418
    %1441 = vmatprep.subr.bf16.mxu0 0
    %1442 = vmatpush1.bf16.msra.mxu0 %v1417
    %1443 = vmatprep.subr.bf16.mxu0 0
    %1444 = vmatpush1.bf16.msra.mxu0 %v1416
    %1445 = vmatprep.subr.bf16.mxu0 0
    %1446 = vmatpush1.bf16.msra.mxu0 %v1415
    %1447 = vmatprep.subr.bf16.mxu0 0
    %1448 = vmatpush2.bf16.msra.mxu0 0
    %1449 = vmatprep.subr.bf16.mxu0 0
    %1450 = vmatpush2.bf16.msra.mxu0 0
    %1451 = vmatprep.subr.bf16.mxu0 0
    %1452 = vmatpush2.bf16.msra.mxu0 0
    %1453 = vmatprep.subr.bf16.mxu0 0
    %1454 = vmatpush2.bf16.msra.mxu0 0
    %1455 = vmatprep.subr.bf16.mxu0 0
    %1456 = vmatpush2.bf16.msra.mxu0 0
    %1457 = vmatprep.subr.bf16.mxu0 0
    %1458 = vmatpush2.bf16.msra.mxu0 0
    %1459 = vmatprep.subr.bf16.mxu0 0
    %1460 = vmatpush2.bf16.msra.mxu0 0
    %1461 = vmatprep.subr.bf16.mxu0 0
    %1462 = vmatpush2.bf16.msra.mxu0 0
    %1463 = vmatprep.mubr.bf16.mxu0 0
    %1464 = vmatmul.mubr.bf16.gmra.mxu0 %v1382
    %v1465 = vpop.f32.mrf.mxu0
    %v1466 = vadd.f32 0.0, %v1465
    %v1467 = vpop.f32.mrf.mxu0
    %v1468 = vpop.f32.mrf.mxu0
    %v1469 = vpop.f32.mrf.mxu0
    %1470 = vdwg.mxu0
    %v1471 = vpack.c.bf16 %v1360, %v1360
    %1472 = vmatprep.subr.bf16.mxu0 0
    %1473 = vmatpush1.bf16.msra.mxu0 %v1422
    %1474 = vmatprep.subr.bf16.mxu0 0
    %1475 = vmatpush1.bf16.msra.mxu0 %v1421
    %1476 = vmatprep.subr.bf16.mxu0 0
    %1477 = vmatpush1.bf16.msra.mxu0 %v1420
    %1478 = vmatprep.subr.bf16.mxu0 0
    %1479 = vmatpush1.bf16.msra.mxu0 %v1419
    %1480 = vmatprep.subr.bf16.mxu0 0
    %1481 = vmatpush1.bf16.msra.mxu0 %v1418
    %1482 = vmatprep.subr.bf16.mxu0 0
    %1483 = vmatpush1.bf16.msra.mxu0 %v1417
    %1484 = vmatprep.subr.bf16.mxu0 0
    %1485 = vmatpush1.bf16.msra.mxu0 %v1416
    %1486 = vmatprep.subr.bf16.mxu0 0
    %1487 = vmatpush1.bf16.msra.mxu0 %v1415
    %1488 = vmatprep.subr.bf16.mxu0 0
    %1489 = vmatpush2.bf16.msra.mxu0 0
    %1490 = vmatprep.subr.bf16.mxu0 0
    %1491 = vmatpush2.bf16.msra.mxu0 0
    %1492 = vmatprep.subr.bf16.mxu0 0
    %1493 = vmatpush2.bf16.msra.mxu0 0
    %1494 = vmatprep.subr.bf16.mxu0 0
    %1495 = vmatpush2.bf16.msra.mxu0 0
    %1496 = vmatprep.subr.bf16.mxu0 0
    %1497 = vmatpush2.bf16.msra.mxu0 0
    %1498 = vmatprep.subr.bf16.mxu0 0
    %1499 = vmatpush2.bf16.msra.mxu0 0
    %1500 = vmatprep.subr.bf16.mxu0 0
    %1501 = vmatpush2.bf16.msra.mxu0 0
    %1502 = vmatprep.subr.bf16.mxu0 0
    %1503 = vmatpush2.bf16.msra.mxu0 0
    %1504 = vmatprep.mubr.bf16.mxu0 0
    %1505 = vmatmul.mubr.bf16.gmra.mxu0 %v1471
    %v1506 = vpop.f32.mrf.mxu0
    %v1507 = vadd.f32 0.0, %v1506
    %v1508 = vpop.f32.mrf.mxu0
    %v1509 = vpop.f32.mrf.mxu0
    %v1510 = vpop.f32.mrf.mxu0
    %1511 = vdwg.mxu0
    %s1512 = scalar_lea.vmem [#allocation5], 640
    %v1513 = vld [vmem:[%s1512] sm:$0xf]
    %v1514 = vld [vmem:[%s1512 + $0x4] sm:$0xf]
    %v1515 = vld [vmem:[%s1512 + $0x8] sm:$0xf]
    %v1516 = vld [vmem:[%s1512 + $0xc] sm:$0xf]
    %v1517 = vld [vmem:[%s1512 + $0x10] sm:$0xf]
    %v1518 = vld [vmem:[%s1512 + $0x14] sm:$0xf]
    %v1519 = vld [vmem:[%s1512 + $0x18] sm:$0xf]
    %v1520 = vld [vmem:[%s1512 + $0x1c] sm:$0xf]
    %v1521 = vld [vmem:[%s1512 + $0x20] sm:$0xf]
    %v1522 = vld [vmem:[%s1512 + $0x24] sm:$0xf]
    %v1523 = vld [vmem:[%s1512 + $0x28] sm:$0xf]
    %v1524 = vld [vmem:[%s1512 + $0x2c] sm:$0xf]
    %v1525 = vld [vmem:[%s1512 + $0x30] sm:$0xf]
    %v1526 = vld [vmem:[%s1512 + $0x34] sm:$0xf]
    %v1527 = vld [vmem:[%s1512 + $0x38] sm:$0xf]
    %v1528 = vld [vmem:[%s1512 + $0x3c] sm:$0xf]
    %v1529 = vpack.c.bf16 %v1466, %v1466
    %v1546 = vunpack.c.l.b16 %v1513
    %v1547 = vunpack.c.l.b16 %v1514
    %v1548 = vunpack.c.l.b16 %v1515
    %v1549 = vunpack.c.l.b16 %v1516
    %v1550 = vunpack.c.l.b16 %v1517
    %v1551 = vunpack.c.l.b16 %v1518
    %v1552 = vunpack.c.l.b16 %v1519
    %v1553 = vunpack.c.l.b16 %v1520
    %v1554 = vunpack.c.l.b16 %v1521
    %v1555 = vunpack.c.l.b16 %v1522
    %v1556 = vunpack.c.l.b16 %v1523
    %v1557 = vunpack.c.l.b16 %v1524
    %v1558 = vunpack.c.l.b16 %v1525
    %v1559 = vunpack.c.l.b16 %v1526
    %v1560 = vunpack.c.l.b16 %v1527
    %v1561 = vunpack.c.l.b16 %v1528
    %v1562 = vpack.c.b16 %v1547, %v1546
    %v1563 = vpack.c.b16 %v1549, %v1548
    %v1564 = vpack.c.b16 %v1551, %v1550
    %v1565 = vpack.c.b16 %v1553, %v1552
    %v1566 = vpack.c.b16 %v1555, %v1554
    %v1567 = vpack.c.b16 %v1557, %v1556
    %v1568 = vpack.c.b16 %v1559, %v1558
    %v1569 = vpack.c.b16 %v1561, %v1560
    %1578 = vmatprep.subr.bf16.mxu0 0
    %1579 = vmatpush1.bf16.msra.mxu0 %v1569
    %1580 = vmatprep.subr.bf16.mxu0 0
    %1581 = vmatpush1.bf16.msra.mxu0 %v1568
    %1582 = vmatprep.subr.bf16.mxu0 0
    %1583 = vmatpush1.bf16.msra.mxu0 %v1567
    %1584 = vmatprep.subr.bf16.mxu0 0
    %1585 = vmatpush1.bf16.msra.mxu0 %v1566
    %1586 = vmatprep.subr.bf16.mxu0 0
    %1587 = vmatpush1.bf16.msra.mxu0 %v1565
    %1588 = vmatprep.subr.bf16.mxu0 0
    %1589 = vmatpush1.bf16.msra.mxu0 %v1564
    %1590 = vmatprep.subr.bf16.mxu0 0
    %1591 = vmatpush1.bf16.msra.mxu0 %v1563
    %1592 = vmatprep.subr.bf16.mxu0 0
    %1593 = vmatpush1.bf16.msra.mxu0 %v1562
    %1594 = vmatprep.subr.bf16.mxu0 0
    %1595 = vmatpush2.bf16.msra.mxu0 0
    %1596 = vmatprep.subr.bf16.mxu0 0
    %1597 = vmatpush2.bf16.msra.mxu0 0
    %1598 = vmatprep.subr.bf16.mxu0 0
    %1599 = vmatpush2.bf16.msra.mxu0 0
    %1600 = vmatprep.subr.bf16.mxu0 0
    %1601 = vmatpush2.bf16.msra.mxu0 0
    %1602 = vmatprep.subr.bf16.mxu0 0
    %1603 = vmatpush2.bf16.msra.mxu0 0
    %1604 = vmatprep.subr.bf16.mxu0 0
    %1605 = vmatpush2.bf16.msra.mxu0 0
    %1606 = vmatprep.subr.bf16.mxu0 0
    %1607 = vmatpush2.bf16.msra.mxu0 0
    %1608 = vmatprep.subr.bf16.mxu0 0
    %1609 = vmatpush2.bf16.msra.mxu0 0
    %1610 = vmatprep.mubr.bf16.mxu0 0
    %1611 = vmatmul.mubr.bf16.gmra.mxu0 %v1529
    %v1612 = vpop.f32.mrf.mxu0
    %v1613 = vadd.f32 0.0, %v1612
    %v1614 = vpop.f32.mrf.mxu0
    %v1615 = vpop.f32.mrf.mxu0
    %v1616 = vpop.f32.mrf.mxu0
    %1617 = vdwg.mxu0
    %v1618 = vpack.c.bf16 %v1507, %v1507
    %1619 = vmatprep.subr.bf16.mxu0 0
    %1620 = vmatpush1.bf16.msra.mxu0 %v1569
    %1621 = vmatprep.subr.bf16.mxu0 0
    %1622 = vmatpush1.bf16.msra.mxu0 %v1568
    %1623 = vmatprep.subr.bf16.mxu0 0
    %1624 = vmatpush1.bf16.msra.mxu0 %v1567
    %1625 = vmatprep.subr.bf16.mxu0 0
    %1626 = vmatpush1.bf16.msra.mxu0 %v1566
    %1627 = vmatprep.subr.bf16.mxu0 0
    %1628 = vmatpush1.bf16.msra.mxu0 %v1565
    %1629 = vmatprep.subr.bf16.mxu0 0
    %1630 = vmatpush1.bf16.msra.mxu0 %v1564
    %1631 = vmatprep.subr.bf16.mxu0 0
    %1632 = vmatpush1.bf16.msra.mxu0 %v1563
    %1633 = vmatprep.subr.bf16.mxu0 0
    %1634 = vmatpush1.bf16.msra.mxu0 %v1562
    %1635 = vmatprep.subr.bf16.mxu0 0
    %1636 = vmatpush2.bf16.msra.mxu0 0
    %1637 = vmatprep.subr.bf16.mxu0 0
    %1638 = vmatpush2.bf16.msra.mxu0 0
    %1639 = vmatprep.subr.bf16.mxu0 0
    %1640 = vmatpush2.bf16.msra.mxu0 0
    %1641 = vmatprep.subr.bf16.mxu0 0
    %1642 = vmatpush2.bf16.msra.mxu0 0
    %1643 = vmatprep.subr.bf16.mxu0 0
    %1644 = vmatpush2.bf16.msra.mxu0 0
    %1645 = vmatprep.subr.bf16.mxu0 0
    %1646 = vmatpush2.bf16.msra.mxu0 0
    %1647 = vmatprep.subr.bf16.mxu0 0
    %1648 = vmatpush2.bf16.msra.mxu0 0
    %1649 = vmatprep.subr.bf16.mxu0 0
    %1650 = vmatpush2.bf16.msra.mxu0 0
    %1651 = vmatprep.mubr.bf16.mxu0 0
    %1652 = vmatmul.mubr.bf16.gmra.mxu0 %v1618
    %v1653 = vpop.f32.mrf.mxu0
    %v1654 = vadd.f32 0.0, %v1653
    %v1655 = vpop.f32.mrf.mxu0
    %v1656 = vpop.f32.mrf.mxu0
    %v1657 = vpop.f32.mrf.mxu0
    %1658 = vdwg.mxu0
    %s1659 = scalar_lea.vmem [#allocation5], 704
    %v1660 = vld [vmem:[%s1659] sm:$0xf]
    %v1661 = vld [vmem:[%s1659 + $0x4] sm:$0xf]
    %v1662 = vld [vmem:[%s1659 + $0x8] sm:$0xf]
    %v1663 = vld [vmem:[%s1659 + $0xc] sm:$0xf]
    %v1664 = vld [vmem:[%s1659 + $0x10] sm:$0xf]
    %v1665 = vld [vmem:[%s1659 + $0x14] sm:$0xf]
    %v1666 = vld [vmem:[%s1659 + $0x18] sm:$0xf]
    %v1667 = vld [vmem:[%s1659 + $0x1c] sm:$0xf]
    %v1668 = vld [vmem:[%s1659 + $0x20] sm:$0xf]
    %v1669 = vld [vmem:[%s1659 + $0x24] sm:$0xf]
    %v1670 = vld [vmem:[%s1659 + $0x28] sm:$0xf]
    %v1671 = vld [vmem:[%s1659 + $0x2c] sm:$0xf]
    %v1672 = vld [vmem:[%s1659 + $0x30] sm:$0xf]
    %v1673 = vld [vmem:[%s1659 + $0x34] sm:$0xf]
    %v1674 = vld [vmem:[%s1659 + $0x38] sm:$0xf]
    %v1675 = vld [vmem:[%s1659 + $0x3c] sm:$0xf]
    %v1676 = vpack.c.bf16 %v1613, %v1613
    %v1693 = vunpack.c.l.b16 %v1660
    %v1694 = vunpack.c.l.b16 %v1661
    %v1695 = vunpack.c.l.b16 %v1662
    %v1696 = vunpack.c.l.b16 %v1663
    %v1697 = vunpack.c.l.b16 %v1664
    %v1698 = vunpack.c.l.b16 %v1665
    %v1699 = vunpack.c.l.b16 %v1666
    %v1700 = vunpack.c.l.b16 %v1667
    %v1701 = vunpack.c.l.b16 %v1668
    %v1702 = vunpack.c.l.b16 %v1669
    %v1703 = vunpack.c.l.b16 %v1670
    %v1704 = vunpack.c.l.b16 %v1671
    %v1705 = vunpack.c.l.b16 %v1672
    %v1706 = vunpack.c.l.b16 %v1673
    %v1707 = vunpack.c.l.b16 %v1674
    %v1708 = vunpack.c.l.b16 %v1675
    %v1709 = vpack.c.b16 %v1694, %v1693
    %v1710 = vpack.c.b16 %v1696, %v1695
    %v1711 = vpack.c.b16 %v1698, %v1697
    %v1712 = vpack.c.b16 %v1700, %v1699
    %v1713 = vpack.c.b16 %v1702, %v1701
    %v1714 = vpack.c.b16 %v1704, %v1703
    %v1715 = vpack.c.b16 %v1706, %v1705
    %v1716 = vpack.c.b16 %v1708, %v1707
    %1725 = vmatprep.subr.bf16.mxu0 0
    %1726 = vmatpush1.bf16.msra.mxu0 %v1716
    %1727 = vmatprep.subr.bf16.mxu0 0
    %1728 = vmatpush1.bf16.msra.mxu0 %v1715
    %1729 = vmatprep.subr.bf16.mxu0 0
    %1730 = vmatpush1.bf16.msra.mxu0 %v1714
    %1731 = vmatprep.subr.bf16.mxu0 0
    %1732 = vmatpush1.bf16.msra.mxu0 %v1713
    %1733 = vmatprep.subr.bf16.mxu0 0
    %1734 = vmatpush1.bf16.msra.mxu0 %v1712
    %1735 = vmatprep.subr.bf16.mxu0 0
    %1736 = vmatpush1.bf16.msra.mxu0 %v1711
    %1737 = vmatprep.subr.bf16.mxu0 0
    %1738 = vmatpush1.bf16.msra.mxu0 %v1710
    %1739 = vmatprep.subr.bf16.mxu0 0
    %1740 = vmatpush1.bf16.msra.mxu0 %v1709
    %1741 = vmatprep.subr.bf16.mxu0 0
    %1742 = vmatpush2.bf16.msra.mxu0 0
    %1743 = vmatprep.subr.bf16.mxu0 0
    %1744 = vmatpush2.bf16.msra.mxu0 0
    %1745 = vmatprep.subr.bf16.mxu0 0
    %1746 = vmatpush2.bf16.msra.mxu0 0
    %1747 = vmatprep.subr.bf16.mxu0 0
    %1748 = vmatpush2.bf16.msra.mxu0 0
    %1749 = vmatprep.subr.bf16.mxu0 0
    %1750 = vmatpush2.bf16.msra.mxu0 0
    %1751 = vmatprep.subr.bf16.mxu0 0
    %1752 = vmatpush2.bf16.msra.mxu0 0
    %1753 = vmatprep.subr.bf16.mxu0 0
    %1754 = vmatpush2.bf16.msra.mxu0 0
    %1755 = vmatprep.subr.bf16.mxu0 0
    %1756 = vmatpush2.bf16.msra.mxu0 0
    %1757 = vmatprep.mubr.bf16.mxu0 0
    %1758 = vmatmul.mubr.bf16.gmra.mxu0 %v1676
    %v1759 = vpop.f32.mrf.mxu0
    %v1760 = vadd.f32 0.0, %v1759
    %v1761 = vpop.f32.mrf.mxu0
    %v1762 = vpop.f32.mrf.mxu0
    %v1763 = vpop.f32.mrf.mxu0
    %1764 = vdwg.mxu0
    %v1765 = vpack.c.bf16 %v1654, %v1654
    %1766 = vmatprep.subr.bf16.mxu0 0
    %1767 = vmatpush1.bf16.msra.mxu0 %v1716
    %1768 = vmatprep.subr.bf16.mxu0 0
    %1769 = vmatpush1.bf16.msra.mxu0 %v1715
    %1770 = vmatprep.subr.bf16.mxu0 0
    %1771 = vmatpush1.bf16.msra.mxu0 %v1714
    %1772 = vmatprep.subr.bf16.mxu0 0
    %1773 = vmatpush1.bf16.msra.mxu0 %v1713
    %1774 = vmatprep.subr.bf16.mxu0 0
    %1775 = vmatpush1.bf16.msra.mxu0 %v1712
    %1776 = vmatprep.subr.bf16.mxu0 0
    %1777 = vmatpush1.bf16.msra.mxu0 %v1711
    %1778 = vmatprep.subr.bf16.mxu0 0
    %1779 = vmatpush1.bf16.msra.mxu0 %v1710
    %1780 = vmatprep.subr.bf16.mxu0 0
    %1781 = vmatpush1.bf16.msra.mxu0 %v1709
    %1782 = vmatprep.subr.bf16.mxu0 0
    %1783 = vmatpush2.bf16.msra.mxu0 0
    %1784 = vmatprep.subr.bf16.mxu0 0
    %1785 = vmatpush2.bf16.msra.mxu0 0
    %1786 = vmatprep.subr.bf16.mxu0 0
    %1787 = vmatpush2.bf16.msra.mxu0 0
    %1788 = vmatprep.subr.bf16.mxu0 0
    %1789 = vmatpush2.bf16.msra.mxu0 0
    %1790 = vmatprep.subr.bf16.mxu0 0
    %1791 = vmatpush2.bf16.msra.mxu0 0
    %1792 = vmatprep.subr.bf16.mxu0 0
    %1793 = vmatpush2.bf16.msra.mxu0 0
    %1794 = vmatprep.subr.bf16.mxu0 0
    %1795 = vmatpush2.bf16.msra.mxu0 0
    %1796 = vmatprep.subr.bf16.mxu0 0
    %1797 = vmatpush2.bf16.msra.mxu0 0
    %1798 = vmatprep.mubr.bf16.mxu0 0
    %1799 = vmatmul.mubr.bf16.gmra.mxu0 %v1765
    %v1800 = vpop.f32.mrf.mxu0
    %v1801 = vadd.f32 0.0, %v1800
    %v1802 = vpop.f32.mrf.mxu0
    %v1803 = vpop.f32.mrf.mxu0
    %v1804 = vpop.f32.mrf.mxu0
    %1805 = vdwg.mxu0
    %s1806 = scalar_lea.vmem [#allocation5], 768
    %v1807 = vld [vmem:[%s1806] sm:$0xf]
    %v1808 = vld [vmem:[%s1806 + $0x4] sm:$0xf]
    %v1809 = vld [vmem:[%s1806 + $0x8] sm:$0xf]
    %v1810 = vld [vmem:[%s1806 + $0xc] sm:$0xf]
    %v1811 = vld [vmem:[%s1806 + $0x10] sm:$0xf]
    %v1812 = vld [vmem:[%s1806 + $0x14] sm:$0xf]
    %v1813 = vld [vmem:[%s1806 + $0x18] sm:$0xf]
    %v1814 = vld [vmem:[%s1806 + $0x1c] sm:$0xf]
    %v1815 = vld [vmem:[%s1806 + $0x20] sm:$0xf]
    %v1816 = vld [vmem:[%s1806 + $0x24] sm:$0xf]
    %v1817 = vld [vmem:[%s1806 + $0x28] sm:$0xf]
    %v1818 = vld [vmem:[%s1806 + $0x2c] sm:$0xf]
    %v1819 = vld [vmem:[%s1806 + $0x30] sm:$0xf]
    %v1820 = vld [vmem:[%s1806 + $0x34] sm:$0xf]
    %v1821 = vld [vmem:[%s1806 + $0x38] sm:$0xf]
    %v1822 = vld [vmem:[%s1806 + $0x3c] sm:$0xf]
    %v1823 = vpack.c.bf16 %v1760, %v1760
    %v1840 = vunpack.c.l.b16 %v1807
    %v1841 = vunpack.c.l.b16 %v1808
    %v1842 = vunpack.c.l.b16 %v1809
    %v1843 = vunpack.c.l.b16 %v1810
    %v1844 = vunpack.c.l.b16 %v1811
    %v1845 = vunpack.c.l.b16 %v1812
    %v1846 = vunpack.c.l.b16 %v1813
    %v1847 = vunpack.c.l.b16 %v1814
    %v1848 = vunpack.c.l.b16 %v1815
    %v1849 = vunpack.c.l.b16 %v1816
    %v1850 = vunpack.c.l.b16 %v1817
    %v1851 = vunpack.c.l.b16 %v1818
    %v1852 = vunpack.c.l.b16 %v1819
    %v1853 = vunpack.c.l.b16 %v1820
    %v1854 = vunpack.c.l.b16 %v1821
    %v1855 = vunpack.c.l.b16 %v1822
    %v1856 = vpack.c.b16 %v1841, %v1840
    %v1857 = vpack.c.b16 %v1843, %v1842
    %v1858 = vpack.c.b16 %v1845, %v1844
    %v1859 = vpack.c.b16 %v1847, %v1846
    %v1860 = vpack.c.b16 %v1849, %v1848
    %v1861 = vpack.c.b16 %v1851, %v1850
    %v1862 = vpack.c.b16 %v1853, %v1852
    %v1863 = vpack.c.b16 %v1855, %v1854
    %1872 = vmatprep.subr.bf16.mxu0 0
    %1873 = vmatpush1.bf16.msra.mxu0 %v1863
    %1874 = vmatprep.subr.bf16.mxu0 0
    %1875 = vmatpush1.bf16.msra.mxu0 %v1862
    %1876 = vmatprep.subr.bf16.mxu0 0
    %1877 = vmatpush1.bf16.msra.mxu0 %v1861
    %1878 = vmatprep.subr.bf16.mxu0 0
    %1879 = vmatpush1.bf16.msra.mxu0 %v1860
    %1880 = vmatprep.subr.bf16.mxu0 0
    %1881 = vmatpush1.bf16.msra.mxu0 %v1859
    %1882 = vmatprep.subr.bf16.mxu0 0
    %1883 = vmatpush1.bf16.msra.mxu0 %v1858
    %1884 = vmatprep.subr.bf16.mxu0 0
    %1885 = vmatpush1.bf16.msra.mxu0 %v1857
    %1886 = vmatprep.subr.bf16.mxu0 0
    %1887 = vmatpush1.bf16.msra.mxu0 %v1856
    %1888 = vmatprep.subr.bf16.mxu0 0
    %1889 = vmatpush2.bf16.msra.mxu0 0
    %1890 = vmatprep.subr.bf16.mxu0 0
    %1891 = vmatpush2.bf16.msra.mxu0 0
    %1892 = vmatprep.subr.bf16.mxu0 0
    %1893 = vmatpush2.bf16.msra.mxu0 0
    %1894 = vmatprep.subr.bf16.mxu0 0
    %1895 = vmatpush2.bf16.msra.mxu0 0
    %1896 = vmatprep.subr.bf16.mxu0 0
    %1897 = vmatpush2.bf16.msra.mxu0 0
    %1898 = vmatprep.subr.bf16.mxu0 0
    %1899 = vmatpush2.bf16.msra.mxu0 0
    %1900 = vmatprep.subr.bf16.mxu0 0
    %1901 = vmatpush2.bf16.msra.mxu0 0
    %1902 = vmatprep.subr.bf16.mxu0 0
    %1903 = vmatpush2.bf16.msra.mxu0 0
    %1904 = vmatprep.mubr.bf16.mxu0 0
    %1905 = vmatmul.mubr.bf16.gmra.mxu0 %v1823
    %v1906 = vpop.f32.mrf.mxu0
    %v1907 = vadd.f32 0.0, %v1906
    %v1908 = vpop.f32.mrf.mxu0
    %v1909 = vpop.f32.mrf.mxu0
    %v1910 = vpop.f32.mrf.mxu0
    %1911 = vdwg.mxu0
    %v1912 = vpack.c.bf16 %v1801, %v1801
    %1913 = vmatprep.subr.bf16.mxu0 0
    %1914 = vmatpush1.bf16.msra.mxu0 %v1863
    %1915 = vmatprep.subr.bf16.mxu0 0
    %1916 = vmatpush1.bf16.msra.mxu0 %v1862
    %1917 = vmatprep.subr.bf16.mxu0 0
    %1918 = vmatpush1.bf16.msra.mxu0 %v1861
    %1919 = vmatprep.subr.bf16.mxu0 0
    %1920 = vmatpush1.bf16.msra.mxu0 %v1860
    %1921 = vmatprep.subr.bf16.mxu0 0
    %1922 = vmatpush1.bf16.msra.mxu0 %v1859
    %1923 = vmatprep.subr.bf16.mxu0 0
    %1924 = vmatpush1.bf16.msra.mxu0 %v1858
    %1925 = vmatprep.subr.bf16.mxu0 0
    %1926 = vmatpush1.bf16.msra.mxu0 %v1857
    %1927 = vmatprep.subr.bf16.mxu0 0
    %1928 = vmatpush1.bf16.msra.mxu0 %v1856
    %1929 = vmatprep.subr.bf16.mxu0 0
    %1930 = vmatpush2.bf16.msra.mxu0 0
    %1931 = vmatprep.subr.bf16.mxu0 0
    %1932 = vmatpush2.bf16.msra.mxu0 0
    %1933 = vmatprep.subr.bf16.mxu0 0
    %1934 = vmatpush2.bf16.msra.mxu0 0
    %1935 = vmatprep.subr.bf16.mxu0 0
    %1936 = vmatpush2.bf16.msra.mxu0 0
    %1937 = vmatprep.subr.bf16.mxu0 0
    %1938 = vmatpush2.bf16.msra.mxu0 0
    %1939 = vmatprep.subr.bf16.mxu0 0
    %1940 = vmatpush2.bf16.msra.mxu0 0
    %1941 = vmatprep.subr.bf16.mxu0 0
    %1942 = vmatpush2.bf16.msra.mxu0 0
    %1943 = vmatprep.subr.bf16.mxu0 0
    %1944 = vmatpush2.bf16.msra.mxu0 0
    %1945 = vmatprep.mubr.bf16.mxu0 0
    %1946 = vmatmul.mubr.bf16.gmra.mxu0 %v1912
    %v1947 = vpop.f32.mrf.mxu0
    %v1948 = vadd.f32 0.0, %v1947
    %v1949 = vpop.f32.mrf.mxu0
    %v1950 = vpop.f32.mrf.mxu0
    %v1951 = vpop.f32.mrf.mxu0
    %1952 = vdwg.mxu0
    %s1953 = scalar_lea.vmem [#allocation5], 832
    %v1954 = vld [vmem:[%s1953] sm:$0xf]
    %v1955 = vld [vmem:[%s1953 + $0x4] sm:$0xf]
    %v1956 = vld [vmem:[%s1953 + $0x8] sm:$0xf]
    %v1957 = vld [vmem:[%s1953 + $0xc] sm:$0xf]
    %v1958 = vld [vmem:[%s1953 + $0x10] sm:$0xf]
    %v1959 = vld [vmem:[%s1953 + $0x14] sm:$0xf]
    %v1960 = vld [vmem:[%s1953 + $0x18] sm:$0xf]
    %v1961 = vld [vmem:[%s1953 + $0x1c] sm:$0xf]
    %v1962 = vld [vmem:[%s1953 + $0x20] sm:$0xf]
    %v1963 = vld [vmem:[%s1953 + $0x24] sm:$0xf]
    %v1964 = vld [vmem:[%s1953 + $0x28] sm:$0xf]
    %v1965 = vld [vmem:[%s1953 + $0x2c] sm:$0xf]
    %v1966 = vld [vmem:[%s1953 + $0x30] sm:$0xf]
    %v1967 = vld [vmem:[%s1953 + $0x34] sm:$0xf]
    %v1968 = vld [vmem:[%s1953 + $0x38] sm:$0xf]
    %v1969 = vld [vmem:[%s1953 + $0x3c] sm:$0xf]
    %v1970 = vpack.c.bf16 %v1907, %v1907
    %v1987 = vunpack.c.l.b16 %v1954
    %v1988 = vunpack.c.l.b16 %v1955
    %v1989 = vunpack.c.l.b16 %v1956
    %v1990 = vunpack.c.l.b16 %v1957
    %v1991 = vunpack.c.l.b16 %v1958
    %v1992 = vunpack.c.l.b16 %v1959
    %v1993 = vunpack.c.l.b16 %v1960
    %v1994 = vunpack.c.l.b16 %v1961
    %v1995 = vunpack.c.l.b16 %v1962
    %v1996 = vunpack.c.l.b16 %v1963
    %v1997 = vunpack.c.l.b16 %v1964
    %v1998 = vunpack.c.l.b16 %v1965
    %v1999 = vunpack.c.l.b16 %v1966
    %v2000 = vunpack.c.l.b16 %v1967
    %v2001 = vunpack.c.l.b16 %v1968
    %v2002 = vunpack.c.l.b16 %v1969
    %v2003 = vpack.c.b16 %v1988, %v1987
    %v2004 = vpack.c.b16 %v1990, %v1989
    %v2005 = vpack.c.b16 %v1992, %v1991
    %v2006 = vpack.c.b16 %v1994, %v1993
    %v2007 = vpack.c.b16 %v1996, %v1995
    %v2008 = vpack.c.b16 %v1998, %v1997
    %v2009 = vpack.c.b16 %v2000, %v1999
    %v2010 = vpack.c.b16 %v2002, %v2001
    %2019 = vmatprep.subr.bf16.mxu0 0
    %2020 = vmatpush1.bf16.msra.mxu0 %v2010
    %2021 = vmatprep.subr.bf16.mxu0 0
    %2022 = vmatpush1.bf16.msra.mxu0 %v2009
    %2023 = vmatprep.subr.bf16.mxu0 0
    %2024 = vmatpush1.bf16.msra.mxu0 %v2008
    %2025 = vmatprep.subr.bf16.mxu0 0
    %2026 = vmatpush1.bf16.msra.mxu0 %v2007
    %2027 = vmatprep.subr.bf16.mxu0 0
    %2028 = vmatpush1.bf16.msra.mxu0 %v2006
    %2029 = vmatprep.subr.bf16.mxu0 0
    %2030 = vmatpush1.bf16.msra.mxu0 %v2005
    %2031 = vmatprep.subr.bf16.mxu0 0
    %2032 = vmatpush1.bf16.msra.mxu0 %v2004
    %2033 = vmatprep.subr.bf16.mxu0 0
    %2034 = vmatpush1.bf16.msra.mxu0 %v2003
    %2035 = vmatprep.subr.bf16.mxu0 0
    %2036 = vmatpush2.bf16.msra.mxu0 0
    %2037 = vmatprep.subr.bf16.mxu0 0
    %2038 = vmatpush2.bf16.msra.mxu0 0
    %2039 = vmatprep.subr.bf16.mxu0 0
    %2040 = vmatpush2.bf16.msra.mxu0 0
    %2041 = vmatprep.subr.bf16.mxu0 0
    %2042 = vmatpush2.bf16.msra.mxu0 0
    %2043 = vmatprep.subr.bf16.mxu0 0
    %2044 = vmatpush2.bf16.msra.mxu0 0
    %2045 = vmatprep.subr.bf16.mxu0 0
    %2046 = vmatpush2.bf16.msra.mxu0 0
    %2047 = vmatprep.subr.bf16.mxu0 0
    %2048 = vmatpush2.bf16.msra.mxu0 0
    %2049 = vmatprep.subr.bf16.mxu0 0
    %2050 = vmatpush2.bf16.msra.mxu0 0
    %2051 = vmatprep.mubr.bf16.mxu0 0
    %2052 = vmatmul.mubr.bf16.gmra.mxu0 %v1970
    %v2053 = vpop.f32.mrf.mxu0
    %v2054 = vadd.f32 0.0, %v2053
    %v2055 = vpop.f32.mrf.mxu0
    %v2056 = vpop.f32.mrf.mxu0
    %v2057 = vpop.f32.mrf.mxu0
    %2058 = vdwg.mxu0
    %v2059 = vpack.c.bf16 %v1948, %v1948
    %2060 = vmatprep.subr.bf16.mxu0 0
    %2061 = vmatpush1.bf16.msra.mxu0 %v2010
    %2062 = vmatprep.subr.bf16.mxu0 0
    %2063 = vmatpush1.bf16.msra.mxu0 %v2009
    %2064 = vmatprep.subr.bf16.mxu0 0
    %2065 = vmatpush1.bf16.msra.mxu0 %v2008
    %2066 = vmatprep.subr.bf16.mxu0 0
    %2067 = vmatpush1.bf16.msra.mxu0 %v2007
    %2068 = vmatprep.subr.bf16.mxu0 0
    %2069 = vmatpush1.bf16.msra.mxu0 %v2006
    %2070 = vmatprep.subr.bf16.mxu0 0
    %2071 = vmatpush1.bf16.msra.mxu0 %v2005
    %2072 = vmatprep.subr.bf16.mxu0 0
    %2073 = vmatpush1.bf16.msra.mxu0 %v2004
    %2074 = vmatprep.subr.bf16.mxu0 0
    %2075 = vmatpush1.bf16.msra.mxu0 %v2003
    %2076 = vmatprep.subr.bf16.mxu0 0
    %2077 = vmatpush2.bf16.msra.mxu0 0
    %2078 = vmatprep.subr.bf16.mxu0 0
    %2079 = vmatpush2.bf16.msra.mxu0 0
    %2080 = vmatprep.subr.bf16.mxu0 0
    %2081 = vmatpush2.bf16.msra.mxu0 0
    %2082 = vmatprep.subr.bf16.mxu0 0
    %2083 = vmatpush2.bf16.msra.mxu0 0
    %2084 = vmatprep.subr.bf16.mxu0 0
    %2085 = vmatpush2.bf16.msra.mxu0 0
    %2086 = vmatprep.subr.bf16.mxu0 0
    %2087 = vmatpush2.bf16.msra.mxu0 0
    %2088 = vmatprep.subr.bf16.mxu0 0
    %2089 = vmatpush2.bf16.msra.mxu0 0
    %2090 = vmatprep.subr.bf16.mxu0 0
    %2091 = vmatpush2.bf16.msra.mxu0 0
    %2092 = vmatprep.mubr.bf16.mxu0 0
    %2093 = vmatmul.mubr.bf16.gmra.mxu0 %v2059
    %v2094 = vpop.f32.mrf.mxu0
    %v2095 = vadd.f32 0.0, %v2094
    %v2096 = vpop.f32.mrf.mxu0
    %v2097 = vpop.f32.mrf.mxu0
    %v2098 = vpop.f32.mrf.mxu0
    %2099 = vdwg.mxu0
    %s2100 = scalar_lea.vmem [#allocation5], 896
    %v2101 = vld [vmem:[%s2100] sm:$0xf]
    %v2102 = vld [vmem:[%s2100 + $0x4] sm:$0xf]
    %v2103 = vld [vmem:[%s2100 + $0x8] sm:$0xf]
    %v2104 = vld [vmem:[%s2100 + $0xc] sm:$0xf]
    %v2105 = vld [vmem:[%s2100 + $0x10] sm:$0xf]
    %v2106 = vld [vmem:[%s2100 + $0x14] sm:$0xf]
    %v2107 = vld [vmem:[%s2100 + $0x18] sm:$0xf]
    %v2108 = vld [vmem:[%s2100 + $0x1c] sm:$0xf]
    %v2109 = vld [vmem:[%s2100 + $0x20] sm:$0xf]
    %v2110 = vld [vmem:[%s2100 + $0x24] sm:$0xf]
    %v2111 = vld [vmem:[%s2100 + $0x28] sm:$0xf]
    %v2112 = vld [vmem:[%s2100 + $0x2c] sm:$0xf]
    %v2113 = vld [vmem:[%s2100 + $0x30] sm:$0xf]
    %v2114 = vld [vmem:[%s2100 + $0x34] sm:$0xf]
    %v2115 = vld [vmem:[%s2100 + $0x38] sm:$0xf]
    %v2116 = vld [vmem:[%s2100 + $0x3c] sm:$0xf]
    %v2117 = vpack.c.bf16 %v2054, %v2054
    %v2134 = vunpack.c.l.b16 %v2101
    %v2135 = vunpack.c.l.b16 %v2102
    %v2136 = vunpack.c.l.b16 %v2103
    %v2137 = vunpack.c.l.b16 %v2104
    %v2138 = vunpack.c.l.b16 %v2105
    %v2139 = vunpack.c.l.b16 %v2106
    %v2140 = vunpack.c.l.b16 %v2107
    %v2141 = vunpack.c.l.b16 %v2108
    %v2142 = vunpack.c.l.b16 %v2109
    %v2143 = vunpack.c.l.b16 %v2110
    %v2144 = vunpack.c.l.b16 %v2111
    %v2145 = vunpack.c.l.b16 %v2112
    %v2146 = vunpack.c.l.b16 %v2113
    %v2147 = vunpack.c.l.b16 %v2114
    %v2148 = vunpack.c.l.b16 %v2115
    %v2149 = vunpack.c.l.b16 %v2116
    %v2150 = vpack.c.b16 %v2135, %v2134
    %v2151 = vpack.c.b16 %v2137, %v2136
    %v2152 = vpack.c.b16 %v2139, %v2138
    %v2153 = vpack.c.b16 %v2141, %v2140
    %v2154 = vpack.c.b16 %v2143, %v2142
    %v2155 = vpack.c.b16 %v2145, %v2144
    %v2156 = vpack.c.b16 %v2147, %v2146
    %v2157 = vpack.c.b16 %v2149, %v2148
    %2166 = vmatprep.subr.bf16.mxu0 0
    %2167 = vmatpush1.bf16.msra.mxu0 %v2157
    %2168 = vmatprep.subr.bf16.mxu0 0
    %2169 = vmatpush1.bf16.msra.mxu0 %v2156
    %2170 = vmatprep.subr.bf16.mxu0 0
    %2171 = vmatpush1.bf16.msra.mxu0 %v2155
    %2172 = vmatprep.subr.bf16.mxu0 0
    %2173 = vmatpush1.bf16.msra.mxu0 %v2154
    %2174 = vmatprep.subr.bf16.mxu0 0
    %2175 = vmatpush1.bf16.msra.mxu0 %v2153
    %2176 = vmatprep.subr.bf16.mxu0 0
    %2177 = vmatpush1.bf16.msra.mxu0 %v2152
    %2178 = vmatprep.subr.bf16.mxu0 0
    %2179 = vmatpush1.bf16.msra.mxu0 %v2151
    %2180 = vmatprep.subr.bf16.mxu0 0
    %2181 = vmatpush1.bf16.msra.mxu0 %v2150
    %2182 = vmatprep.subr.bf16.mxu0 0
    %2183 = vmatpush2.bf16.msra.mxu0 0
    %2184 = vmatprep.subr.bf16.mxu0 0
    %2185 = vmatpush2.bf16.msra.mxu0 0
    %2186 = vmatprep.subr.bf16.mxu0 0
    %2187 = vmatpush2.bf16.msra.mxu0 0
    %2188 = vmatprep.subr.bf16.mxu0 0
    %2189 = vmatpush2.bf16.msra.mxu0 0
    %2190 = vmatprep.subr.bf16.mxu0 0
    %2191 = vmatpush2.bf16.msra.mxu0 0
    %2192 = vmatprep.subr.bf16.mxu0 0
    %2193 = vmatpush2.bf16.msra.mxu0 0
    %2194 = vmatprep.subr.bf16.mxu0 0
    %2195 = vmatpush2.bf16.msra.mxu0 0
    %2196 = vmatprep.subr.bf16.mxu0 0
    %2197 = vmatpush2.bf16.msra.mxu0 0
    %2198 = vmatprep.mubr.bf16.mxu0 0
    %2199 = vmatmul.mubr.bf16.gmra.mxu0 %v2117
    %v2200 = vpop.f32.mrf.mxu0
    %v2201 = vadd.f32 0.0, %v2200
    %v2202 = vpop.f32.mrf.mxu0
    %v2203 = vpop.f32.mrf.mxu0
    %v2204 = vpop.f32.mrf.mxu0
    %2205 = vdwg.mxu0
    %v2206 = vpack.c.bf16 %v2095, %v2095
    %2207 = vmatprep.subr.bf16.mxu0 0
    %2208 = vmatpush1.bf16.msra.mxu0 %v2157
    %2209 = vmatprep.subr.bf16.mxu0 0
    %2210 = vmatpush1.bf16.msra.mxu0 %v2156
    %2211 = vmatprep.subr.bf16.mxu0 0
    %2212 = vmatpush1.bf16.msra.mxu0 %v2155
    %2213 = vmatprep.subr.bf16.mxu0 0
    %2214 = vmatpush1.bf16.msra.mxu0 %v2154
    %2215 = vmatprep.subr.bf16.mxu0 0
    %2216 = vmatpush1.bf16.msra.mxu0 %v2153
    %2217 = vmatprep.subr.bf16.mxu0 0
    %2218 = vmatpush1.bf16.msra.mxu0 %v2152
    %2219 = vmatprep.subr.bf16.mxu0 0
    %2220 = vmatpush1.bf16.msra.mxu0 %v2151
    %2221 = vmatprep.subr.bf16.mxu0 0
    %2222 = vmatpush1.bf16.msra.mxu0 %v2150
    %2223 = vmatprep.subr.bf16.mxu0 0
    %2224 = vmatpush2.bf16.msra.mxu0 0
    %2225 = vmatprep.subr.bf16.mxu0 0
    %2226 = vmatpush2.bf16.msra.mxu0 0
    %2227 = vmatprep.subr.bf16.mxu0 0
    %2228 = vmatpush2.bf16.msra.mxu0 0
    %2229 = vmatprep.subr.bf16.mxu0 0
    %2230 = vmatpush2.bf16.msra.mxu0 0
    %2231 = vmatprep.subr.bf16.mxu0 0
    %2232 = vmatpush2.bf16.msra.mxu0 0
    %2233 = vmatprep.subr.bf16.mxu0 0
    %2234 = vmatpush2.bf16.msra.mxu0 0
    %2235 = vmatprep.subr.bf16.mxu0 0
    %2236 = vmatpush2.bf16.msra.mxu0 0
    %2237 = vmatprep.subr.bf16.mxu0 0
    %2238 = vmatpush2.bf16.msra.mxu0 0
    %2239 = vmatprep.mubr.bf16.mxu0 0
    %2240 = vmatmul.mubr.bf16.gmra.mxu0 %v2206
    %v2241 = vpop.f32.mrf.mxu0
    %v2242 = vadd.f32 0.0, %v2241
    %v2243 = vpop.f32.mrf.mxu0
    %v2244 = vpop.f32.mrf.mxu0
    %v2245 = vpop.f32.mrf.mxu0
    %2246 = vdwg.mxu0
    %s2247 = scalar_lea.vmem [#allocation5], 960
    %v2248 = vld [vmem:[%s2247] sm:$0xf]
    %v2249 = vld [vmem:[%s2247 + $0x4] sm:$0xf]
    %v2250 = vld [vmem:[%s2247 + $0x8] sm:$0xf]
    %v2251 = vld [vmem:[%s2247 + $0xc] sm:$0xf]
    %v2252 = vld [vmem:[%s2247 + $0x10] sm:$0xf]
    %v2253 = vld [vmem:[%s2247 + $0x14] sm:$0xf]
    %v2254 = vld [vmem:[%s2247 + $0x18] sm:$0xf]
    %v2255 = vld [vmem:[%s2247 + $0x1c] sm:$0xf]
    %v2256 = vld [vmem:[%s2247 + $0x20] sm:$0xf]
    %v2257 = vld [vmem:[%s2247 + $0x24] sm:$0xf]
    %v2258 = vld [vmem:[%s2247 + $0x28] sm:$0xf]
    %v2259 = vld [vmem:[%s2247 + $0x2c] sm:$0xf]
    %v2260 = vld [vmem:[%s2247 + $0x30] sm:$0xf]
    %v2261 = vld [vmem:[%s2247 + $0x34] sm:$0xf]
    %v2262 = vld [vmem:[%s2247 + $0x38] sm:$0xf]
    %v2263 = vld [vmem:[%s2247 + $0x3c] sm:$0xf]
    %v2264 = vpack.c.bf16 %v2201, %v2201
    %v2281 = vunpack.c.l.b16 %v2248
    %v2282 = vunpack.c.l.b16 %v2249
    %v2283 = vunpack.c.l.b16 %v2250
    %v2284 = vunpack.c.l.b16 %v2251
    %v2285 = vunpack.c.l.b16 %v2252
    %v2286 = vunpack.c.l.b16 %v2253
    %v2287 = vunpack.c.l.b16 %v2254
    %v2288 = vunpack.c.l.b16 %v2255
    %v2289 = vunpack.c.l.b16 %v2256
    %v2290 = vunpack.c.l.b16 %v2257
    %v2291 = vunpack.c.l.b16 %v2258
    %v2292 = vunpack.c.l.b16 %v2259
    %v2293 = vunpack.c.l.b16 %v2260
    %v2294 = vunpack.c.l.b16 %v2261
    %v2295 = vunpack.c.l.b16 %v2262
    %v2296 = vunpack.c.l.b16 %v2263
    %v2297 = vpack.c.b16 %v2282, %v2281
    %v2298 = vpack.c.b16 %v2284, %v2283
    %v2299 = vpack.c.b16 %v2286, %v2285
    %v2300 = vpack.c.b16 %v2288, %v2287
    %v2301 = vpack.c.b16 %v2290, %v2289
    %v2302 = vpack.c.b16 %v2292, %v2291
    %v2303 = vpack.c.b16 %v2294, %v2293
    %v2304 = vpack.c.b16 %v2296, %v2295
    %2313 = vmatprep.subr.bf16.mxu0 0
    %2314 = vmatpush1.bf16.msra.mxu0 %v2304
    %2315 = vmatprep.subr.bf16.mxu0 0
    %2316 = vmatpush1.bf16.msra.mxu0 %v2303
    %2317 = vmatprep.subr.bf16.mxu0 0
    %2318 = vmatpush1.bf16.msra.mxu0 %v2302
    %2319 = vmatprep.subr.bf16.mxu0 0
    %2320 = vmatpush1.bf16.msra.mxu0 %v2301
    %2321 = vmatprep.subr.bf16.mxu0 0
    %2322 = vmatpush1.bf16.msra.mxu0 %v2300
    %2323 = vmatprep.subr.bf16.mxu0 0
    %2324 = vmatpush1.bf16.msra.mxu0 %v2299
    %2325 = vmatprep.subr.bf16.mxu0 0
    %2326 = vmatpush1.bf16.msra.mxu0 %v2298
    %2327 = vmatprep.subr.bf16.mxu0 0
    %2328 = vmatpush1.bf16.msra.mxu0 %v2297
    %2329 = vmatprep.subr.bf16.mxu0 0
    %2330 = vmatpush2.bf16.msra.mxu0 0
    %2331 = vmatprep.subr.bf16.mxu0 0
    %2332 = vmatpush2.bf16.msra.mxu0 0
    %2333 = vmatprep.subr.bf16.mxu0 0
    %2334 = vmatpush2.bf16.msra.mxu0 0
    %2335 = vmatprep.subr.bf16.mxu0 0
    %2336 = vmatpush2.bf16.msra.mxu0 0
    %2337 = vmatprep.subr.bf16.mxu0 0
    %2338 = vmatpush2.bf16.msra.mxu0 0
    %2339 = vmatprep.subr.bf16.mxu0 0
    %2340 = vmatpush2.bf16.msra.mxu0 0
    %2341 = vmatprep.subr.bf16.mxu0 0
    %2342 = vmatpush2.bf16.msra.mxu0 0
    %2343 = vmatprep.subr.bf16.mxu0 0
    %2344 = vmatpush2.bf16.msra.mxu0 0
    %2345 = vmatprep.mubr.bf16.mxu0 0
    %2346 = vmatmul.mubr.bf16.gmra.mxu0 %v2264
    %v2347 = vpop.f32.mrf.mxu0
    %v2348 = vadd.f32 0.0, %v2347
    %v2349 = vpop.f32.mrf.mxu0
    %v2350 = vpop.f32.mrf.mxu0
    %v2351 = vpop.f32.mrf.mxu0
    %2352 = vdwg.mxu0
    %v2353 = vpack.c.bf16 %v2242, %v2242
    %2354 = vmatprep.subr.bf16.mxu0 0
    %2355 = vmatpush1.bf16.msra.mxu0 %v2304
    %2356 = vmatprep.subr.bf16.mxu0 0
    %2357 = vmatpush1.bf16.msra.mxu0 %v2303
    %2358 = vmatprep.subr.bf16.mxu0 0
    %2359 = vmatpush1.bf16.msra.mxu0 %v2302
    %2360 = vmatprep.subr.bf16.mxu0 0
    %2361 = vmatpush1.bf16.msra.mxu0 %v2301
    %2362 = vmatprep.subr.bf16.mxu0 0
    %2363 = vmatpush1.bf16.msra.mxu0 %v2300
    %2364 = vmatprep.subr.bf16.mxu0 0
    %2365 = vmatpush1.bf16.msra.mxu0 %v2299
    %2366 = vmatprep.subr.bf16.mxu0 0
    %2367 = vmatpush1.bf16.msra.mxu0 %v2298
    %2368 = vmatprep.subr.bf16.mxu0 0
    %2369 = vmatpush1.bf16.msra.mxu0 %v2297
    %2370 = vmatprep.subr.bf16.mxu0 0
    %2371 = vmatpush2.bf16.msra.mxu0 0
    %2372 = vmatprep.subr.bf16.mxu0 0
    %2373 = vmatpush2.bf16.msra.mxu0 0
    %2374 = vmatprep.subr.bf16.mxu0 0
    %2375 = vmatpush2.bf16.msra.mxu0 0
    %2376 = vmatprep.subr.bf16.mxu0 0
    %2377 = vmatpush2.bf16.msra.mxu0 0
    %2378 = vmatprep.subr.bf16.mxu0 0
    %2379 = vmatpush2.bf16.msra.mxu0 0
    %2380 = vmatprep.subr.bf16.mxu0 0
    %2381 = vmatpush2.bf16.msra.mxu0 0
    %2382 = vmatprep.subr.bf16.mxu0 0
    %2383 = vmatpush2.bf16.msra.mxu0 0
    %2384 = vmatprep.subr.bf16.mxu0 0
    %2385 = vmatpush2.bf16.msra.mxu0 0
    %2386 = vmatprep.mubr.bf16.mxu0 0
    %2387 = vmatmul.mubr.bf16.gmra.mxu0 %v2353
    %v2388 = vpop.f32.mrf.mxu0
    %v2389 = vadd.f32 0.0, %v2388
    %v2390 = vpop.f32.mrf.mxu0
    %v2391 = vpop.f32.mrf.mxu0
    %v2392 = vpop.f32.mrf.mxu0
    %2393 = vdwg.mxu0
    %s2394 = scalar_lea.vmem [#allocation5], 1024
    %v2395 = vld [vmem:[%s2394] sm:$0xf]
    %v2396 = vld [vmem:[%s2394 + $0x4] sm:$0xf]
    %v2397 = vld [vmem:[%s2394 + $0x8] sm:$0xf]
    %v2398 = vld [vmem:[%s2394 + $0xc] sm:$0xf]
    %v2399 = vld [vmem:[%s2394 + $0x10] sm:$0xf]
    %v2400 = vld [vmem:[%s2394 + $0x14] sm:$0xf]
    %v2401 = vld [vmem:[%s2394 + $0x18] sm:$0xf]
    %v2402 = vld [vmem:[%s2394 + $0x1c] sm:$0xf]
    %v2403 = vld [vmem:[%s2394 + $0x20] sm:$0xf]
    %v2404 = vld [vmem:[%s2394 + $0x24] sm:$0xf]
    %v2405 = vld [vmem:[%s2394 + $0x28] sm:$0xf]
    %v2406 = vld [vmem:[%s2394 + $0x2c] sm:$0xf]
    %v2407 = vld [vmem:[%s2394 + $0x30] sm:$0xf]
    %v2408 = vld [vmem:[%s2394 + $0x34] sm:$0xf]
    %v2409 = vld [vmem:[%s2394 + $0x38] sm:$0xf]
    %v2410 = vld [vmem:[%s2394 + $0x3c] sm:$0xf]
    %v2411 = vpack.c.bf16 %v2348, %v2348
    %v2428 = vunpack.c.l.b16 %v2395
    %v2429 = vunpack.c.l.b16 %v2396
    %v2430 = vunpack.c.l.b16 %v2397
    %v2431 = vunpack.c.l.b16 %v2398
    %v2432 = vunpack.c.l.b16 %v2399
    %v2433 = vunpack.c.l.b16 %v2400
    %v2434 = vunpack.c.l.b16 %v2401
    %v2435 = vunpack.c.l.b16 %v2402
    %v2436 = vunpack.c.l.b16 %v2403
    %v2437 = vunpack.c.l.b16 %v2404
    %v2438 = vunpack.c.l.b16 %v2405
    %v2439 = vunpack.c.l.b16 %v2406
    %v2440 = vunpack.c.l.b16 %v2407
    %v2441 = vunpack.c.l.b16 %v2408
    %v2442 = vunpack.c.l.b16 %v2409
    %v2443 = vunpack.c.l.b16 %v2410
    %v2444 = vpack.c.b16 %v2429, %v2428
    %v2445 = vpack.c.b16 %v2431, %v2430
    %v2446 = vpack.c.b16 %v2433, %v2432
    %v2447 = vpack.c.b16 %v2435, %v2434
    %v2448 = vpack.c.b16 %v2437, %v2436
    %v2449 = vpack.c.b16 %v2439, %v2438
    %v2450 = vpack.c.b16 %v2441, %v2440
    %v2451 = vpack.c.b16 %v2443, %v2442
    %2460 = vmatprep.subr.bf16.mxu0 0
    %2461 = vmatpush1.bf16.msra.mxu0 %v2451
    %2462 = vmatprep.subr.bf16.mxu0 0
    %2463 = vmatpush1.bf16.msra.mxu0 %v2450
    %2464 = vmatprep.subr.bf16.mxu0 0
    %2465 = vmatpush1.bf16.msra.mxu0 %v2449
    %2466 = vmatprep.subr.bf16.mxu0 0
    %2467 = vmatpush1.bf16.msra.mxu0 %v2448
    %2468 = vmatprep.subr.bf16.mxu0 0
    %2469 = vmatpush1.bf16.msra.mxu0 %v2447
    %2470 = vmatprep.subr.bf16.mxu0 0
    %2471 = vmatpush1.bf16.msra.mxu0 %v2446
    %2472 = vmatprep.subr.bf16.mxu0 0
    %2473 = vmatpush1.bf16.msra.mxu0 %v2445
    %2474 = vmatprep.subr.bf16.mxu0 0
    %2475 = vmatpush1.bf16.msra.mxu0 %v2444
    %2476 = vmatprep.subr.bf16.mxu0 0
    %2477 = vmatpush2.bf16.msra.mxu0 0
    %2478 = vmatprep.subr.bf16.mxu0 0
    %2479 = vmatpush2.bf16.msra.mxu0 0
    %2480 = vmatprep.subr.bf16.mxu0 0
    %2481 = vmatpush2.bf16.msra.mxu0 0
    %2482 = vmatprep.subr.bf16.mxu0 0
    %2483 = vmatpush2.bf16.msra.mxu0 0
    %2484 = vmatprep.subr.bf16.mxu0 0
    %2485 = vmatpush2.bf16.msra.mxu0 0
    %2486 = vmatprep.subr.bf16.mxu0 0
    %2487 = vmatpush2.bf16.msra.mxu0 0
    %2488 = vmatprep.subr.bf16.mxu0 0
    %2489 = vmatpush2.bf16.msra.mxu0 0
    %2490 = vmatprep.subr.bf16.mxu0 0
    %2491 = vmatpush2.bf16.msra.mxu0 0
    %2492 = vmatprep.mubr.bf16.mxu0 0
    %2493 = vmatmul.mubr.bf16.gmra.mxu0 %v2411
    %v2494 = vpop.f32.mrf.mxu0
    %v2495 = vadd.f32 0.0, %v2494
    %v2496 = vpop.f32.mrf.mxu0
    %v2497 = vpop.f32.mrf.mxu0
    %v2498 = vpop.f32.mrf.mxu0
    %2499 = vdwg.mxu0
    %v2500 = vpack.c.bf16 %v2389, %v2389
    %2501 = vmatprep.subr.bf16.mxu0 0
    %2502 = vmatpush1.bf16.msra.mxu0 %v2451
    %2503 = vmatprep.subr.bf16.mxu0 0
    %2504 = vmatpush1.bf16.msra.mxu0 %v2450
    %2505 = vmatprep.subr.bf16.mxu0 0
    %2506 = vmatpush1.bf16.msra.mxu0 %v2449
    %2507 = vmatprep.subr.bf16.mxu0 0
    %2508 = vmatpush1.bf16.msra.mxu0 %v2448
    %2509 = vmatprep.subr.bf16.mxu0 0
    %2510 = vmatpush1.bf16.msra.mxu0 %v2447
    %2511 = vmatprep.subr.bf16.mxu0 0
    %2512 = vmatpush1.bf16.msra.mxu0 %v2446
    %2513 = vmatprep.subr.bf16.mxu0 0
    %2514 = vmatpush1.bf16.msra.mxu0 %v2445
    %2515 = vmatprep.subr.bf16.mxu0 0
    %2516 = vmatpush1.bf16.msra.mxu0 %v2444
    %2517 = vmatprep.subr.bf16.mxu0 0
    %2518 = vmatpush2.bf16.msra.mxu0 0
    %2519 = vmatprep.subr.bf16.mxu0 0
    %2520 = vmatpush2.bf16.msra.mxu0 0
    %2521 = vmatprep.subr.bf16.mxu0 0
    %2522 = vmatpush2.bf16.msra.mxu0 0
    %2523 = vmatprep.subr.bf16.mxu0 0
    %2524 = vmatpush2.bf16.msra.mxu0 0
    %2525 = vmatprep.subr.bf16.mxu0 0
    %2526 = vmatpush2.bf16.msra.mxu0 0
    %2527 = vmatprep.subr.bf16.mxu0 0
    %2528 = vmatpush2.bf16.msra.mxu0 0
    %2529 = vmatprep.subr.bf16.mxu0 0
    %2530 = vmatpush2.bf16.msra.mxu0 0
    %2531 = vmatprep.subr.bf16.mxu0 0
    %2532 = vmatpush2.bf16.msra.mxu0 0
    %2533 = vmatprep.mubr.bf16.mxu0 0
    %2534 = vmatmul.mubr.bf16.gmra.mxu0 %v2500
    %v2535 = vpop.f32.mrf.mxu0
    %v2536 = vadd.f32 0.0, %v2535
    %v2537 = vpop.f32.mrf.mxu0
    %v2538 = vpop.f32.mrf.mxu0
    %v2539 = vpop.f32.mrf.mxu0
    %2540 = vdwg.mxu0
    %s2541 = scalar_lea.vmem [#allocation5], 1088
    %v2542 = vld [vmem:[%s2541] sm:$0xf]
    %v2543 = vld [vmem:[%s2541 + $0x4] sm:$0xf]
    %v2544 = vld [vmem:[%s2541 + $0x8] sm:$0xf]
    %v2545 = vld [vmem:[%s2541 + $0xc] sm:$0xf]
    %v2546 = vld [vmem:[%s2541 + $0x10] sm:$0xf]
    %v2547 = vld [vmem:[%s2541 + $0x14] sm:$0xf]
    %v2548 = vld [vmem:[%s2541 + $0x18] sm:$0xf]
    %v2549 = vld [vmem:[%s2541 + $0x1c] sm:$0xf]
    %v2550 = vld [vmem:[%s2541 + $0x20] sm:$0xf]
    %v2551 = vld [vmem:[%s2541 + $0x24] sm:$0xf]
    %v2552 = vld [vmem:[%s2541 + $0x28] sm:$0xf]
    %v2553 = vld [vmem:[%s2541 + $0x2c] sm:$0xf]
    %v2554 = vld [vmem:[%s2541 + $0x30] sm:$0xf]
    %v2555 = vld [vmem:[%s2541 + $0x34] sm:$0xf]
    %v2556 = vld [vmem:[%s2541 + $0x38] sm:$0xf]
    %v2557 = vld [vmem:[%s2541 + $0x3c] sm:$0xf]
    %v2558 = vpack.c.bf16 %v2495, %v2495
    %v2575 = vunpack.c.l.b16 %v2542
    %v2576 = vunpack.c.l.b16 %v2543
    %v2577 = vunpack.c.l.b16 %v2544
    %v2578 = vunpack.c.l.b16 %v2545
    %v2579 = vunpack.c.l.b16 %v2546
    %v2580 = vunpack.c.l.b16 %v2547
    %v2581 = vunpack.c.l.b16 %v2548
    %v2582 = vunpack.c.l.b16 %v2549
    %v2583 = vunpack.c.l.b16 %v2550
    %v2584 = vunpack.c.l.b16 %v2551
    %v2585 = vunpack.c.l.b16 %v2552
    %v2586 = vunpack.c.l.b16 %v2553
    %v2587 = vunpack.c.l.b16 %v2554
    %v2588 = vunpack.c.l.b16 %v2555
    %v2589 = vunpack.c.l.b16 %v2556
    %v2590 = vunpack.c.l.b16 %v2557
    %v2591 = vpack.c.b16 %v2576, %v2575
    %v2592 = vpack.c.b16 %v2578, %v2577
    %v2593 = vpack.c.b16 %v2580, %v2579
    %v2594 = vpack.c.b16 %v2582, %v2581
    %v2595 = vpack.c.b16 %v2584, %v2583
    %v2596 = vpack.c.b16 %v2586, %v2585
    %v2597 = vpack.c.b16 %v2588, %v2587
    %v2598 = vpack.c.b16 %v2590, %v2589
    %2607 = vmatprep.subr.bf16.mxu0 0
    %2608 = vmatpush1.bf16.msra.mxu0 %v2598
    %2609 = vmatprep.subr.bf16.mxu0 0
    %2610 = vmatpush1.bf16.msra.mxu0 %v2597
    %2611 = vmatprep.subr.bf16.mxu0 0
    %2612 = vmatpush1.bf16.msra.mxu0 %v2596
    %2613 = vmatprep.subr.bf16.mxu0 0
    %2614 = vmatpush1.bf16.msra.mxu0 %v2595
    %2615 = vmatprep.subr.bf16.mxu0 0
    %2616 = vmatpush1.bf16.msra.mxu0 %v2594
    %2617 = vmatprep.subr.bf16.mxu0 0
    %2618 = vmatpush1.bf16.msra.mxu0 %v2593
    %2619 = vmatprep.subr.bf16.mxu0 0
    %2620 = vmatpush1.bf16.msra.mxu0 %v2592
    %2621 = vmatprep.subr.bf16.mxu0 0
    %2622 = vmatpush1.bf16.msra.mxu0 %v2591
    %2623 = vmatprep.subr.bf16.mxu0 0
    %2624 = vmatpush2.bf16.msra.mxu0 0
    %2625 = vmatprep.subr.bf16.mxu0 0
    %2626 = vmatpush2.bf16.msra.mxu0 0
    %2627 = vmatprep.subr.bf16.mxu0 0
    %2628 = vmatpush2.bf16.msra.mxu0 0
    %2629 = vmatprep.subr.bf16.mxu0 0
    %2630 = vmatpush2.bf16.msra.mxu0 0
    %2631 = vmatprep.subr.bf16.mxu0 0
    %2632 = vmatpush2.bf16.msra.mxu0 0
    %2633 = vmatprep.subr.bf16.mxu0 0
    %2634 = vmatpush2.bf16.msra.mxu0 0
    %2635 = vmatprep.subr.bf16.mxu0 0
    %2636 = vmatpush2.bf16.msra.mxu0 0
    %2637 = vmatprep.subr.bf16.mxu0 0
    %2638 = vmatpush2.bf16.msra.mxu0 0
    %2639 = vmatprep.mubr.bf16.mxu0 0
    %2640 = vmatmul.mubr.bf16.gmra.mxu0 %v2558
    %v2641 = vpop.f32.mrf.mxu0
    %v2642 = vadd.f32 0.0, %v2641
    %v2643 = vpop.f32.mrf.mxu0
    %v2644 = vpop.f32.mrf.mxu0
    %v2645 = vpop.f32.mrf.mxu0
    %2646 = vdwg.mxu0
    %v2647 = vpack.c.bf16 %v2536, %v2536
    %2648 = vmatprep.subr.bf16.mxu0 0
    %2649 = vmatpush1.bf16.msra.mxu0 %v2598
    %2650 = vmatprep.subr.bf16.mxu0 0
    %2651 = vmatpush1.bf16.msra.mxu0 %v2597
    %2652 = vmatprep.subr.bf16.mxu0 0
    %2653 = vmatpush1.bf16.msra.mxu0 %v2596
    %2654 = vmatprep.subr.bf16.mxu0 0
    %2655 = vmatpush1.bf16.msra.mxu0 %v2595
    %2656 = vmatprep.subr.bf16.mxu0 0
    %2657 = vmatpush1.bf16.msra.mxu0 %v2594
    %2658 = vmatprep.subr.bf16.mxu0 0
    %2659 = vmatpush1.bf16.msra.mxu0 %v2593
    %2660 = vmatprep.subr.bf16.mxu0 0
    %2661 = vmatpush1.bf16.msra.mxu0 %v2592
    %2662 = vmatprep.subr.bf16.mxu0 0
    %2663 = vmatpush1.bf16.msra.mxu0 %v2591
    %2664 = vmatprep.subr.bf16.mxu0 0
    %2665 = vmatpush2.bf16.msra.mxu0 0
    %2666 = vmatprep.subr.bf16.mxu0 0
    %2667 = vmatpush2.bf16.msra.mxu0 0
    %2668 = vmatprep.subr.bf16.mxu0 0
    %2669 = vmatpush2.bf16.msra.mxu0 0
    %2670 = vmatprep.subr.bf16.mxu0 0
    %2671 = vmatpush2.bf16.msra.mxu0 0
    %2672 = vmatprep.subr.bf16.mxu0 0
    %2673 = vmatpush2.bf16.msra.mxu0 0
    %2674 = vmatprep.subr.bf16.mxu0 0
    %2675 = vmatpush2.bf16.msra.mxu0 0
    %2676 = vmatprep.subr.bf16.mxu0 0
    %2677 = vmatpush2.bf16.msra.mxu0 0
    %2678 = vmatprep.subr.bf16.mxu0 0
    %2679 = vmatpush2.bf16.msra.mxu0 0
    %2680 = vmatprep.mubr.bf16.mxu0 0
    %2681 = vmatmul.mubr.bf16.gmra.mxu0 %v2647
    %v2682 = vpop.f32.mrf.mxu0
    %v2683 = vadd.f32 0.0, %v2682
    %v2684 = vpop.f32.mrf.mxu0
    %v2685 = vpop.f32.mrf.mxu0
    %v2686 = vpop.f32.mrf.mxu0
    %2687 = vdwg.mxu0
    %s2688 = scalar_lea.vmem [#allocation5], 1152
    %v2689 = vld [vmem:[%s2688] sm:$0xf]
    %v2690 = vld [vmem:[%s2688 + $0x4] sm:$0xf]
    %v2691 = vld [vmem:[%s2688 + $0x8] sm:$0xf]
    %v2692 = vld [vmem:[%s2688 + $0xc] sm:$0xf]
    %v2693 = vld [vmem:[%s2688 + $0x10] sm:$0xf]
    %v2694 = vld [vmem:[%s2688 + $0x14] sm:$0xf]
    %v2695 = vld [vmem:[%s2688 + $0x18] sm:$0xf]
    %v2696 = vld [vmem:[%s2688 + $0x1c] sm:$0xf]
    %v2697 = vld [vmem:[%s2688 + $0x20] sm:$0xf]
    %v2698 = vld [vmem:[%s2688 + $0x24] sm:$0xf]
    %v2699 = vld [vmem:[%s2688 + $0x28] sm:$0xf]
    %v2700 = vld [vmem:[%s2688 + $0x2c] sm:$0xf]
    %v2701 = vld [vmem:[%s2688 + $0x30] sm:$0xf]
    %v2702 = vld [vmem:[%s2688 + $0x34] sm:$0xf]
    %v2703 = vld [vmem:[%s2688 + $0x38] sm:$0xf]
    %v2704 = vld [vmem:[%s2688 + $0x3c] sm:$0xf]
    %v2705 = vpack.c.bf16 %v2642, %v2642
    %v2722 = vunpack.c.l.b16 %v2689
    %v2723 = vunpack.c.l.b16 %v2690
    %v2724 = vunpack.c.l.b16 %v2691
    %v2725 = vunpack.c.l.b16 %v2692
    %v2726 = vunpack.c.l.b16 %v2693
    %v2727 = vunpack.c.l.b16 %v2694
    %v2728 = vunpack.c.l.b16 %v2695
    %v2729 = vunpack.c.l.b16 %v2696
    %v2730 = vunpack.c.l.b16 %v2697
    %v2731 = vunpack.c.l.b16 %v2698
    %v2732 = vunpack.c.l.b16 %v2699
    %v2733 = vunpack.c.l.b16 %v2700
    %v2734 = vunpack.c.l.b16 %v2701
    %v2735 = vunpack.c.l.b16 %v2702
    %v2736 = vunpack.c.l.b16 %v2703
    %v2737 = vunpack.c.l.b16 %v2704
    %v2738 = vpack.c.b16 %v2723, %v2722
    %v2739 = vpack.c.b16 %v2725, %v2724
    %v2740 = vpack.c.b16 %v2727, %v2726
    %v2741 = vpack.c.b16 %v2729, %v2728
    %v2742 = vpack.c.b16 %v2731, %v2730
    %v2743 = vpack.c.b16 %v2733, %v2732
    %v2744 = vpack.c.b16 %v2735, %v2734
    %v2745 = vpack.c.b16 %v2737, %v2736
    %2754 = vmatprep.subr.bf16.mxu0 0
    %2755 = vmatpush1.bf16.msra.mxu0 %v2745
    %2756 = vmatprep.subr.bf16.mxu0 0
    %2757 = vmatpush1.bf16.msra.mxu0 %v2744
    %2758 = vmatprep.subr.bf16.mxu0 0
    %2759 = vmatpush1.bf16.msra.mxu0 %v2743
    %2760 = vmatprep.subr.bf16.mxu0 0
    %2761 = vmatpush1.bf16.msra.mxu0 %v2742
    %2762 = vmatprep.subr.bf16.mxu0 0
    %2763 = vmatpush1.bf16.msra.mxu0 %v2741
    %2764 = vmatprep.subr.bf16.mxu0 0
    %2765 = vmatpush1.bf16.msra.mxu0 %v2740
    %2766 = vmatprep.subr.bf16.mxu0 0
    %2767 = vmatpush1.bf16.msra.mxu0 %v2739
    %2768 = vmatprep.subr.bf16.mxu0 0
    %2769 = vmatpush1.bf16.msra.mxu0 %v2738
    %2770 = vmatprep.subr.bf16.mxu0 0
    %2771 = vmatpush2.bf16.msra.mxu0 0
    %2772 = vmatprep.subr.bf16.mxu0 0
    %2773 = vmatpush2.bf16.msra.mxu0 0
    %2774 = vmatprep.subr.bf16.mxu0 0
    %2775 = vmatpush2.bf16.msra.mxu0 0
    %2776 = vmatprep.subr.bf16.mxu0 0
    %2777 = vmatpush2.bf16.msra.mxu0 0
    %2778 = vmatprep.subr.bf16.mxu0 0
    %2779 = vmatpush2.bf16.msra.mxu0 0
    %2780 = vmatprep.subr.bf16.mxu0 0
    %2781 = vmatpush2.bf16.msra.mxu0 0
    %2782 = vmatprep.subr.bf16.mxu0 0
    %2783 = vmatpush2.bf16.msra.mxu0 0
    %2784 = vmatprep.subr.bf16.mxu0 0
    %2785 = vmatpush2.bf16.msra.mxu0 0
    %2786 = vmatprep.mubr.bf16.mxu0 0
    %2787 = vmatmul.mubr.bf16.gmra.mxu0 %v2705
    %v2788 = vpop.f32.mrf.mxu0
    %v2789 = vadd.f32 0.0, %v2788
    %v2790 = vpop.f32.mrf.mxu0
    %v2791 = vpop.f32.mrf.mxu0
    %v2792 = vpop.f32.mrf.mxu0
    %2793 = vdwg.mxu0
    %v2794 = vpack.c.bf16 %v2683, %v2683
    %2795 = vmatprep.subr.bf16.mxu0 0
    %2796 = vmatpush1.bf16.msra.mxu0 %v2745
    %2797 = vmatprep.subr.bf16.mxu0 0
    %2798 = vmatpush1.bf16.msra.mxu0 %v2744
    %2799 = vmatprep.subr.bf16.mxu0 0
    %2800 = vmatpush1.bf16.msra.mxu0 %v2743
    %2801 = vmatprep.subr.bf16.mxu0 0
    %2802 = vmatpush1.bf16.msra.mxu0 %v2742
    %2803 = vmatprep.subr.bf16.mxu0 0
    %2804 = vmatpush1.bf16.msra.mxu0 %v2741
    %2805 = vmatprep.subr.bf16.mxu0 0
    %2806 = vmatpush1.bf16.msra.mxu0 %v2740
    %2807 = vmatprep.subr.bf16.mxu0 0
    %2808 = vmatpush1.bf16.msra.mxu0 %v2739
    %2809 = vmatprep.subr.bf16.mxu0 0
    %2810 = vmatpush1.bf16.msra.mxu0 %v2738
    %2811 = vmatprep.subr.bf16.mxu0 0
    %2812 = vmatpush2.bf16.msra.mxu0 0
    %2813 = vmatprep.subr.bf16.mxu0 0
    %2814 = vmatpush2.bf16.msra.mxu0 0
    %2815 = vmatprep.subr.bf16.mxu0 0
    %2816 = vmatpush2.bf16.msra.mxu0 0
    %2817 = vmatprep.subr.bf16.mxu0 0
    %2818 = vmatpush2.bf16.msra.mxu0 0
    %2819 = vmatprep.subr.bf16.mxu0 0
    %2820 = vmatpush2.bf16.msra.mxu0 0
    %2821 = vmatprep.subr.bf16.mxu0 0
    %2822 = vmatpush2.bf16.msra.mxu0 0
    %2823 = vmatprep.subr.bf16.mxu0 0
    %2824 = vmatpush2.bf16.msra.mxu0 0
    %2825 = vmatprep.subr.bf16.mxu0 0
    %2826 = vmatpush2.bf16.msra.mxu0 0
    %2827 = vmatprep.mubr.bf16.mxu0 0
    %2828 = vmatmul.mubr.bf16.gmra.mxu0 %v2794
    %v2829 = vpop.f32.mrf.mxu0
    %v2830 = vadd.f32 0.0, %v2829
    %v2831 = vpop.f32.mrf.mxu0
    %v2832 = vpop.f32.mrf.mxu0
    %v2833 = vpop.f32.mrf.mxu0
    %2834 = vdwg.mxu0
    %s2835 = scalar_lea.vmem [#allocation5], 1216
    %v2836 = vld [vmem:[%s2835] sm:$0xf]
    %v2837 = vld [vmem:[%s2835 + $0x4] sm:$0xf]
    %v2838 = vld [vmem:[%s2835 + $0x8] sm:$0xf]
    %v2839 = vld [vmem:[%s2835 + $0xc] sm:$0xf]
    %v2840 = vld [vmem:[%s2835 + $0x10] sm:$0xf]
    %v2841 = vld [vmem:[%s2835 + $0x14] sm:$0xf]
    %v2842 = vld [vmem:[%s2835 + $0x18] sm:$0xf]
    %v2843 = vld [vmem:[%s2835 + $0x1c] sm:$0xf]
    %v2844 = vld [vmem:[%s2835 + $0x20] sm:$0xf]
    %v2845 = vld [vmem:[%s2835 + $0x24] sm:$0xf]
    %v2846 = vld [vmem:[%s2835 + $0x28] sm:$0xf]
    %v2847 = vld [vmem:[%s2835 + $0x2c] sm:$0xf]
    %v2848 = vld [vmem:[%s2835 + $0x30] sm:$0xf]
    %v2849 = vld [vmem:[%s2835 + $0x34] sm:$0xf]
    %v2850 = vld [vmem:[%s2835 + $0x38] sm:$0xf]
    %v2851 = vld [vmem:[%s2835 + $0x3c] sm:$0xf]
    %v2852 = vpack.c.bf16 %v2789, %v2789
    %v2869 = vunpack.c.l.b16 %v2836
    %v2870 = vunpack.c.l.b16 %v2837
    %v2871 = vunpack.c.l.b16 %v2838
    %v2872 = vunpack.c.l.b16 %v2839
    %v2873 = vunpack.c.l.b16 %v2840
    %v2874 = vunpack.c.l.b16 %v2841
    %v2875 = vunpack.c.l.b16 %v2842
    %v2876 = vunpack.c.l.b16 %v2843
    %v2877 = vunpack.c.l.b16 %v2844
    %v2878 = vunpack.c.l.b16 %v2845
    %v2879 = vunpack.c.l.b16 %v2846
    %v2880 = vunpack.c.l.b16 %v2847
    %v2881 = vunpack.c.l.b16 %v2848
    %v2882 = vunpack.c.l.b16 %v2849
    %v2883 = vunpack.c.l.b16 %v2850
    %v2884 = vunpack.c.l.b16 %v2851
    %v2885 = vpack.c.b16 %v2870, %v2869
    %v2886 = vpack.c.b16 %v2872, %v2871
    %v2887 = vpack.c.b16 %v2874, %v2873
    %v2888 = vpack.c.b16 %v2876, %v2875
    %v2889 = vpack.c.b16 %v2878, %v2877
    %v2890 = vpack.c.b16 %v2880, %v2879
    %v2891 = vpack.c.b16 %v2882, %v2881
    %v2892 = vpack.c.b16 %v2884, %v2883
    %2901 = vmatprep.subr.bf16.mxu0 0
    %2902 = vmatpush1.bf16.msra.mxu0 %v2892
    %2903 = vmatprep.subr.bf16.mxu0 0
    %2904 = vmatpush1.bf16.msra.mxu0 %v2891
    %2905 = vmatprep.subr.bf16.mxu0 0
    %2906 = vmatpush1.bf16.msra.mxu0 %v2890
    %2907 = vmatprep.subr.bf16.mxu0 0
    %2908 = vmatpush1.bf16.msra.mxu0 %v2889
    %2909 = vmatprep.subr.bf16.mxu0 0
    %2910 = vmatpush1.bf16.msra.mxu0 %v2888
    %2911 = vmatprep.subr.bf16.mxu0 0
    %2912 = vmatpush1.bf16.msra.mxu0 %v2887
    %2913 = vmatprep.subr.bf16.mxu0 0
    %2914 = vmatpush1.bf16.msra.mxu0 %v2886
    %2915 = vmatprep.subr.bf16.mxu0 0
    %2916 = vmatpush1.bf16.msra.mxu0 %v2885
    %2917 = vmatprep.subr.bf16.mxu0 0
    %2918 = vmatpush2.bf16.msra.mxu0 0
    %2919 = vmatprep.subr.bf16.mxu0 0
    %2920 = vmatpush2.bf16.msra.mxu0 0
    %2921 = vmatprep.subr.bf16.mxu0 0
    %2922 = vmatpush2.bf16.msra.mxu0 0
    %2923 = vmatprep.subr.bf16.mxu0 0
    %2924 = vmatpush2.bf16.msra.mxu0 0
    %2925 = vmatprep.subr.bf16.mxu0 0
    %2926 = vmatpush2.bf16.msra.mxu0 0
    %2927 = vmatprep.subr.bf16.mxu0 0
    %2928 = vmatpush2.bf16.msra.mxu0 0
    %2929 = vmatprep.subr.bf16.mxu0 0
    %2930 = vmatpush2.bf16.msra.mxu0 0
    %2931 = vmatprep.subr.bf16.mxu0 0
    %2932 = vmatpush2.bf16.msra.mxu0 0
    %2933 = vmatprep.mubr.bf16.mxu0 0
    %2934 = vmatmul.mubr.bf16.gmra.mxu0 %v2852
    %v2935 = vpop.f32.mrf.mxu0
    %v2936 = vadd.f32 0.0, %v2935
    %v2937 = vpop.f32.mrf.mxu0
    %v2938 = vpop.f32.mrf.mxu0
    %v2939 = vpop.f32.mrf.mxu0
    %2940 = vdwg.mxu0
    %v2941 = vpack.c.bf16 %v2830, %v2830
    %2942 = vmatprep.subr.bf16.mxu0 0
    %2943 = vmatpush1.bf16.msra.mxu0 %v2892
    %2944 = vmatprep.subr.bf16.mxu0 0
    %2945 = vmatpush1.bf16.msra.mxu0 %v2891
    %2946 = vmatprep.subr.bf16.mxu0 0
    %2947 = vmatpush1.bf16.msra.mxu0 %v2890
    %2948 = vmatprep.subr.bf16.mxu0 0
    %2949 = vmatpush1.bf16.msra.mxu0 %v2889
    %2950 = vmatprep.subr.bf16.mxu0 0
    %2951 = vmatpush1.bf16.msra.mxu0 %v2888
    %2952 = vmatprep.subr.bf16.mxu0 0
    %2953 = vmatpush1.bf16.msra.mxu0 %v2887
    %2954 = vmatprep.subr.bf16.mxu0 0
    %2955 = vmatpush1.bf16.msra.mxu0 %v2886
    %2956 = vmatprep.subr.bf16.mxu0 0
    %2957 = vmatpush1.bf16.msra.mxu0 %v2885
    %2958 = vmatprep.subr.bf16.mxu0 0
    %2959 = vmatpush2.bf16.msra.mxu0 0
    %2960 = vmatprep.subr.bf16.mxu0 0
    %2961 = vmatpush2.bf16.msra.mxu0 0
    %2962 = vmatprep.subr.bf16.mxu0 0
    %2963 = vmatpush2.bf16.msra.mxu0 0
    %2964 = vmatprep.subr.bf16.mxu0 0
    %2965 = vmatpush2.bf16.msra.mxu0 0
    %2966 = vmatprep.subr.bf16.mxu0 0
    %2967 = vmatpush2.bf16.msra.mxu0 0
    %2968 = vmatprep.subr.bf16.mxu0 0
    %2969 = vmatpush2.bf16.msra.mxu0 0
    %2970 = vmatprep.subr.bf16.mxu0 0
    %2971 = vmatpush2.bf16.msra.mxu0 0
    %2972 = vmatprep.subr.bf16.mxu0 0
    %2973 = vmatpush2.bf16.msra.mxu0 0
    %2974 = vmatprep.mubr.bf16.mxu0 0
    %2975 = vmatmul.mubr.bf16.gmra.mxu0 %v2941
    %v2976 = vpop.f32.mrf.mxu0
    %v2977 = vadd.f32 0.0, %v2976
    %v2978 = vpop.f32.mrf.mxu0
    %v2979 = vpop.f32.mrf.mxu0
    %v2980 = vpop.f32.mrf.mxu0
    %2981 = vdwg.mxu0
    %s2982 = scalar_lea.vmem [#allocation5], 1280
    %v2983 = vld [vmem:[%s2982] sm:$0xf]
    %v2984 = vld [vmem:[%s2982 + $0x4] sm:$0xf]
    %v2985 = vld [vmem:[%s2982 + $0x8] sm:$0xf]
    %v2986 = vld [vmem:[%s2982 + $0xc] sm:$0xf]
    %v2987 = vld [vmem:[%s2982 + $0x10] sm:$0xf]
    %v2988 = vld [vmem:[%s2982 + $0x14] sm:$0xf]
    %v2989 = vld [vmem:[%s2982 + $0x18] sm:$0xf]
    %v2990 = vld [vmem:[%s2982 + $0x1c] sm:$0xf]
    %v2991 = vld [vmem:[%s2982 + $0x20] sm:$0xf]
    %v2992 = vld [vmem:[%s2982 + $0x24] sm:$0xf]
    %v2993 = vld [vmem:[%s2982 + $0x28] sm:$0xf]
    %v2994 = vld [vmem:[%s2982 + $0x2c] sm:$0xf]
    %v2995 = vld [vmem:[%s2982 + $0x30] sm:$0xf]
    %v2996 = vld [vmem:[%s2982 + $0x34] sm:$0xf]
    %v2997 = vld [vmem:[%s2982 + $0x38] sm:$0xf]
    %v2998 = vld [vmem:[%s2982 + $0x3c] sm:$0xf]
    %v2999 = vpack.c.bf16 %v2936, %v2936
    %v3016 = vunpack.c.l.b16 %v2983
    %v3017 = vunpack.c.l.b16 %v2984
    %v3018 = vunpack.c.l.b16 %v2985
    %v3019 = vunpack.c.l.b16 %v2986
    %v3020 = vunpack.c.l.b16 %v2987
    %v3021 = vunpack.c.l.b16 %v2988
    %v3022 = vunpack.c.l.b16 %v2989
    %v3023 = vunpack.c.l.b16 %v2990
    %v3024 = vunpack.c.l.b16 %v2991
    %v3025 = vunpack.c.l.b16 %v2992
    %v3026 = vunpack.c.l.b16 %v2993
    %v3027 = vunpack.c.l.b16 %v2994
    %v3028 = vunpack.c.l.b16 %v2995
    %v3029 = vunpack.c.l.b16 %v2996
    %v3030 = vunpack.c.l.b16 %v2997
    %v3031 = vunpack.c.l.b16 %v2998
    %v3032 = vpack.c.b16 %v3017, %v3016
    %v3033 = vpack.c.b16 %v3019, %v3018
    %v3034 = vpack.c.b16 %v3021, %v3020
    %v3035 = vpack.c.b16 %v3023, %v3022
    %v3036 = vpack.c.b16 %v3025, %v3024
    %v3037 = vpack.c.b16 %v3027, %v3026
    %v3038 = vpack.c.b16 %v3029, %v3028
    %v3039 = vpack.c.b16 %v3031, %v3030
    %3048 = vmatprep.subr.bf16.mxu0 0
    %3049 = vmatpush1.bf16.msra.mxu0 %v3039
    %3050 = vmatprep.subr.bf16.mxu0 0
    %3051 = vmatpush1.bf16.msra.mxu0 %v3038
    %3052 = vmatprep.subr.bf16.mxu0 0
    %3053 = vmatpush1.bf16.msra.mxu0 %v3037
    %3054 = vmatprep.subr.bf16.mxu0 0
    %3055 = vmatpush1.bf16.msra.mxu0 %v3036
    %3056 = vmatprep.subr.bf16.mxu0 0
    %3057 = vmatpush1.bf16.msra.mxu0 %v3035
    %3058 = vmatprep.subr.bf16.mxu0 0
    %3059 = vmatpush1.bf16.msra.mxu0 %v3034
    %3060 = vmatprep.subr.bf16.mxu0 0
    %3061 = vmatpush1.bf16.msra.mxu0 %v3033
    %3062 = vmatprep.subr.bf16.mxu0 0
    %3063 = vmatpush1.bf16.msra.mxu0 %v3032
    %3064 = vmatprep.subr.bf16.mxu0 0
    %3065 = vmatpush2.bf16.msra.mxu0 0
    %3066 = vmatprep.subr.bf16.mxu0 0
    %3067 = vmatpush2.bf16.msra.mxu0 0
    %3068 = vmatprep.subr.bf16.mxu0 0
    %3069 = vmatpush2.bf16.msra.mxu0 0
    %3070 = vmatprep.subr.bf16.mxu0 0
    %3071 = vmatpush2.bf16.msra.mxu0 0
    %3072 = vmatprep.subr.bf16.mxu0 0
    %3073 = vmatpush2.bf16.msra.mxu0 0
    %3074 = vmatprep.subr.bf16.mxu0 0
    %3075 = vmatpush2.bf16.msra.mxu0 0
    %3076 = vmatprep.subr.bf16.mxu0 0
    %3077 = vmatpush2.bf16.msra.mxu0 0
    %3078 = vmatprep.subr.bf16.mxu0 0
    %3079 = vmatpush2.bf16.msra.mxu0 0
    %3080 = vmatprep.mubr.bf16.mxu0 0
    %3081 = vmatmul.mubr.bf16.gmra.mxu0 %v2999
    %v3082 = vpop.f32.mrf.mxu0
    %v3083 = vadd.f32 0.0, %v3082
    %v3084 = vpop.f32.mrf.mxu0
    %v3085 = vpop.f32.mrf.mxu0
    %v3086 = vpop.f32.mrf.mxu0
    %3087 = vdwg.mxu0
    %v3088 = vpack.c.bf16 %v2977, %v2977
    %3089 = vmatprep.subr.bf16.mxu0 0
    %3090 = vmatpush1.bf16.msra.mxu0 %v3039
    %3091 = vmatprep.subr.bf16.mxu0 0
    %3092 = vmatpush1.bf16.msra.mxu0 %v3038
    %3093 = vmatprep.subr.bf16.mxu0 0
    %3094 = vmatpush1.bf16.msra.mxu0 %v3037
    %3095 = vmatprep.subr.bf16.mxu0 0
    %3096 = vmatpush1.bf16.msra.mxu0 %v3036
    %3097 = vmatprep.subr.bf16.mxu0 0
    %3098 = vmatpush1.bf16.msra.mxu0 %v3035
    %3099 = vmatprep.subr.bf16.mxu0 0
    %3100 = vmatpush1.bf16.msra.mxu0 %v3034
    %3101 = vmatprep.subr.bf16.mxu0 0
    %3102 = vmatpush1.bf16.msra.mxu0 %v3033
    %3103 = vmatprep.subr.bf16.mxu0 0
    %3104 = vmatpush1.bf16.msra.mxu0 %v3032
    %3105 = vmatprep.subr.bf16.mxu0 0
    %3106 = vmatpush2.bf16.msra.mxu0 0
    %3107 = vmatprep.subr.bf16.mxu0 0
    %3108 = vmatpush2.bf16.msra.mxu0 0
    %3109 = vmatprep.subr.bf16.mxu0 0
    %3110 = vmatpush2.bf16.msra.mxu0 0
    %3111 = vmatprep.subr.bf16.mxu0 0
    %3112 = vmatpush2.bf16.msra.mxu0 0
    %3113 = vmatprep.subr.bf16.mxu0 0
    %3114 = vmatpush2.bf16.msra.mxu0 0
    %3115 = vmatprep.subr.bf16.mxu0 0
    %3116 = vmatpush2.bf16.msra.mxu0 0
    %3117 = vmatprep.subr.bf16.mxu0 0
    %3118 = vmatpush2.bf16.msra.mxu0 0
    %3119 = vmatprep.subr.bf16.mxu0 0
    %3120 = vmatpush2.bf16.msra.mxu0 0
    %3121 = vmatprep.mubr.bf16.mxu0 0
    %3122 = vmatmul.mubr.bf16.gmra.mxu0 %v3088
    %v3123 = vpop.f32.mrf.mxu0
    %v3124 = vadd.f32 0.0, %v3123
    %v3125 = vpop.f32.mrf.mxu0
    %v3126 = vpop.f32.mrf.mxu0
    %v3127 = vpop.f32.mrf.mxu0
    %3128 = vdwg.mxu0
    %s3129 = scalar_lea.vmem [#allocation5], 1344
    %v3130 = vld [vmem:[%s3129] sm:$0xf]
    %v3131 = vld [vmem:[%s3129 + $0x4] sm:$0xf]
    %v3132 = vld [vmem:[%s3129 + $0x8] sm:$0xf]
    %v3133 = vld [vmem:[%s3129 + $0xc] sm:$0xf]
    %v3134 = vld [vmem:[%s3129 + $0x10] sm:$0xf]
    %v3135 = vld [vmem:[%s3129 + $0x14] sm:$0xf]
    %v3136 = vld [vmem:[%s3129 + $0x18] sm:$0xf]
    %v3137 = vld [vmem:[%s3129 + $0x1c] sm:$0xf]
    %v3138 = vld [vmem:[%s3129 + $0x20] sm:$0xf]
    %v3139 = vld [vmem:[%s3129 + $0x24] sm:$0xf]
    %v3140 = vld [vmem:[%s3129 + $0x28] sm:$0xf]
    %v3141 = vld [vmem:[%s3129 + $0x2c] sm:$0xf]
    %v3142 = vld [vmem:[%s3129 + $0x30] sm:$0xf]
    %v3143 = vld [vmem:[%s3129 + $0x34] sm:$0xf]
    %v3144 = vld [vmem:[%s3129 + $0x38] sm:$0xf]
    %v3145 = vld [vmem:[%s3129 + $0x3c] sm:$0xf]
    %v3146 = vpack.c.bf16 %v3083, %v3083
    %v3163 = vunpack.c.l.b16 %v3130
    %v3164 = vunpack.c.l.b16 %v3131
    %v3165 = vunpack.c.l.b16 %v3132
    %v3166 = vunpack.c.l.b16 %v3133
    %v3167 = vunpack.c.l.b16 %v3134
    %v3168 = vunpack.c.l.b16 %v3135
    %v3169 = vunpack.c.l.b16 %v3136
    %v3170 = vunpack.c.l.b16 %v3137
    %v3171 = vunpack.c.l.b16 %v3138
    %v3172 = vunpack.c.l.b16 %v3139
    %v3173 = vunpack.c.l.b16 %v3140
    %v3174 = vunpack.c.l.b16 %v3141
    %v3175 = vunpack.c.l.b16 %v3142
    %v3176 = vunpack.c.l.b16 %v3143
    %v3177 = vunpack.c.l.b16 %v3144
    %v3178 = vunpack.c.l.b16 %v3145
    %v3179 = vpack.c.b16 %v3164, %v3163
    %v3180 = vpack.c.b16 %v3166, %v3165
    %v3181 = vpack.c.b16 %v3168, %v3167
    %v3182 = vpack.c.b16 %v3170, %v3169
    %v3183 = vpack.c.b16 %v3172, %v3171
    %v3184 = vpack.c.b16 %v3174, %v3173
    %v3185 = vpack.c.b16 %v3176, %v3175
    %v3186 = vpack.c.b16 %v3178, %v3177
    %3195 = vmatprep.subr.bf16.mxu0 0
    %3196 = vmatpush1.bf16.msra.mxu0 %v3186
    %3197 = vmatprep.subr.bf16.mxu0 0
    %3198 = vmatpush1.bf16.msra.mxu0 %v3185
    %3199 = vmatprep.subr.bf16.mxu0 0
    %3200 = vmatpush1.bf16.msra.mxu0 %v3184
    %3201 = vmatprep.subr.bf16.mxu0 0
    %3202 = vmatpush1.bf16.msra.mxu0 %v3183
    %3203 = vmatprep.subr.bf16.mxu0 0
    %3204 = vmatpush1.bf16.msra.mxu0 %v3182
    %3205 = vmatprep.subr.bf16.mxu0 0
    %3206 = vmatpush1.bf16.msra.mxu0 %v3181
    %3207 = vmatprep.subr.bf16.mxu0 0
    %3208 = vmatpush1.bf16.msra.mxu0 %v3180
    %3209 = vmatprep.subr.bf16.mxu0 0
    %3210 = vmatpush1.bf16.msra.mxu0 %v3179
    %3211 = vmatprep.subr.bf16.mxu0 0
    %3212 = vmatpush2.bf16.msra.mxu0 0
    %3213 = vmatprep.subr.bf16.mxu0 0
    %3214 = vmatpush2.bf16.msra.mxu0 0
    %3215 = vmatprep.subr.bf16.mxu0 0
    %3216 = vmatpush2.bf16.msra.mxu0 0
    %3217 = vmatprep.subr.bf16.mxu0 0
    %3218 = vmatpush2.bf16.msra.mxu0 0
    %3219 = vmatprep.subr.bf16.mxu0 0
    %3220 = vmatpush2.bf16.msra.mxu0 0
    %3221 = vmatprep.subr.bf16.mxu0 0
    %3222 = vmatpush2.bf16.msra.mxu0 0
    %3223 = vmatprep.subr.bf16.mxu0 0
    %3224 = vmatpush2.bf16.msra.mxu0 0
    %3225 = vmatprep.subr.bf16.mxu0 0
    %3226 = vmatpush2.bf16.msra.mxu0 0
    %3227 = vmatprep.mubr.bf16.mxu0 0
    %3228 = vmatmul.mubr.bf16.gmra.mxu0 %v3146
    %v3229 = vpop.f32.mrf.mxu0
    %v3230 = vadd.f32 0.0, %v3229
    %v3231 = vpop.f32.mrf.mxu0
    %v3232 = vpop.f32.mrf.mxu0
    %v3233 = vpop.f32.mrf.mxu0
    %3234 = vdwg.mxu0
    %v3235 = vpack.c.bf16 %v3124, %v3124
    %3236 = vmatprep.subr.bf16.mxu0 0
    %3237 = vmatpush1.bf16.msra.mxu0 %v3186
    %3238 = vmatprep.subr.bf16.mxu0 0
    %3239 = vmatpush1.bf16.msra.mxu0 %v3185
    %3240 = vmatprep.subr.bf16.mxu0 0
    %3241 = vmatpush1.bf16.msra.mxu0 %v3184
    %3242 = vmatprep.subr.bf16.mxu0 0
    %3243 = vmatpush1.bf16.msra.mxu0 %v3183
    %3244 = vmatprep.subr.bf16.mxu0 0
    %3245 = vmatpush1.bf16.msra.mxu0 %v3182
    %3246 = vmatprep.subr.bf16.mxu0 0
    %3247 = vmatpush1.bf16.msra.mxu0 %v3181
    %3248 = vmatprep.subr.bf16.mxu0 0
    %3249 = vmatpush1.bf16.msra.mxu0 %v3180
    %3250 = vmatprep.subr.bf16.mxu0 0
    %3251 = vmatpush1.bf16.msra.mxu0 %v3179
    %3252 = vmatprep.subr.bf16.mxu0 0
    %3253 = vmatpush2.bf16.msra.mxu0 0
    %3254 = vmatprep.subr.bf16.mxu0 0
    %3255 = vmatpush2.bf16.msra.mxu0 0
    %3256 = vmatprep.subr.bf16.mxu0 0
    %3257 = vmatpush2.bf16.msra.mxu0 0
    %3258 = vmatprep.subr.bf16.mxu0 0
    %3259 = vmatpush2.bf16.msra.mxu0 0
    %3260 = vmatprep.subr.bf16.mxu0 0
    %3261 = vmatpush2.bf16.msra.mxu0 0
    %3262 = vmatprep.subr.bf16.mxu0 0
    %3263 = vmatpush2.bf16.msra.mxu0 0
    %3264 = vmatprep.subr.bf16.mxu0 0
    %3265 = vmatpush2.bf16.msra.mxu0 0
    %3266 = vmatprep.subr.bf16.mxu0 0
    %3267 = vmatpush2.bf16.msra.mxu0 0
    %3268 = vmatprep.mubr.bf16.mxu0 0
    %3269 = vmatmul.mubr.bf16.gmra.mxu0 %v3235
    %v3270 = vpop.f32.mrf.mxu0
    %v3271 = vadd.f32 0.0, %v3270
    %v3272 = vpop.f32.mrf.mxu0
    %v3273 = vpop.f32.mrf.mxu0
    %v3274 = vpop.f32.mrf.mxu0
    %3275 = vdwg.mxu0
    %s3276 = scalar_lea.vmem [#allocation5], 1408
    %v3277 = vld [vmem:[%s3276] sm:$0xf]
    %v3278 = vld [vmem:[%s3276 + $0x4] sm:$0xf]
    %v3279 = vld [vmem:[%s3276 + $0x8] sm:$0xf]
    %v3280 = vld [vmem:[%s3276 + $0xc] sm:$0xf]
    %v3281 = vld [vmem:[%s3276 + $0x10] sm:$0xf]
    %v3282 = vld [vmem:[%s3276 + $0x14] sm:$0xf]
    %v3283 = vld [vmem:[%s3276 + $0x18] sm:$0xf]
    %v3284 = vld [vmem:[%s3276 + $0x1c] sm:$0xf]
    %v3285 = vld [vmem:[%s3276 + $0x20] sm:$0xf]
    %v3286 = vld [vmem:[%s3276 + $0x24] sm:$0xf]
    %v3287 = vld [vmem:[%s3276 + $0x28] sm:$0xf]
    %v3288 = vld [vmem:[%s3276 + $0x2c] sm:$0xf]
    %v3289 = vld [vmem:[%s3276 + $0x30] sm:$0xf]
    %v3290 = vld [vmem:[%s3276 + $0x34] sm:$0xf]
    %v3291 = vld [vmem:[%s3276 + $0x38] sm:$0xf]
    %v3292 = vld [vmem:[%s3276 + $0x3c] sm:$0xf]
    %v3293 = vpack.c.bf16 %v3230, %v3230
    %v3310 = vunpack.c.l.b16 %v3277
    %v3311 = vunpack.c.l.b16 %v3278
    %v3312 = vunpack.c.l.b16 %v3279
    %v3313 = vunpack.c.l.b16 %v3280
    %v3314 = vunpack.c.l.b16 %v3281
    %v3315 = vunpack.c.l.b16 %v3282
    %v3316 = vunpack.c.l.b16 %v3283
    %v3317 = vunpack.c.l.b16 %v3284
    %v3318 = vunpack.c.l.b16 %v3285
    %v3319 = vunpack.c.l.b16 %v3286
    %v3320 = vunpack.c.l.b16 %v3287
    %v3321 = vunpack.c.l.b16 %v3288
    %v3322 = vunpack.c.l.b16 %v3289
    %v3323 = vunpack.c.l.b16 %v3290
    %v3324 = vunpack.c.l.b16 %v3291
    %v3325 = vunpack.c.l.b16 %v3292
    %v3326 = vpack.c.b16 %v3311, %v3310
    %v3327 = vpack.c.b16 %v3313, %v3312
    %v3328 = vpack.c.b16 %v3315, %v3314
    %v3329 = vpack.c.b16 %v3317, %v3316
    %v3330 = vpack.c.b16 %v3319, %v3318
    %v3331 = vpack.c.b16 %v3321, %v3320
    %v3332 = vpack.c.b16 %v3323, %v3322
    %v3333 = vpack.c.b16 %v3325, %v3324
    %3342 = vmatprep.subr.bf16.mxu0 0
    %3343 = vmatpush1.bf16.msra.mxu0 %v3333
    %3344 = vmatprep.subr.bf16.mxu0 0
    %3345 = vmatpush1.bf16.msra.mxu0 %v3332
    %3346 = vmatprep.subr.bf16.mxu0 0
    %3347 = vmatpush1.bf16.msra.mxu0 %v3331
    %3348 = vmatprep.subr.bf16.mxu0 0
    %3349 = vmatpush1.bf16.msra.mxu0 %v3330
    %3350 = vmatprep.subr.bf16.mxu0 0
    %3351 = vmatpush1.bf16.msra.mxu0 %v3329
    %3352 = vmatprep.subr.bf16.mxu0 0
    %3353 = vmatpush1.bf16.msra.mxu0 %v3328
    %3354 = vmatprep.subr.bf16.mxu0 0
    %3355 = vmatpush1.bf16.msra.mxu0 %v3327
    %3356 = vmatprep.subr.bf16.mxu0 0
    %3357 = vmatpush1.bf16.msra.mxu0 %v3326
    %3358 = vmatprep.subr.bf16.mxu0 0
    %3359 = vmatpush2.bf16.msra.mxu0 0
    %3360 = vmatprep.subr.bf16.mxu0 0
    %3361 = vmatpush2.bf16.msra.mxu0 0
    %3362 = vmatprep.subr.bf16.mxu0 0
    %3363 = vmatpush2.bf16.msra.mxu0 0
    %3364 = vmatprep.subr.bf16.mxu0 0
    %3365 = vmatpush2.bf16.msra.mxu0 0
    %3366 = vmatprep.subr.bf16.mxu0 0
    %3367 = vmatpush2.bf16.msra.mxu0 0
    %3368 = vmatprep.subr.bf16.mxu0 0
    %3369 = vmatpush2.bf16.msra.mxu0 0
    %3370 = vmatprep.subr.bf16.mxu0 0
    %3371 = vmatpush2.bf16.msra.mxu0 0
    %3372 = vmatprep.subr.bf16.mxu0 0
    %3373 = vmatpush2.bf16.msra.mxu0 0
    %3374 = vmatprep.mubr.bf16.mxu0 0
    %3375 = vmatmul.mubr.bf16.gmra.mxu0 %v3293
    %v3376 = vpop.f32.mrf.mxu0
    %v3377 = vadd.f32 0.0, %v3376
    %v3378 = vpop.f32.mrf.mxu0
    %v3379 = vpop.f32.mrf.mxu0
    %v3380 = vpop.f32.mrf.mxu0
    %3381 = vdwg.mxu0
    %v3382 = vpack.c.bf16 %v3271, %v3271
    %3383 = vmatprep.subr.bf16.mxu0 0
    %3384 = vmatpush1.bf16.msra.mxu0 %v3333
    %3385 = vmatprep.subr.bf16.mxu0 0
    %3386 = vmatpush1.bf16.msra.mxu0 %v3332
    %3387 = vmatprep.subr.bf16.mxu0 0
    %3388 = vmatpush1.bf16.msra.mxu0 %v3331
    %3389 = vmatprep.subr.bf16.mxu0 0
    %3390 = vmatpush1.bf16.msra.mxu0 %v3330
    %3391 = vmatprep.subr.bf16.mxu0 0
    %3392 = vmatpush1.bf16.msra.mxu0 %v3329
    %3393 = vmatprep.subr.bf16.mxu0 0
    %3394 = vmatpush1.bf16.msra.mxu0 %v3328
    %3395 = vmatprep.subr.bf16.mxu0 0
    %3396 = vmatpush1.bf16.msra.mxu0 %v3327
    %3397 = vmatprep.subr.bf16.mxu0 0
    %3398 = vmatpush1.bf16.msra.mxu0 %v3326
    %3399 = vmatprep.subr.bf16.mxu0 0
    %3400 = vmatpush2.bf16.msra.mxu0 0
    %3401 = vmatprep.subr.bf16.mxu0 0
    %3402 = vmatpush2.bf16.msra.mxu0 0
    %3403 = vmatprep.subr.bf16.mxu0 0
    %3404 = vmatpush2.bf16.msra.mxu0 0
    %3405 = vmatprep.subr.bf16.mxu0 0
    %3406 = vmatpush2.bf16.msra.mxu0 0
    %3407 = vmatprep.subr.bf16.mxu0 0
    %3408 = vmatpush2.bf16.msra.mxu0 0
    %3409 = vmatprep.subr.bf16.mxu0 0
    %3410 = vmatpush2.bf16.msra.mxu0 0
    %3411 = vmatprep.subr.bf16.mxu0 0
    %3412 = vmatpush2.bf16.msra.mxu0 0
    %3413 = vmatprep.subr.bf16.mxu0 0
    %3414 = vmatpush2.bf16.msra.mxu0 0
    %3415 = vmatprep.mubr.bf16.mxu0 0
    %3416 = vmatmul.mubr.bf16.gmra.mxu0 %v3382
    %v3417 = vpop.f32.mrf.mxu0
    %v3418 = vadd.f32 0.0, %v3417
    %v3419 = vpop.f32.mrf.mxu0
    %v3420 = vpop.f32.mrf.mxu0
    %v3421 = vpop.f32.mrf.mxu0
    %3422 = vdwg.mxu0
    %s3423 = scalar_lea.vmem [#allocation5], 1472
    %v3424 = vld [vmem:[%s3423] sm:$0xf]
    %v3425 = vld [vmem:[%s3423 + $0x4] sm:$0xf]
    %v3426 = vld [vmem:[%s3423 + $0x8] sm:$0xf]
    %v3427 = vld [vmem:[%s3423 + $0xc] sm:$0xf]
    %v3428 = vld [vmem:[%s3423 + $0x10] sm:$0xf]
    %v3429 = vld [vmem:[%s3423 + $0x14] sm:$0xf]
    %v3430 = vld [vmem:[%s3423 + $0x18] sm:$0xf]
    %v3431 = vld [vmem:[%s3423 + $0x1c] sm:$0xf]
    %v3432 = vld [vmem:[%s3423 + $0x20] sm:$0xf]
    %v3433 = vld [vmem:[%s3423 + $0x24] sm:$0xf]
    %v3434 = vld [vmem:[%s3423 + $0x28] sm:$0xf]
    %v3435 = vld [vmem:[%s3423 + $0x2c] sm:$0xf]
    %v3436 = vld [vmem:[%s3423 + $0x30] sm:$0xf]
    %v3437 = vld [vmem:[%s3423 + $0x34] sm:$0xf]
    %v3438 = vld [vmem:[%s3423 + $0x38] sm:$0xf]
    %v3439 = vld [vmem:[%s3423 + $0x3c] sm:$0xf]
    %v3440 = vpack.c.bf16 %v3377, %v3377
    %v3457 = vunpack.c.l.b16 %v3424
    %v3458 = vunpack.c.l.b16 %v3425
    %v3459 = vunpack.c.l.b16 %v3426
    %v3460 = vunpack.c.l.b16 %v3427
    %v3461 = vunpack.c.l.b16 %v3428
    %v3462 = vunpack.c.l.b16 %v3429
    %v3463 = vunpack.c.l.b16 %v3430
    %v3464 = vunpack.c.l.b16 %v3431
    %v3465 = vunpack.c.l.b16 %v3432
    %v3466 = vunpack.c.l.b16 %v3433
    %v3467 = vunpack.c.l.b16 %v3434
    %v3468 = vunpack.c.l.b16 %v3435
    %v3469 = vunpack.c.l.b16 %v3436
    %v3470 = vunpack.c.l.b16 %v3437
    %v3471 = vunpack.c.l.b16 %v3438
    %v3472 = vunpack.c.l.b16 %v3439
    %v3473 = vpack.c.b16 %v3458, %v3457
    %v3474 = vpack.c.b16 %v3460, %v3459
    %v3475 = vpack.c.b16 %v3462, %v3461
    %v3476 = vpack.c.b16 %v3464, %v3463
    %v3477 = vpack.c.b16 %v3466, %v3465
    %v3478 = vpack.c.b16 %v3468, %v3467
    %v3479 = vpack.c.b16 %v3470, %v3469
    %v3480 = vpack.c.b16 %v3472, %v3471
    %3489 = vmatprep.subr.bf16.mxu0 0
    %3490 = vmatpush1.bf16.msra.mxu0 %v3480
    %3491 = vmatprep.subr.bf16.mxu0 0
    %3492 = vmatpush1.bf16.msra.mxu0 %v3479
    %3493 = vmatprep.subr.bf16.mxu0 0
    %3494 = vmatpush1.bf16.msra.mxu0 %v3478
    %3495 = vmatprep.subr.bf16.mxu0 0
    %3496 = vmatpush1.bf16.msra.mxu0 %v3477
    %3497 = vmatprep.subr.bf16.mxu0 0
    %3498 = vmatpush1.bf16.msra.mxu0 %v3476
    %3499 = vmatprep.subr.bf16.mxu0 0
    %3500 = vmatpush1.bf16.msra.mxu0 %v3475
    %3501 = vmatprep.subr.bf16.mxu0 0
    %3502 = vmatpush1.bf16.msra.mxu0 %v3474
    %3503 = vmatprep.subr.bf16.mxu0 0
    %3504 = vmatpush1.bf16.msra.mxu0 %v3473
    %3505 = vmatprep.subr.bf16.mxu0 0
    %3506 = vmatpush2.bf16.msra.mxu0 0
    %3507 = vmatprep.subr.bf16.mxu0 0
    %3508 = vmatpush2.bf16.msra.mxu0 0
    %3509 = vmatprep.subr.bf16.mxu0 0
    %3510 = vmatpush2.bf16.msra.mxu0 0
    %3511 = vmatprep.subr.bf16.mxu0 0
    %3512 = vmatpush2.bf16.msra.mxu0 0
    %3513 = vmatprep.subr.bf16.mxu0 0
    %3514 = vmatpush2.bf16.msra.mxu0 0
    %3515 = vmatprep.subr.bf16.mxu0 0
    %3516 = vmatpush2.bf16.msra.mxu0 0
    %3517 = vmatprep.subr.bf16.mxu0 0
    %3518 = vmatpush2.bf16.msra.mxu0 0
    %3519 = vmatprep.subr.bf16.mxu0 0
    %3520 = vmatpush2.bf16.msra.mxu0 0
    %3521 = vmatprep.mubr.bf16.mxu0 0
    %3522 = vmatmul.mubr.bf16.gmra.mxu0 %v3440
    %v3523 = vpop.f32.mrf.mxu0
    %v3524 = vadd.f32 0.0, %v3523
    %v3525 = vpop.f32.mrf.mxu0
    %v3526 = vpop.f32.mrf.mxu0
    %v3527 = vpop.f32.mrf.mxu0
    %3528 = vdwg.mxu0
    %v3529 = vpack.c.bf16 %v3418, %v3418
    %3530 = vmatprep.subr.bf16.mxu0 0
    %3531 = vmatpush1.bf16.msra.mxu0 %v3480
    %3532 = vmatprep.subr.bf16.mxu0 0
    %3533 = vmatpush1.bf16.msra.mxu0 %v3479
    %3534 = vmatprep.subr.bf16.mxu0 0
    %3535 = vmatpush1.bf16.msra.mxu0 %v3478
    %3536 = vmatprep.subr.bf16.mxu0 0
    %3537 = vmatpush1.bf16.msra.mxu0 %v3477
    %3538 = vmatprep.subr.bf16.mxu0 0
    %3539 = vmatpush1.bf16.msra.mxu0 %v3476
    %3540 = vmatprep.subr.bf16.mxu0 0
    %3541 = vmatpush1.bf16.msra.mxu0 %v3475
    %3542 = vmatprep.subr.bf16.mxu0 0
    %3543 = vmatpush1.bf16.msra.mxu0 %v3474
    %3544 = vmatprep.subr.bf16.mxu0 0
    %3545 = vmatpush1.bf16.msra.mxu0 %v3473
    %3546 = vmatprep.subr.bf16.mxu0 0
    %3547 = vmatpush2.bf16.msra.mxu0 0
    %3548 = vmatprep.subr.bf16.mxu0 0
    %3549 = vmatpush2.bf16.msra.mxu0 0
    %3550 = vmatprep.subr.bf16.mxu0 0
    %3551 = vmatpush2.bf16.msra.mxu0 0
    %3552 = vmatprep.subr.bf16.mxu0 0
    %3553 = vmatpush2.bf16.msra.mxu0 0
    %3554 = vmatprep.subr.bf16.mxu0 0
    %3555 = vmatpush2.bf16.msra.mxu0 0
    %3556 = vmatprep.subr.bf16.mxu0 0
    %3557 = vmatpush2.bf16.msra.mxu0 0
    %3558 = vmatprep.subr.bf16.mxu0 0
    %3559 = vmatpush2.bf16.msra.mxu0 0
    %3560 = vmatprep.subr.bf16.mxu0 0
    %3561 = vmatpush2.bf16.msra.mxu0 0
    %3562 = vmatprep.mubr.bf16.mxu0 0
    %3563 = vmatmul.mubr.bf16.gmra.mxu0 %v3529
    %v3564 = vpop.f32.mrf.mxu0
    %v3565 = vadd.f32 0.0, %v3564
    %v3566 = vpop.f32.mrf.mxu0
    %v3567 = vpop.f32.mrf.mxu0
    %v3568 = vpop.f32.mrf.mxu0
    %3569 = vdwg.mxu0
    %s3570 = scalar_lea.vmem [#allocation5], 1536
    %v3571 = vld [vmem:[%s3570] sm:$0xf]
    %v3572 = vld [vmem:[%s3570 + $0x4] sm:$0xf]
    %v3573 = vld [vmem:[%s3570 + $0x8] sm:$0xf]
    %v3574 = vld [vmem:[%s3570 + $0xc] sm:$0xf]
    %v3575 = vld [vmem:[%s3570 + $0x10] sm:$0xf]
    %v3576 = vld [vmem:[%s3570 + $0x14] sm:$0xf]
    %v3577 = vld [vmem:[%s3570 + $0x18] sm:$0xf]
    %v3578 = vld [vmem:[%s3570 + $0x1c] sm:$0xf]
    %v3579 = vld [vmem:[%s3570 + $0x20] sm:$0xf]
    %v3580 = vld [vmem:[%s3570 + $0x24] sm:$0xf]
    %v3581 = vld [vmem:[%s3570 + $0x28] sm:$0xf]
    %v3582 = vld [vmem:[%s3570 + $0x2c] sm:$0xf]
    %v3583 = vld [vmem:[%s3570 + $0x30] sm:$0xf]
    %v3584 = vld [vmem:[%s3570 + $0x34] sm:$0xf]
    %v3585 = vld [vmem:[%s3570 + $0x38] sm:$0xf]
    %v3586 = vld [vmem:[%s3570 + $0x3c] sm:$0xf]
    %v3587 = vpack.c.bf16 %v3524, %v3524
    %v3604 = vunpack.c.l.b16 %v3571
    %v3605 = vunpack.c.l.b16 %v3572
    %v3606 = vunpack.c.l.b16 %v3573
    %v3607 = vunpack.c.l.b16 %v3574
    %v3608 = vunpack.c.l.b16 %v3575
    %v3609 = vunpack.c.l.b16 %v3576
    %v3610 = vunpack.c.l.b16 %v3577
    %v3611 = vunpack.c.l.b16 %v3578
    %v3612 = vunpack.c.l.b16 %v3579
    %v3613 = vunpack.c.l.b16 %v3580
    %v3614 = vunpack.c.l.b16 %v3581
    %v3615 = vunpack.c.l.b16 %v3582
    %v3616 = vunpack.c.l.b16 %v3583
    %v3617 = vunpack.c.l.b16 %v3584
    %v3618 = vunpack.c.l.b16 %v3585
    %v3619 = vunpack.c.l.b16 %v3586
    %v3620 = vpack.c.b16 %v3605, %v3604
    %v3621 = vpack.c.b16 %v3607, %v3606
    %v3622 = vpack.c.b16 %v3609, %v3608
    %v3623 = vpack.c.b16 %v3611, %v3610
    %v3624 = vpack.c.b16 %v3613, %v3612
    %v3625 = vpack.c.b16 %v3615, %v3614
    %v3626 = vpack.c.b16 %v3617, %v3616
    %v3627 = vpack.c.b16 %v3619, %v3618
    %3636 = vmatprep.subr.bf16.mxu0 0
    %3637 = vmatpush1.bf16.msra.mxu0 %v3627
    %3638 = vmatprep.subr.bf16.mxu0 0
    %3639 = vmatpush1.bf16.msra.mxu0 %v3626
    %3640 = vmatprep.subr.bf16.mxu0 0
    %3641 = vmatpush1.bf16.msra.mxu0 %v3625
    %3642 = vmatprep.subr.bf16.mxu0 0
    %3643 = vmatpush1.bf16.msra.mxu0 %v3624
    %3644 = vmatprep.subr.bf16.mxu0 0
    %3645 = vmatpush1.bf16.msra.mxu0 %v3623
    %3646 = vmatprep.subr.bf16.mxu0 0
    %3647 = vmatpush1.bf16.msra.mxu0 %v3622
    %3648 = vmatprep.subr.bf16.mxu0 0
    %3649 = vmatpush1.bf16.msra.mxu0 %v3621
    %3650 = vmatprep.subr.bf16.mxu0 0
    %3651 = vmatpush1.bf16.msra.mxu0 %v3620
    %3652 = vmatprep.subr.bf16.mxu0 0
    %3653 = vmatpush2.bf16.msra.mxu0 0
    %3654 = vmatprep.subr.bf16.mxu0 0
    %3655 = vmatpush2.bf16.msra.mxu0 0
    %3656 = vmatprep.subr.bf16.mxu0 0
    %3657 = vmatpush2.bf16.msra.mxu0 0
    %3658 = vmatprep.subr.bf16.mxu0 0
    %3659 = vmatpush2.bf16.msra.mxu0 0
    %3660 = vmatprep.subr.bf16.mxu0 0
    %3661 = vmatpush2.bf16.msra.mxu0 0
    %3662 = vmatprep.subr.bf16.mxu0 0
    %3663 = vmatpush2.bf16.msra.mxu0 0
    %3664 = vmatprep.subr.bf16.mxu0 0
    %3665 = vmatpush2.bf16.msra.mxu0 0
    %3666 = vmatprep.subr.bf16.mxu0 0
    %3667 = vmatpush2.bf16.msra.mxu0 0
    %3668 = vmatprep.mubr.bf16.mxu0 0
    %3669 = vmatmul.mubr.bf16.gmra.mxu0 %v3587
    %v3670 = vpop.f32.mrf.mxu0
    %v3671 = vadd.f32 0.0, %v3670
    %v3672 = vpop.f32.mrf.mxu0
    %v3673 = vpop.f32.mrf.mxu0
    %v3674 = vpop.f32.mrf.mxu0
    %3675 = vdwg.mxu0
    %v3676 = vpack.c.bf16 %v3565, %v3565
    %3677 = vmatprep.subr.bf16.mxu0 0
    %3678 = vmatpush1.bf16.msra.mxu0 %v3627
    %3679 = vmatprep.subr.bf16.mxu0 0
    %3680 = vmatpush1.bf16.msra.mxu0 %v3626
    %3681 = vmatprep.subr.bf16.mxu0 0
    %3682 = vmatpush1.bf16.msra.mxu0 %v3625
    %3683 = vmatprep.subr.bf16.mxu0 0
    %3684 = vmatpush1.bf16.msra.mxu0 %v3624
    %3685 = vmatprep.subr.bf16.mxu0 0
    %3686 = vmatpush1.bf16.msra.mxu0 %v3623
    %3687 = vmatprep.subr.bf16.mxu0 0
    %3688 = vmatpush1.bf16.msra.mxu0 %v3622
    %3689 = vmatprep.subr.bf16.mxu0 0
    %3690 = vmatpush1.bf16.msra.mxu0 %v3621
    %3691 = vmatprep.subr.bf16.mxu0 0
    %3692 = vmatpush1.bf16.msra.mxu0 %v3620
    %3693 = vmatprep.subr.bf16.mxu0 0
    %3694 = vmatpush2.bf16.msra.mxu0 0
    %3695 = vmatprep.subr.bf16.mxu0 0
    %3696 = vmatpush2.bf16.msra.mxu0 0
    %3697 = vmatprep.subr.bf16.mxu0 0
    %3698 = vmatpush2.bf16.msra.mxu0 0
    %3699 = vmatprep.subr.bf16.mxu0 0
    %3700 = vmatpush2.bf16.msra.mxu0 0
    %3701 = vmatprep.subr.bf16.mxu0 0
    %3702 = vmatpush2.bf16.msra.mxu0 0
    %3703 = vmatprep.subr.bf16.mxu0 0
    %3704 = vmatpush2.bf16.msra.mxu0 0
    %3705 = vmatprep.subr.bf16.mxu0 0
    %3706 = vmatpush2.bf16.msra.mxu0 0
    %3707 = vmatprep.subr.bf16.mxu0 0
    %3708 = vmatpush2.bf16.msra.mxu0 0
    %3709 = vmatprep.mubr.bf16.mxu0 0
    %3710 = vmatmul.mubr.bf16.gmra.mxu0 %v3676
    %v3711 = vpop.f32.mrf.mxu0
    %v3712 = vadd.f32 0.0, %v3711
    %v3713 = vpop.f32.mrf.mxu0
    %v3714 = vpop.f32.mrf.mxu0
    %v3715 = vpop.f32.mrf.mxu0
    %3716 = vdwg.mxu0
    %s3717 = scalar_lea.vmem [#allocation5], 1600
    %v3718 = vld [vmem:[%s3717] sm:$0xf]
    %v3719 = vld [vmem:[%s3717 + $0x4] sm:$0xf]
    %v3720 = vld [vmem:[%s3717 + $0x8] sm:$0xf]
    %v3721 = vld [vmem:[%s3717 + $0xc] sm:$0xf]
    %v3722 = vld [vmem:[%s3717 + $0x10] sm:$0xf]
    %v3723 = vld [vmem:[%s3717 + $0x14] sm:$0xf]
    %v3724 = vld [vmem:[%s3717 + $0x18] sm:$0xf]
    %v3725 = vld [vmem:[%s3717 + $0x1c] sm:$0xf]
    %v3726 = vld [vmem:[%s3717 + $0x20] sm:$0xf]
    %v3727 = vld [vmem:[%s3717 + $0x24] sm:$0xf]
    %v3728 = vld [vmem:[%s3717 + $0x28] sm:$0xf]
    %v3729 = vld [vmem:[%s3717 + $0x2c] sm:$0xf]
    %v3730 = vld [vmem:[%s3717 + $0x30] sm:$0xf]
    %v3731 = vld [vmem:[%s3717 + $0x34] sm:$0xf]
    %v3732 = vld [vmem:[%s3717 + $0x38] sm:$0xf]
    %v3733 = vld [vmem:[%s3717 + $0x3c] sm:$0xf]
    %v3734 = vpack.c.bf16 %v3671, %v3671
    %v3751 = vunpack.c.l.b16 %v3718
    %v3752 = vunpack.c.l.b16 %v3719
    %v3753 = vunpack.c.l.b16 %v3720
    %v3754 = vunpack.c.l.b16 %v3721
    %v3755 = vunpack.c.l.b16 %v3722
    %v3756 = vunpack.c.l.b16 %v3723
    %v3757 = vunpack.c.l.b16 %v3724
    %v3758 = vunpack.c.l.b16 %v3725
    %v3759 = vunpack.c.l.b16 %v3726
    %v3760 = vunpack.c.l.b16 %v3727
    %v3761 = vunpack.c.l.b16 %v3728
    %v3762 = vunpack.c.l.b16 %v3729
    %v3763 = vunpack.c.l.b16 %v3730
    %v3764 = vunpack.c.l.b16 %v3731
    %v3765 = vunpack.c.l.b16 %v3732
    %v3766 = vunpack.c.l.b16 %v3733
    %v3767 = vpack.c.b16 %v3752, %v3751
    %v3768 = vpack.c.b16 %v3754, %v3753
    %v3769 = vpack.c.b16 %v3756, %v3755
    %v3770 = vpack.c.b16 %v3758, %v3757
    %v3771 = vpack.c.b16 %v3760, %v3759
    %v3772 = vpack.c.b16 %v3762, %v3761
    %v3773 = vpack.c.b16 %v3764, %v3763
    %v3774 = vpack.c.b16 %v3766, %v3765
    %3783 = vmatprep.subr.bf16.mxu0 0
    %3784 = vmatpush1.bf16.msra.mxu0 %v3774
    %3785 = vmatprep.subr.bf16.mxu0 0
    %3786 = vmatpush1.bf16.msra.mxu0 %v3773
    %3787 = vmatprep.subr.bf16.mxu0 0
    %3788 = vmatpush1.bf16.msra.mxu0 %v3772
    %3789 = vmatprep.subr.bf16.mxu0 0
    %3790 = vmatpush1.bf16.msra.mxu0 %v3771
    %3791 = vmatprep.subr.bf16.mxu0 0
    %3792 = vmatpush1.bf16.msra.mxu0 %v3770
    %3793 = vmatprep.subr.bf16.mxu0 0
    %3794 = vmatpush1.bf16.msra.mxu0 %v3769
    %3795 = vmatprep.subr.bf16.mxu0 0
    %3796 = vmatpush1.bf16.msra.mxu0 %v3768
    %3797 = vmatprep.subr.bf16.mxu0 0
    %3798 = vmatpush1.bf16.msra.mxu0 %v3767
    %3799 = vmatprep.subr.bf16.mxu0 0
    %3800 = vmatpush2.bf16.msra.mxu0 0
    %3801 = vmatprep.subr.bf16.mxu0 0
    %3802 = vmatpush2.bf16.msra.mxu0 0
    %3803 = vmatprep.subr.bf16.mxu0 0
    %3804 = vmatpush2.bf16.msra.mxu0 0
    %3805 = vmatprep.subr.bf16.mxu0 0
    %3806 = vmatpush2.bf16.msra.mxu0 0
    %3807 = vmatprep.subr.bf16.mxu0 0
    %3808 = vmatpush2.bf16.msra.mxu0 0
    %3809 = vmatprep.subr.bf16.mxu0 0
    %3810 = vmatpush2.bf16.msra.mxu0 0
    %3811 = vmatprep.subr.bf16.mxu0 0
    %3812 = vmatpush2.bf16.msra.mxu0 0
    %3813 = vmatprep.subr.bf16.mxu0 0
    %3814 = vmatpush2.bf16.msra.mxu0 0
    %3815 = vmatprep.mubr.bf16.mxu0 0
    %3816 = vmatmul.mubr.bf16.gmra.mxu0 %v3734
    %v3817 = vpop.f32.mrf.mxu0
    %v3818 = vadd.f32 0.0, %v3817
    %v3819 = vpop.f32.mrf.mxu0
    %v3820 = vpop.f32.mrf.mxu0
    %v3821 = vpop.f32.mrf.mxu0
    %3822 = vdwg.mxu0
    %v3823 = vpack.c.bf16 %v3712, %v3712
    %3824 = vmatprep.subr.bf16.mxu0 0
    %3825 = vmatpush1.bf16.msra.mxu0 %v3774
    %3826 = vmatprep.subr.bf16.mxu0 0
    %3827 = vmatpush1.bf16.msra.mxu0 %v3773
    %3828 = vmatprep.subr.bf16.mxu0 0
    %3829 = vmatpush1.bf16.msra.mxu0 %v3772
    %3830 = vmatprep.subr.bf16.mxu0 0
    %3831 = vmatpush1.bf16.msra.mxu0 %v3771
    %3832 = vmatprep.subr.bf16.mxu0 0
    %3833 = vmatpush1.bf16.msra.mxu0 %v3770
    %3834 = vmatprep.subr.bf16.mxu0 0
    %3835 = vmatpush1.bf16.msra.mxu0 %v3769
    %3836 = vmatprep.subr.bf16.mxu0 0
    %3837 = vmatpush1.bf16.msra.mxu0 %v3768
    %3838 = vmatprep.subr.bf16.mxu0 0
    %3839 = vmatpush1.bf16.msra.mxu0 %v3767
    %3840 = vmatprep.subr.bf16.mxu0 0
    %3841 = vmatpush2.bf16.msra.mxu0 0
    %3842 = vmatprep.subr.bf16.mxu0 0
    %3843 = vmatpush2.bf16.msra.mxu0 0
    %3844 = vmatprep.subr.bf16.mxu0 0
    %3845 = vmatpush2.bf16.msra.mxu0 0
    %3846 = vmatprep.subr.bf16.mxu0 0
    %3847 = vmatpush2.bf16.msra.mxu0 0
    %3848 = vmatprep.subr.bf16.mxu0 0
    %3849 = vmatpush2.bf16.msra.mxu0 0
    %3850 = vmatprep.subr.bf16.mxu0 0
    %3851 = vmatpush2.bf16.msra.mxu0 0
    %3852 = vmatprep.subr.bf16.mxu0 0
    %3853 = vmatpush2.bf16.msra.mxu0 0
    %3854 = vmatprep.subr.bf16.mxu0 0
    %3855 = vmatpush2.bf16.msra.mxu0 0
    %3856 = vmatprep.mubr.bf16.mxu0 0
    %3857 = vmatmul.mubr.bf16.gmra.mxu0 %v3823
    %v3858 = vpop.f32.mrf.mxu0
    %v3859 = vadd.f32 0.0, %v3858
    %v3860 = vpop.f32.mrf.mxu0
    %v3861 = vpop.f32.mrf.mxu0
    %v3862 = vpop.f32.mrf.mxu0
    %3863 = vdwg.mxu0
    %s3864 = scalar_lea.vmem [#allocation5], 1664
    %v3865 = vld [vmem:[%s3864] sm:$0xf]
    %v3866 = vld [vmem:[%s3864 + $0x4] sm:$0xf]
    %v3867 = vld [vmem:[%s3864 + $0x8] sm:$0xf]
    %v3868 = vld [vmem:[%s3864 + $0xc] sm:$0xf]
    %v3869 = vld [vmem:[%s3864 + $0x10] sm:$0xf]
    %v3870 = vld [vmem:[%s3864 + $0x14] sm:$0xf]
    %v3871 = vld [vmem:[%s3864 + $0x18] sm:$0xf]
    %v3872 = vld [vmem:[%s3864 + $0x1c] sm:$0xf]
    %v3873 = vld [vmem:[%s3864 + $0x20] sm:$0xf]
    %v3874 = vld [vmem:[%s3864 + $0x24] sm:$0xf]
    %v3875 = vld [vmem:[%s3864 + $0x28] sm:$0xf]
    %v3876 = vld [vmem:[%s3864 + $0x2c] sm:$0xf]
    %v3877 = vld [vmem:[%s3864 + $0x30] sm:$0xf]
    %v3878 = vld [vmem:[%s3864 + $0x34] sm:$0xf]
    %v3879 = vld [vmem:[%s3864 + $0x38] sm:$0xf]
    %v3880 = vld [vmem:[%s3864 + $0x3c] sm:$0xf]
    %v3881 = vpack.c.bf16 %v3818, %v3818
    %v3898 = vunpack.c.l.b16 %v3865
    %v3899 = vunpack.c.l.b16 %v3866
    %v3900 = vunpack.c.l.b16 %v3867
    %v3901 = vunpack.c.l.b16 %v3868
    %v3902 = vunpack.c.l.b16 %v3869
    %v3903 = vunpack.c.l.b16 %v3870
    %v3904 = vunpack.c.l.b16 %v3871
    %v3905 = vunpack.c.l.b16 %v3872
    %v3906 = vunpack.c.l.b16 %v3873
    %v3907 = vunpack.c.l.b16 %v3874
    %v3908 = vunpack.c.l.b16 %v3875
    %v3909 = vunpack.c.l.b16 %v3876
    %v3910 = vunpack.c.l.b16 %v3877
    %v3911 = vunpack.c.l.b16 %v3878
    %v3912 = vunpack.c.l.b16 %v3879
    %v3913 = vunpack.c.l.b16 %v3880
    %v3914 = vpack.c.b16 %v3899, %v3898
    %v3915 = vpack.c.b16 %v3901, %v3900
    %v3916 = vpack.c.b16 %v3903, %v3902
    %v3917 = vpack.c.b16 %v3905, %v3904
    %v3918 = vpack.c.b16 %v3907, %v3906
    %v3919 = vpack.c.b16 %v3909, %v3908
    %v3920 = vpack.c.b16 %v3911, %v3910
    %v3921 = vpack.c.b16 %v3913, %v3912
    %3930 = vmatprep.subr.bf16.mxu0 0
    %3931 = vmatpush1.bf16.msra.mxu0 %v3921
    %3932 = vmatprep.subr.bf16.mxu0 0
    %3933 = vmatpush1.bf16.msra.mxu0 %v3920
    %3934 = vmatprep.subr.bf16.mxu0 0
    %3935 = vmatpush1.bf16.msra.mxu0 %v3919
    %3936 = vmatprep.subr.bf16.mxu0 0
    %3937 = vmatpush1.bf16.msra.mxu0 %v3918
    %3938 = vmatprep.subr.bf16.mxu0 0
    %3939 = vmatpush1.bf16.msra.mxu0 %v3917
    %3940 = vmatprep.subr.bf16.mxu0 0
    %3941 = vmatpush1.bf16.msra.mxu0 %v3916
    %3942 = vmatprep.subr.bf16.mxu0 0
    %3943 = vmatpush1.bf16.msra.mxu0 %v3915
    %3944 = vmatprep.subr.bf16.mxu0 0
    %3945 = vmatpush1.bf16.msra.mxu0 %v3914
    %3946 = vmatprep.subr.bf16.mxu0 0
    %3947 = vmatpush2.bf16.msra.mxu0 0
    %3948 = vmatprep.subr.bf16.mxu0 0
    %3949 = vmatpush2.bf16.msra.mxu0 0
    %3950 = vmatprep.subr.bf16.mxu0 0
    %3951 = vmatpush2.bf16.msra.mxu0 0
    %3952 = vmatprep.subr.bf16.mxu0 0
    %3953 = vmatpush2.bf16.msra.mxu0 0
    %3954 = vmatprep.subr.bf16.mxu0 0
    %3955 = vmatpush2.bf16.msra.mxu0 0
    %3956 = vmatprep.subr.bf16.mxu0 0
    %3957 = vmatpush2.bf16.msra.mxu0 0
    %3958 = vmatprep.subr.bf16.mxu0 0
    %3959 = vmatpush2.bf16.msra.mxu0 0
    %3960 = vmatprep.subr.bf16.mxu0 0
    %3961 = vmatpush2.bf16.msra.mxu0 0
    %3962 = vmatprep.mubr.bf16.mxu0 0
    %3963 = vmatmul.mubr.bf16.gmra.mxu0 %v3881
    %v3964 = vpop.f32.mrf.mxu0
    %v3965 = vadd.f32 0.0, %v3964
    %v3966 = vpop.f32.mrf.mxu0
    %v3967 = vpop.f32.mrf.mxu0
    %v3968 = vpop.f32.mrf.mxu0
    %3969 = vdwg.mxu0
    %v3970 = vpack.c.bf16 %v3859, %v3859
    %3971 = vmatprep.subr.bf16.mxu0 0
    %3972 = vmatpush1.bf16.msra.mxu0 %v3921
    %3973 = vmatprep.subr.bf16.mxu0 0
    %3974 = vmatpush1.bf16.msra.mxu0 %v3920
    %3975 = vmatprep.subr.bf16.mxu0 0
    %3976 = vmatpush1.bf16.msra.mxu0 %v3919
    %3977 = vmatprep.subr.bf16.mxu0 0
    %3978 = vmatpush1.bf16.msra.mxu0 %v3918
    %3979 = vmatprep.subr.bf16.mxu0 0
    %3980 = vmatpush1.bf16.msra.mxu0 %v3917
    %3981 = vmatprep.subr.bf16.mxu0 0
    %3982 = vmatpush1.bf16.msra.mxu0 %v3916
    %3983 = vmatprep.subr.bf16.mxu0 0
    %3984 = vmatpush1.bf16.msra.mxu0 %v3915
    %3985 = vmatprep.subr.bf16.mxu0 0
    %3986 = vmatpush1.bf16.msra.mxu0 %v3914
    %3987 = vmatprep.subr.bf16.mxu0 0
    %3988 = vmatpush2.bf16.msra.mxu0 0
    %3989 = vmatprep.subr.bf16.mxu0 0
    %3990 = vmatpush2.bf16.msra.mxu0 0
    %3991 = vmatprep.subr.bf16.mxu0 0
    %3992 = vmatpush2.bf16.msra.mxu0 0
    %3993 = vmatprep.subr.bf16.mxu0 0
    %3994 = vmatpush2.bf16.msra.mxu0 0
    %3995 = vmatprep.subr.bf16.mxu0 0
    %3996 = vmatpush2.bf16.msra.mxu0 0
    %3997 = vmatprep.subr.bf16.mxu0 0
    %3998 = vmatpush2.bf16.msra.mxu0 0
    %3999 = vmatprep.subr.bf16.mxu0 0
    %4000 = vmatpush2.bf16.msra.mxu0 0
    %4001 = vmatprep.subr.bf16.mxu0 0
    %4002 = vmatpush2.bf16.msra.mxu0 0
    %4003 = vmatprep.mubr.bf16.mxu0 0
    %4004 = vmatmul.mubr.bf16.gmra.mxu0 %v3970
    %v4005 = vpop.f32.mrf.mxu0
    %v4006 = vadd.f32 0.0, %v4005
    %v4007 = vpop.f32.mrf.mxu0
    %v4008 = vpop.f32.mrf.mxu0
    %v4009 = vpop.f32.mrf.mxu0
    %4010 = vdwg.mxu0
    %s4011 = scalar_lea.vmem [#allocation5], 1728
    %v4012 = vld [vmem:[%s4011] sm:$0xf]
    %v4013 = vld [vmem:[%s4011 + $0x4] sm:$0xf]
    %v4014 = vld [vmem:[%s4011 + $0x8] sm:$0xf]
    %v4015 = vld [vmem:[%s4011 + $0xc] sm:$0xf]
    %v4016 = vld [vmem:[%s4011 + $0x10] sm:$0xf]
    %v4017 = vld [vmem:[%s4011 + $0x14] sm:$0xf]
    %v4018 = vld [vmem:[%s4011 + $0x18] sm:$0xf]
    %v4019 = vld [vmem:[%s4011 + $0x1c] sm:$0xf]
    %v4020 = vld [vmem:[%s4011 + $0x20] sm:$0xf]
    %v4021 = vld [vmem:[%s4011 + $0x24] sm:$0xf]
    %v4022 = vld [vmem:[%s4011 + $0x28] sm:$0xf]
    %v4023 = vld [vmem:[%s4011 + $0x2c] sm:$0xf]
    %v4024 = vld [vmem:[%s4011 + $0x30] sm:$0xf]
    %v4025 = vld [vmem:[%s4011 + $0x34] sm:$0xf]
    %v4026 = vld [vmem:[%s4011 + $0x38] sm:$0xf]
    %v4027 = vld [vmem:[%s4011 + $0x3c] sm:$0xf]
    %v4028 = vpack.c.bf16 %v3965, %v3965
    %v4045 = vunpack.c.l.b16 %v4012
    %v4046 = vunpack.c.l.b16 %v4013
    %v4047 = vunpack.c.l.b16 %v4014
    %v4048 = vunpack.c.l.b16 %v4015
    %v4049 = vunpack.c.l.b16 %v4016
    %v4050 = vunpack.c.l.b16 %v4017
    %v4051 = vunpack.c.l.b16 %v4018
    %v4052 = vunpack.c.l.b16 %v4019
    %v4053 = vunpack.c.l.b16 %v4020
    %v4054 = vunpack.c.l.b16 %v4021
    %v4055 = vunpack.c.l.b16 %v4022
    %v4056 = vunpack.c.l.b16 %v4023
    %v4057 = vunpack.c.l.b16 %v4024
    %v4058 = vunpack.c.l.b16 %v4025
    %v4059 = vunpack.c.l.b16 %v4026
    %v4060 = vunpack.c.l.b16 %v4027
    %v4061 = vpack.c.b16 %v4046, %v4045
    %v4062 = vpack.c.b16 %v4048, %v4047
    %v4063 = vpack.c.b16 %v4050, %v4049
    %v4064 = vpack.c.b16 %v4052, %v4051
    %v4065 = vpack.c.b16 %v4054, %v4053
    %v4066 = vpack.c.b16 %v4056, %v4055
    %v4067 = vpack.c.b16 %v4058, %v4057
    %v4068 = vpack.c.b16 %v4060, %v4059
    %4077 = vmatprep.subr.bf16.mxu0 0
    %4078 = vmatpush1.bf16.msra.mxu0 %v4068
    %4079 = vmatprep.subr.bf16.mxu0 0
    %4080 = vmatpush1.bf16.msra.mxu0 %v4067
    %4081 = vmatprep.subr.bf16.mxu0 0
    %4082 = vmatpush1.bf16.msra.mxu0 %v4066
    %4083 = vmatprep.subr.bf16.mxu0 0
    %4084 = vmatpush1.bf16.msra.mxu0 %v4065
    %4085 = vmatprep.subr.bf16.mxu0 0
    %4086 = vmatpush1.bf16.msra.mxu0 %v4064
    %4087 = vmatprep.subr.bf16.mxu0 0
    %4088 = vmatpush1.bf16.msra.mxu0 %v4063
    %4089 = vmatprep.subr.bf16.mxu0 0
    %4090 = vmatpush1.bf16.msra.mxu0 %v4062
    %4091 = vmatprep.subr.bf16.mxu0 0
    %4092 = vmatpush1.bf16.msra.mxu0 %v4061
    %4093 = vmatprep.subr.bf16.mxu0 0
    %4094 = vmatpush2.bf16.msra.mxu0 0
    %4095 = vmatprep.subr.bf16.mxu0 0
    %4096 = vmatpush2.bf16.msra.mxu0 0
    %4097 = vmatprep.subr.bf16.mxu0 0
    %4098 = vmatpush2.bf16.msra.mxu0 0
    %4099 = vmatprep.subr.bf16.mxu0 0
    %4100 = vmatpush2.bf16.msra.mxu0 0
    %4101 = vmatprep.subr.bf16.mxu0 0
    %4102 = vmatpush2.bf16.msra.mxu0 0
    %4103 = vmatprep.subr.bf16.mxu0 0
    %4104 = vmatpush2.bf16.msra.mxu0 0
    %4105 = vmatprep.subr.bf16.mxu0 0
    %4106 = vmatpush2.bf16.msra.mxu0 0
    %4107 = vmatprep.subr.bf16.mxu0 0
    %4108 = vmatpush2.bf16.msra.mxu0 0
    %4109 = vmatprep.mubr.bf16.mxu0 0
    %4110 = vmatmul.mubr.bf16.gmra.mxu0 %v4028
    %v4111 = vpop.f32.mrf.mxu0
    %v4112 = vadd.f32 0.0, %v4111
    %v4113 = vpop.f32.mrf.mxu0
    %v4114 = vpop.f32.mrf.mxu0
    %v4115 = vpop.f32.mrf.mxu0
    %4116 = vdwg.mxu0
    %v4117 = vpack.c.bf16 %v4006, %v4006
    %4118 = vmatprep.subr.bf16.mxu0 0
    %4119 = vmatpush1.bf16.msra.mxu0 %v4068
    %4120 = vmatprep.subr.bf16.mxu0 0
    %4121 = vmatpush1.bf16.msra.mxu0 %v4067
    %4122 = vmatprep.subr.bf16.mxu0 0
    %4123 = vmatpush1.bf16.msra.mxu0 %v4066
    %4124 = vmatprep.subr.bf16.mxu0 0
    %4125 = vmatpush1.bf16.msra.mxu0 %v4065
    %4126 = vmatprep.subr.bf16.mxu0 0
    %4127 = vmatpush1.bf16.msra.mxu0 %v4064
    %4128 = vmatprep.subr.bf16.mxu0 0
    %4129 = vmatpush1.bf16.msra.mxu0 %v4063
    %4130 = vmatprep.subr.bf16.mxu0 0
    %4131 = vmatpush1.bf16.msra.mxu0 %v4062
    %4132 = vmatprep.subr.bf16.mxu0 0
    %4133 = vmatpush1.bf16.msra.mxu0 %v4061
    %4134 = vmatprep.subr.bf16.mxu0 0
    %4135 = vmatpush2.bf16.msra.mxu0 0
    %4136 = vmatprep.subr.bf16.mxu0 0
    %4137 = vmatpush2.bf16.msra.mxu0 0
    %4138 = vmatprep.subr.bf16.mxu0 0
    %4139 = vmatpush2.bf16.msra.mxu0 0
    %4140 = vmatprep.subr.bf16.mxu0 0
    %4141 = vmatpush2.bf16.msra.mxu0 0
    %4142 = vmatprep.subr.bf16.mxu0 0
    %4143 = vmatpush2.bf16.msra.mxu0 0
    %4144 = vmatprep.subr.bf16.mxu0 0
    %4145 = vmatpush2.bf16.msra.mxu0 0
    %4146 = vmatprep.subr.bf16.mxu0 0
    %4147 = vmatpush2.bf16.msra.mxu0 0
    %4148 = vmatprep.subr.bf16.mxu0 0
    %4149 = vmatpush2.bf16.msra.mxu0 0
    %4150 = vmatprep.mubr.bf16.mxu0 0
    %4151 = vmatmul.mubr.bf16.gmra.mxu0 %v4117
    %v4152 = vpop.f32.mrf.mxu0
    %v4153 = vadd.f32 0.0, %v4152
    %v4154 = vpop.f32.mrf.mxu0
    %v4155 = vpop.f32.mrf.mxu0
    %v4156 = vpop.f32.mrf.mxu0
    %4157 = vdwg.mxu0
    %s4158 = scalar_lea.vmem [#allocation5], 1792
    %v4159 = vld [vmem:[%s4158] sm:$0xf]
    %v4160 = vld [vmem:[%s4158 + $0x4] sm:$0xf]
    %v4161 = vld [vmem:[%s4158 + $0x8] sm:$0xf]
    %v4162 = vld [vmem:[%s4158 + $0xc] sm:$0xf]
    %v4163 = vld [vmem:[%s4158 + $0x10] sm:$0xf]
    %v4164 = vld [vmem:[%s4158 + $0x14] sm:$0xf]
    %v4165 = vld [vmem:[%s4158 + $0x18] sm:$0xf]
    %v4166 = vld [vmem:[%s4158 + $0x1c] sm:$0xf]
    %v4167 = vld [vmem:[%s4158 + $0x20] sm:$0xf]
    %v4168 = vld [vmem:[%s4158 + $0x24] sm:$0xf]
    %v4169 = vld [vmem:[%s4158 + $0x28] sm:$0xf]
    %v4170 = vld [vmem:[%s4158 + $0x2c] sm:$0xf]
    %v4171 = vld [vmem:[%s4158 + $0x30] sm:$0xf]
    %v4172 = vld [vmem:[%s4158 + $0x34] sm:$0xf]
    %v4173 = vld [vmem:[%s4158 + $0x38] sm:$0xf]
    %v4174 = vld [vmem:[%s4158 + $0x3c] sm:$0xf]
    %v4175 = vpack.c.bf16 %v4112, %v4112
    %v4192 = vunpack.c.l.b16 %v4159
    %v4193 = vunpack.c.l.b16 %v4160
    %v4194 = vunpack.c.l.b16 %v4161
    %v4195 = vunpack.c.l.b16 %v4162
    %v4196 = vunpack.c.l.b16 %v4163
    %v4197 = vunpack.c.l.b16 %v4164
    %v4198 = vunpack.c.l.b16 %v4165
    %v4199 = vunpack.c.l.b16 %v4166
    %v4200 = vunpack.c.l.b16 %v4167
    %v4201 = vunpack.c.l.b16 %v4168
    %v4202 = vunpack.c.l.b16 %v4169
    %v4203 = vunpack.c.l.b16 %v4170
    %v4204 = vunpack.c.l.b16 %v4171
    %v4205 = vunpack.c.l.b16 %v4172
    %v4206 = vunpack.c.l.b16 %v4173
    %v4207 = vunpack.c.l.b16 %v4174
    %v4208 = vpack.c.b16 %v4193, %v4192
    %v4209 = vpack.c.b16 %v4195, %v4194
    %v4210 = vpack.c.b16 %v4197, %v4196
    %v4211 = vpack.c.b16 %v4199, %v4198
    %v4212 = vpack.c.b16 %v4201, %v4200
    %v4213 = vpack.c.b16 %v4203, %v4202
    %v4214 = vpack.c.b16 %v4205, %v4204
    %v4215 = vpack.c.b16 %v4207, %v4206
    %4224 = vmatprep.subr.bf16.mxu0 0
    %4225 = vmatpush1.bf16.msra.mxu0 %v4215
    %4226 = vmatprep.subr.bf16.mxu0 0
    %4227 = vmatpush1.bf16.msra.mxu0 %v4214
    %4228 = vmatprep.subr.bf16.mxu0 0
    %4229 = vmatpush1.bf16.msra.mxu0 %v4213
    %4230 = vmatprep.subr.bf16.mxu0 0
    %4231 = vmatpush1.bf16.msra.mxu0 %v4212
    %4232 = vmatprep.subr.bf16.mxu0 0
    %4233 = vmatpush1.bf16.msra.mxu0 %v4211
    %4234 = vmatprep.subr.bf16.mxu0 0
    %4235 = vmatpush1.bf16.msra.mxu0 %v4210
    %4236 = vmatprep.subr.bf16.mxu0 0
    %4237 = vmatpush1.bf16.msra.mxu0 %v4209
    %4238 = vmatprep.subr.bf16.mxu0 0
    %4239 = vmatpush1.bf16.msra.mxu0 %v4208
    %4240 = vmatprep.subr.bf16.mxu0 0
    %4241 = vmatpush2.bf16.msra.mxu0 0
    %4242 = vmatprep.subr.bf16.mxu0 0
    %4243 = vmatpush2.bf16.msra.mxu0 0
    %4244 = vmatprep.subr.bf16.mxu0 0
    %4245 = vmatpush2.bf16.msra.mxu0 0
    %4246 = vmatprep.subr.bf16.mxu0 0
    %4247 = vmatpush2.bf16.msra.mxu0 0
    %4248 = vmatprep.subr.bf16.mxu0 0
    %4249 = vmatpush2.bf16.msra.mxu0 0
    %4250 = vmatprep.subr.bf16.mxu0 0
    %4251 = vmatpush2.bf16.msra.mxu0 0
    %4252 = vmatprep.subr.bf16.mxu0 0
    %4253 = vmatpush2.bf16.msra.mxu0 0
    %4254 = vmatprep.subr.bf16.mxu0 0
    %4255 = vmatpush2.bf16.msra.mxu0 0
    %4256 = vmatprep.mubr.bf16.mxu0 0
    %4257 = vmatmul.mubr.bf16.gmra.mxu0 %v4175
    %v4258 = vpop.f32.mrf.mxu0
    %v4259 = vadd.f32 0.0, %v4258
    %v4260 = vpop.f32.mrf.mxu0
    %v4261 = vpop.f32.mrf.mxu0
    %v4262 = vpop.f32.mrf.mxu0
    %4263 = vdwg.mxu0
    %v4264 = vpack.c.bf16 %v4153, %v4153
    %4265 = vmatprep.subr.bf16.mxu0 0
    %4266 = vmatpush1.bf16.msra.mxu0 %v4215
    %4267 = vmatprep.subr.bf16.mxu0 0
    %4268 = vmatpush1.bf16.msra.mxu0 %v4214
    %4269 = vmatprep.subr.bf16.mxu0 0
    %4270 = vmatpush1.bf16.msra.mxu0 %v4213
    %4271 = vmatprep.subr.bf16.mxu0 0
    %4272 = vmatpush1.bf16.msra.mxu0 %v4212
    %4273 = vmatprep.subr.bf16.mxu0 0
    %4274 = vmatpush1.bf16.msra.mxu0 %v4211
    %4275 = vmatprep.subr.bf16.mxu0 0
    %4276 = vmatpush1.bf16.msra.mxu0 %v4210
    %4277 = vmatprep.subr.bf16.mxu0 0
    %4278 = vmatpush1.bf16.msra.mxu0 %v4209
    %4279 = vmatprep.subr.bf16.mxu0 0
    %4280 = vmatpush1.bf16.msra.mxu0 %v4208
    %4281 = vmatprep.subr.bf16.mxu0 0
    %4282 = vmatpush2.bf16.msra.mxu0 0
    %4283 = vmatprep.subr.bf16.mxu0 0
    %4284 = vmatpush2.bf16.msra.mxu0 0
    %4285 = vmatprep.subr.bf16.mxu0 0
    %4286 = vmatpush2.bf16.msra.mxu0 0
    %4287 = vmatprep.subr.bf16.mxu0 0
    %4288 = vmatpush2.bf16.msra.mxu0 0
    %4289 = vmatprep.subr.bf16.mxu0 0
    %4290 = vmatpush2.bf16.msra.mxu0 0
    %4291 = vmatprep.subr.bf16.mxu0 0
    %4292 = vmatpush2.bf16.msra.mxu0 0
    %4293 = vmatprep.subr.bf16.mxu0 0
    %4294 = vmatpush2.bf16.msra.mxu0 0
    %4295 = vmatprep.subr.bf16.mxu0 0
    %4296 = vmatpush2.bf16.msra.mxu0 0
    %4297 = vmatprep.mubr.bf16.mxu0 0
    %4298 = vmatmul.mubr.bf16.gmra.mxu0 %v4264
    %v4299 = vpop.f32.mrf.mxu0
    %v4300 = vadd.f32 0.0, %v4299
    %v4301 = vpop.f32.mrf.mxu0
    %v4302 = vpop.f32.mrf.mxu0
    %v4303 = vpop.f32.mrf.mxu0
    %4304 = vdwg.mxu0
    %s4305 = scalar_lea.vmem [#allocation5], 1856
    %v4306 = vld [vmem:[%s4305] sm:$0xf]
    %v4307 = vld [vmem:[%s4305 + $0x4] sm:$0xf]
    %v4308 = vld [vmem:[%s4305 + $0x8] sm:$0xf]
    %v4309 = vld [vmem:[%s4305 + $0xc] sm:$0xf]
    %v4310 = vld [vmem:[%s4305 + $0x10] sm:$0xf]
    %v4311 = vld [vmem:[%s4305 + $0x14] sm:$0xf]
    %v4312 = vld [vmem:[%s4305 + $0x18] sm:$0xf]
    %v4313 = vld [vmem:[%s4305 + $0x1c] sm:$0xf]
    %v4314 = vld [vmem:[%s4305 + $0x20] sm:$0xf]
    %v4315 = vld [vmem:[%s4305 + $0x24] sm:$0xf]
    %v4316 = vld [vmem:[%s4305 + $0x28] sm:$0xf]
    %v4317 = vld [vmem:[%s4305 + $0x2c] sm:$0xf]
    %v4318 = vld [vmem:[%s4305 + $0x30] sm:$0xf]
    %v4319 = vld [vmem:[%s4305 + $0x34] sm:$0xf]
    %v4320 = vld [vmem:[%s4305 + $0x38] sm:$0xf]
    %v4321 = vld [vmem:[%s4305 + $0x3c] sm:$0xf]
    %v4322 = vpack.c.bf16 %v4259, %v4259
    %v4339 = vunpack.c.l.b16 %v4306
    %v4340 = vunpack.c.l.b16 %v4307
    %v4341 = vunpack.c.l.b16 %v4308
    %v4342 = vunpack.c.l.b16 %v4309
    %v4343 = vunpack.c.l.b16 %v4310
    %v4344 = vunpack.c.l.b16 %v4311
    %v4345 = vunpack.c.l.b16 %v4312
    %v4346 = vunpack.c.l.b16 %v4313
    %v4347 = vunpack.c.l.b16 %v4314
    %v4348 = vunpack.c.l.b16 %v4315
    %v4349 = vunpack.c.l.b16 %v4316
    %v4350 = vunpack.c.l.b16 %v4317
    %v4351 = vunpack.c.l.b16 %v4318
    %v4352 = vunpack.c.l.b16 %v4319
    %v4353 = vunpack.c.l.b16 %v4320
    %v4354 = vunpack.c.l.b16 %v4321
    %v4355 = vpack.c.b16 %v4340, %v4339
    %v4356 = vpack.c.b16 %v4342, %v4341
    %v4357 = vpack.c.b16 %v4344, %v4343
    %v4358 = vpack.c.b16 %v4346, %v4345
    %v4359 = vpack.c.b16 %v4348, %v4347
    %v4360 = vpack.c.b16 %v4350, %v4349
    %v4361 = vpack.c.b16 %v4352, %v4351
    %v4362 = vpack.c.b16 %v4354, %v4353
    %4371 = vmatprep.subr.bf16.mxu0 0
    %4372 = vmatpush1.bf16.msra.mxu0 %v4362
    %4373 = vmatprep.subr.bf16.mxu0 0
    %4374 = vmatpush1.bf16.msra.mxu0 %v4361
    %4375 = vmatprep.subr.bf16.mxu0 0
    %4376 = vmatpush1.bf16.msra.mxu0 %v4360
    %4377 = vmatprep.subr.bf16.mxu0 0
    %4378 = vmatpush1.bf16.msra.mxu0 %v4359
    %4379 = vmatprep.subr.bf16.mxu0 0
    %4380 = vmatpush1.bf16.msra.mxu0 %v4358
    %4381 = vmatprep.subr.bf16.mxu0 0
    %4382 = vmatpush1.bf16.msra.mxu0 %v4357
    %4383 = vmatprep.subr.bf16.mxu0 0
    %4384 = vmatpush1.bf16.msra.mxu0 %v4356
    %4385 = vmatprep.subr.bf16.mxu0 0
    %4386 = vmatpush1.bf16.msra.mxu0 %v4355
    %4387 = vmatprep.subr.bf16.mxu0 0
    %4388 = vmatpush2.bf16.msra.mxu0 0
    %4389 = vmatprep.subr.bf16.mxu0 0
    %4390 = vmatpush2.bf16.msra.mxu0 0
    %4391 = vmatprep.subr.bf16.mxu0 0
    %4392 = vmatpush2.bf16.msra.mxu0 0
    %4393 = vmatprep.subr.bf16.mxu0 0
    %4394 = vmatpush2.bf16.msra.mxu0 0
    %4395 = vmatprep.subr.bf16.mxu0 0
    %4396 = vmatpush2.bf16.msra.mxu0 0
    %4397 = vmatprep.subr.bf16.mxu0 0
    %4398 = vmatpush2.bf16.msra.mxu0 0
    %4399 = vmatprep.subr.bf16.mxu0 0
    %4400 = vmatpush2.bf16.msra.mxu0 0
    %4401 = vmatprep.subr.bf16.mxu0 0
    %4402 = vmatpush2.bf16.msra.mxu0 0
    %4403 = vmatprep.mubr.bf16.mxu0 0
    %4404 = vmatmul.mubr.bf16.gmra.mxu0 %v4322
    %v4405 = vpop.f32.mrf.mxu0
    %v4406 = vadd.f32 0.0, %v4405
    %v4407 = vpop.f32.mrf.mxu0
    %v4408 = vpop.f32.mrf.mxu0
    %v4409 = vpop.f32.mrf.mxu0
    %4410 = vdwg.mxu0
    %v4411 = vpack.c.bf16 %v4300, %v4300
    %4412 = vmatprep.subr.bf16.mxu0 0
    %4413 = vmatpush1.bf16.msra.mxu0 %v4362
    %4414 = vmatprep.subr.bf16.mxu0 0
    %4415 = vmatpush1.bf16.msra.mxu0 %v4361
    %4416 = vmatprep.subr.bf16.mxu0 0
    %4417 = vmatpush1.bf16.msra.mxu0 %v4360
    %4418 = vmatprep.subr.bf16.mxu0 0
    %4419 = vmatpush1.bf16.msra.mxu0 %v4359
    %4420 = vmatprep.subr.bf16.mxu0 0
    %4421 = vmatpush1.bf16.msra.mxu0 %v4358
    %4422 = vmatprep.subr.bf16.mxu0 0
    %4423 = vmatpush1.bf16.msra.mxu0 %v4357
    %4424 = vmatprep.subr.bf16.mxu0 0
    %4425 = vmatpush1.bf16.msra.mxu0 %v4356
    %4426 = vmatprep.subr.bf16.mxu0 0
    %4427 = vmatpush1.bf16.msra.mxu0 %v4355
    %4428 = vmatprep.subr.bf16.mxu0 0
    %4429 = vmatpush2.bf16.msra.mxu0 0
    %4430 = vmatprep.subr.bf16.mxu0 0
    %4431 = vmatpush2.bf16.msra.mxu0 0
    %4432 = vmatprep.subr.bf16.mxu0 0
    %4433 = vmatpush2.bf16.msra.mxu0 0
    %4434 = vmatprep.subr.bf16.mxu0 0
    %4435 = vmatpush2.bf16.msra.mxu0 0
    %4436 = vmatprep.subr.bf16.mxu0 0
    %4437 = vmatpush2.bf16.msra.mxu0 0
    %4438 = vmatprep.subr.bf16.mxu0 0
    %4439 = vmatpush2.bf16.msra.mxu0 0
    %4440 = vmatprep.subr.bf16.mxu0 0
    %4441 = vmatpush2.bf16.msra.mxu0 0
    %4442 = vmatprep.subr.bf16.mxu0 0
    %4443 = vmatpush2.bf16.msra.mxu0 0
    %4444 = vmatprep.mubr.bf16.mxu0 0
    %4445 = vmatmul.mubr.bf16.gmra.mxu0 %v4411
    %v4446 = vpop.f32.mrf.mxu0
    %v4447 = vadd.f32 0.0, %v4446
    %v4448 = vpop.f32.mrf.mxu0
    %v4449 = vpop.f32.mrf.mxu0
    %v4450 = vpop.f32.mrf.mxu0
    %4451 = vdwg.mxu0
    %s4452 = scalar_lea.vmem [#allocation5], 1920
    %v4453 = vld [vmem:[%s4452] sm:$0xf]
    %v4454 = vld [vmem:[%s4452 + $0x4] sm:$0xf]
    %v4455 = vld [vmem:[%s4452 + $0x8] sm:$0xf]
    %v4456 = vld [vmem:[%s4452 + $0xc] sm:$0xf]
    %v4457 = vld [vmem:[%s4452 + $0x10] sm:$0xf]
    %v4458 = vld [vmem:[%s4452 + $0x14] sm:$0xf]
    %v4459 = vld [vmem:[%s4452 + $0x18] sm:$0xf]
    %v4460 = vld [vmem:[%s4452 + $0x1c] sm:$0xf]
    %v4461 = vld [vmem:[%s4452 + $0x20] sm:$0xf]
    %v4462 = vld [vmem:[%s4452 + $0x24] sm:$0xf]
    %v4463 = vld [vmem:[%s4452 + $0x28] sm:$0xf]
    %v4464 = vld [vmem:[%s4452 + $0x2c] sm:$0xf]
    %v4465 = vld [vmem:[%s4452 + $0x30] sm:$0xf]
    %v4466 = vld [vmem:[%s4452 + $0x34] sm:$0xf]
    %v4467 = vld [vmem:[%s4452 + $0x38] sm:$0xf]
    %v4468 = vld [vmem:[%s4452 + $0x3c] sm:$0xf]
    %v4469 = vpack.c.bf16 %v4406, %v4406
    %v4486 = vunpack.c.l.b16 %v4453
    %v4487 = vunpack.c.l.b16 %v4454
    %v4488 = vunpack.c.l.b16 %v4455
    %v4489 = vunpack.c.l.b16 %v4456
    %v4490 = vunpack.c.l.b16 %v4457
    %v4491 = vunpack.c.l.b16 %v4458
    %v4492 = vunpack.c.l.b16 %v4459
    %v4493 = vunpack.c.l.b16 %v4460
    %v4494 = vunpack.c.l.b16 %v4461
    %v4495 = vunpack.c.l.b16 %v4462
    %v4496 = vunpack.c.l.b16 %v4463
    %v4497 = vunpack.c.l.b16 %v4464
    %v4498 = vunpack.c.l.b16 %v4465
    %v4499 = vunpack.c.l.b16 %v4466
    %v4500 = vunpack.c.l.b16 %v4467
    %v4501 = vunpack.c.l.b16 %v4468
    %v4502 = vpack.c.b16 %v4487, %v4486
    %v4503 = vpack.c.b16 %v4489, %v4488
    %v4504 = vpack.c.b16 %v4491, %v4490
    %v4505 = vpack.c.b16 %v4493, %v4492
    %v4506 = vpack.c.b16 %v4495, %v4494
    %v4507 = vpack.c.b16 %v4497, %v4496
    %v4508 = vpack.c.b16 %v4499, %v4498
    %v4509 = vpack.c.b16 %v4501, %v4500
    %4518 = vmatprep.subr.bf16.mxu0 0
    %4519 = vmatpush1.bf16.msra.mxu0 %v4509
    %4520 = vmatprep.subr.bf16.mxu0 0
    %4521 = vmatpush1.bf16.msra.mxu0 %v4508
    %4522 = vmatprep.subr.bf16.mxu0 0
    %4523 = vmatpush1.bf16.msra.mxu0 %v4507
    %4524 = vmatprep.subr.bf16.mxu0 0
    %4525 = vmatpush1.bf16.msra.mxu0 %v4506
    %4526 = vmatprep.subr.bf16.mxu0 0
    %4527 = vmatpush1.bf16.msra.mxu0 %v4505
    %4528 = vmatprep.subr.bf16.mxu0 0
    %4529 = vmatpush1.bf16.msra.mxu0 %v4504
    %4530 = vmatprep.subr.bf16.mxu0 0
    %4531 = vmatpush1.bf16.msra.mxu0 %v4503
    %4532 = vmatprep.subr.bf16.mxu0 0
    %4533 = vmatpush1.bf16.msra.mxu0 %v4502
    %4534 = vmatprep.subr.bf16.mxu0 0
    %4535 = vmatpush2.bf16.msra.mxu0 0
    %4536 = vmatprep.subr.bf16.mxu0 0
    %4537 = vmatpush2.bf16.msra.mxu0 0
    %4538 = vmatprep.subr.bf16.mxu0 0
    %4539 = vmatpush2.bf16.msra.mxu0 0
    %4540 = vmatprep.subr.bf16.mxu0 0
    %4541 = vmatpush2.bf16.msra.mxu0 0
    %4542 = vmatprep.subr.bf16.mxu0 0
    %4543 = vmatpush2.bf16.msra.mxu0 0
    %4544 = vmatprep.subr.bf16.mxu0 0
    %4545 = vmatpush2.bf16.msra.mxu0 0
    %4546 = vmatprep.subr.bf16.mxu0 0
    %4547 = vmatpush2.bf16.msra.mxu0 0
    %4548 = vmatprep.subr.bf16.mxu0 0
    %4549 = vmatpush2.bf16.msra.mxu0 0
    %4550 = vmatprep.mubr.bf16.mxu0 0
    %4551 = vmatmul.mubr.bf16.gmra.mxu0 %v4469
    %v4552 = vpop.f32.mrf.mxu0
    %v4553 = vadd.f32 0.0, %v4552
    %v4554 = vpop.f32.mrf.mxu0
    %v4555 = vpop.f32.mrf.mxu0
    %v4556 = vpop.f32.mrf.mxu0
    %4557 = vdwg.mxu0
    %v4558 = vpack.c.bf16 %v4447, %v4447
    %4559 = vmatprep.subr.bf16.mxu0 0
    %4560 = vmatpush1.bf16.msra.mxu0 %v4509
    %4561 = vmatprep.subr.bf16.mxu0 0
    %4562 = vmatpush1.bf16.msra.mxu0 %v4508
    %4563 = vmatprep.subr.bf16.mxu0 0
    %4564 = vmatpush1.bf16.msra.mxu0 %v4507
    %4565 = vmatprep.subr.bf16.mxu0 0
    %4566 = vmatpush1.bf16.msra.mxu0 %v4506
    %4567 = vmatprep.subr.bf16.mxu0 0
    %4568 = vmatpush1.bf16.msra.mxu0 %v4505
    %4569 = vmatprep.subr.bf16.mxu0 0
    %4570 = vmatpush1.bf16.msra.mxu0 %v4504
    %4571 = vmatprep.subr.bf16.mxu0 0
    %4572 = vmatpush1.bf16.msra.mxu0 %v4503
    %4573 = vmatprep.subr.bf16.mxu0 0
    %4574 = vmatpush1.bf16.msra.mxu0 %v4502
    %4575 = vmatprep.subr.bf16.mxu0 0
    %4576 = vmatpush2.bf16.msra.mxu0 0
    %4577 = vmatprep.subr.bf16.mxu0 0
    %4578 = vmatpush2.bf16.msra.mxu0 0
    %4579 = vmatprep.subr.bf16.mxu0 0
    %4580 = vmatpush2.bf16.msra.mxu0 0
    %4581 = vmatprep.subr.bf16.mxu0 0
    %4582 = vmatpush2.bf16.msra.mxu0 0
    %4583 = vmatprep.subr.bf16.mxu0 0
    %4584 = vmatpush2.bf16.msra.mxu0 0
    %4585 = vmatprep.subr.bf16.mxu0 0
    %4586 = vmatpush2.bf16.msra.mxu0 0
    %4587 = vmatprep.subr.bf16.mxu0 0
    %4588 = vmatpush2.bf16.msra.mxu0 0
    %4589 = vmatprep.subr.bf16.mxu0 0
    %4590 = vmatpush2.bf16.msra.mxu0 0
    %4591 = vmatprep.mubr.bf16.mxu0 0
    %4592 = vmatmul.mubr.bf16.gmra.mxu0 %v4558
    %v4593 = vpop.f32.mrf.mxu0
    %v4594 = vadd.f32 0.0, %v4593
    %v4595 = vpop.f32.mrf.mxu0
    %v4596 = vpop.f32.mrf.mxu0
    %v4597 = vpop.f32.mrf.mxu0
    %4598 = vdwg.mxu0
    %s4599 = scalar_lea.vmem [#allocation5], 1984
    %v4600 = vld [vmem:[%s4599] sm:$0xf]
    %v4601 = vld [vmem:[%s4599 + $0x4] sm:$0xf]
    %v4602 = vld [vmem:[%s4599 + $0x8] sm:$0xf]
    %v4603 = vld [vmem:[%s4599 + $0xc] sm:$0xf]
    %v4604 = vld [vmem:[%s4599 + $0x10] sm:$0xf]
    %v4605 = vld [vmem:[%s4599 + $0x14] sm:$0xf]
    %v4606 = vld [vmem:[%s4599 + $0x18] sm:$0xf]
    %v4607 = vld [vmem:[%s4599 + $0x1c] sm:$0xf]
    %v4608 = vld [vmem:[%s4599 + $0x20] sm:$0xf]
    %v4609 = vld [vmem:[%s4599 + $0x24] sm:$0xf]
    %v4610 = vld [vmem:[%s4599 + $0x28] sm:$0xf]
    %v4611 = vld [vmem:[%s4599 + $0x2c] sm:$0xf]
    %v4612 = vld [vmem:[%s4599 + $0x30] sm:$0xf]
    %v4613 = vld [vmem:[%s4599 + $0x34] sm:$0xf]
    %v4614 = vld [vmem:[%s4599 + $0x38] sm:$0xf]
    %v4615 = vld [vmem:[%s4599 + $0x3c] sm:$0xf]
    %v4616 = vpack.c.bf16 %v4553, %v4553
    %v4633 = vunpack.c.l.b16 %v4600
    %v4634 = vunpack.c.l.b16 %v4601
    %v4635 = vunpack.c.l.b16 %v4602
    %v4636 = vunpack.c.l.b16 %v4603
    %v4637 = vunpack.c.l.b16 %v4604
    %v4638 = vunpack.c.l.b16 %v4605
    %v4639 = vunpack.c.l.b16 %v4606
    %v4640 = vunpack.c.l.b16 %v4607
    %v4641 = vunpack.c.l.b16 %v4608
    %v4642 = vunpack.c.l.b16 %v4609
    %v4643 = vunpack.c.l.b16 %v4610
    %v4644 = vunpack.c.l.b16 %v4611
    %v4645 = vunpack.c.l.b16 %v4612
    %v4646 = vunpack.c.l.b16 %v4613
    %v4647 = vunpack.c.l.b16 %v4614
    %v4648 = vunpack.c.l.b16 %v4615
    %v4649 = vpack.c.b16 %v4634, %v4633
    %v4650 = vpack.c.b16 %v4636, %v4635
    %v4651 = vpack.c.b16 %v4638, %v4637
    %v4652 = vpack.c.b16 %v4640, %v4639
    %v4653 = vpack.c.b16 %v4642, %v4641
    %v4654 = vpack.c.b16 %v4644, %v4643
    %v4655 = vpack.c.b16 %v4646, %v4645
    %v4656 = vpack.c.b16 %v4648, %v4647
    %4665 = vmatprep.subr.bf16.mxu0 0
    %4666 = vmatpush1.bf16.msra.mxu0 %v4656
    %4667 = vmatprep.subr.bf16.mxu0 0
    %4668 = vmatpush1.bf16.msra.mxu0 %v4655
    %4669 = vmatprep.subr.bf16.mxu0 0
    %4670 = vmatpush1.bf16.msra.mxu0 %v4654
    %4671 = vmatprep.subr.bf16.mxu0 0
    %4672 = vmatpush1.bf16.msra.mxu0 %v4653
    %4673 = vmatprep.subr.bf16.mxu0 0
    %4674 = vmatpush1.bf16.msra.mxu0 %v4652
    %4675 = vmatprep.subr.bf16.mxu0 0
    %4676 = vmatpush1.bf16.msra.mxu0 %v4651
    %4677 = vmatprep.subr.bf16.mxu0 0
    %4678 = vmatpush1.bf16.msra.mxu0 %v4650
    %4679 = vmatprep.subr.bf16.mxu0 0
    %4680 = vmatpush1.bf16.msra.mxu0 %v4649
    %4681 = vmatprep.subr.bf16.mxu0 0
    %4682 = vmatpush2.bf16.msra.mxu0 0
    %4683 = vmatprep.subr.bf16.mxu0 0
    %4684 = vmatpush2.bf16.msra.mxu0 0
    %4685 = vmatprep.subr.bf16.mxu0 0
    %4686 = vmatpush2.bf16.msra.mxu0 0
    %4687 = vmatprep.subr.bf16.mxu0 0
    %4688 = vmatpush2.bf16.msra.mxu0 0
    %4689 = vmatprep.subr.bf16.mxu0 0
    %4690 = vmatpush2.bf16.msra.mxu0 0
    %4691 = vmatprep.subr.bf16.mxu0 0
    %4692 = vmatpush2.bf16.msra.mxu0 0
    %4693 = vmatprep.subr.bf16.mxu0 0
    %4694 = vmatpush2.bf16.msra.mxu0 0
    %4695 = vmatprep.subr.bf16.mxu0 0
    %4696 = vmatpush2.bf16.msra.mxu0 0
    %4697 = vmatprep.mubr.bf16.mxu0 0
    %4698 = vmatmul.mubr.bf16.gmra.mxu0 %v4616
    %v4699 = vpop.f32.mrf.mxu0
    %v4700 = vadd.f32 0.0, %v4699
    %v4701 = vpop.f32.mrf.mxu0
    %v4702 = vpop.f32.mrf.mxu0
    %v4703 = vpop.f32.mrf.mxu0
    %4704 = vdwg.mxu0
    %v4705 = vpack.c.bf16 %v4594, %v4594
    %4706 = vmatprep.subr.bf16.mxu0 0
    %4707 = vmatpush1.bf16.msra.mxu0 %v4656
    %4708 = vmatprep.subr.bf16.mxu0 0
    %4709 = vmatpush1.bf16.msra.mxu0 %v4655
    %4710 = vmatprep.subr.bf16.mxu0 0
    %4711 = vmatpush1.bf16.msra.mxu0 %v4654
    %4712 = vmatprep.subr.bf16.mxu0 0
    %4713 = vmatpush1.bf16.msra.mxu0 %v4653
    %4714 = vmatprep.subr.bf16.mxu0 0
    %4715 = vmatpush1.bf16.msra.mxu0 %v4652
    %4716 = vmatprep.subr.bf16.mxu0 0
    %4717 = vmatpush1.bf16.msra.mxu0 %v4651
    %4718 = vmatprep.subr.bf16.mxu0 0
    %4719 = vmatpush1.bf16.msra.mxu0 %v4650
    %4720 = vmatprep.subr.bf16.mxu0 0
    %4721 = vmatpush1.bf16.msra.mxu0 %v4649
    %4722 = vmatprep.subr.bf16.mxu0 0
    %4723 = vmatpush2.bf16.msra.mxu0 0
    %4724 = vmatprep.subr.bf16.mxu0 0
    %4725 = vmatpush2.bf16.msra.mxu0 0
    %4726 = vmatprep.subr.bf16.mxu0 0
    %4727 = vmatpush2.bf16.msra.mxu0 0
    %4728 = vmatprep.subr.bf16.mxu0 0
    %4729 = vmatpush2.bf16.msra.mxu0 0
    %4730 = vmatprep.subr.bf16.mxu0 0
    %4731 = vmatpush2.bf16.msra.mxu0 0
    %4732 = vmatprep.subr.bf16.mxu0 0
    %4733 = vmatpush2.bf16.msra.mxu0 0
    %4734 = vmatprep.subr.bf16.mxu0 0
    %4735 = vmatpush2.bf16.msra.mxu0 0
    %4736 = vmatprep.subr.bf16.mxu0 0
    %4737 = vmatpush2.bf16.msra.mxu0 0
    %4738 = vmatprep.mubr.bf16.mxu0 0
    %4739 = vmatmul.mubr.bf16.gmra.mxu0 %v4705
    %v4740 = vpop.f32.mrf.mxu0
    %v4741 = vadd.f32 0.0, %v4740
    %v4742 = vpop.f32.mrf.mxu0
    %v4743 = vpop.f32.mrf.mxu0
    %v4744 = vpop.f32.mrf.mxu0
    %4745 = vdwg.mxu0
    %s4746 = scalar_lea.vmem [#allocation5], 2048
    %v4747 = vld [vmem:[%s4746] sm:$0xf]
    %v4748 = vld [vmem:[%s4746 + $0x4] sm:$0xf]
    %v4749 = vld [vmem:[%s4746 + $0x8] sm:$0xf]
    %v4750 = vld [vmem:[%s4746 + $0xc] sm:$0xf]
    %v4751 = vld [vmem:[%s4746 + $0x10] sm:$0xf]
    %v4752 = vld [vmem:[%s4746 + $0x14] sm:$0xf]
    %v4753 = vld [vmem:[%s4746 + $0x18] sm:$0xf]
    %v4754 = vld [vmem:[%s4746 + $0x1c] sm:$0xf]
    %v4755 = vld [vmem:[%s4746 + $0x20] sm:$0xf]
    %v4756 = vld [vmem:[%s4746 + $0x24] sm:$0xf]
    %v4757 = vld [vmem:[%s4746 + $0x28] sm:$0xf]
    %v4758 = vld [vmem:[%s4746 + $0x2c] sm:$0xf]
    %v4759 = vld [vmem:[%s4746 + $0x30] sm:$0xf]
    %v4760 = vld [vmem:[%s4746 + $0x34] sm:$0xf]
    %v4761 = vld [vmem:[%s4746 + $0x38] sm:$0xf]
    %v4762 = vld [vmem:[%s4746 + $0x3c] sm:$0xf]
    %v4763 = vpack.c.bf16 %v4700, %v4700
    %v4780 = vunpack.c.l.b16 %v4747
    %v4781 = vunpack.c.l.b16 %v4748
    %v4782 = vunpack.c.l.b16 %v4749
    %v4783 = vunpack.c.l.b16 %v4750
    %v4784 = vunpack.c.l.b16 %v4751
    %v4785 = vunpack.c.l.b16 %v4752
    %v4786 = vunpack.c.l.b16 %v4753
    %v4787 = vunpack.c.l.b16 %v4754
    %v4788 = vunpack.c.l.b16 %v4755
    %v4789 = vunpack.c.l.b16 %v4756
    %v4790 = vunpack.c.l.b16 %v4757
    %v4791 = vunpack.c.l.b16 %v4758
    %v4792 = vunpack.c.l.b16 %v4759
    %v4793 = vunpack.c.l.b16 %v4760
    %v4794 = vunpack.c.l.b16 %v4761
    %v4795 = vunpack.c.l.b16 %v4762
    %v4796 = vpack.c.b16 %v4781, %v4780
    %v4797 = vpack.c.b16 %v4783, %v4782
    %v4798 = vpack.c.b16 %v4785, %v4784
    %v4799 = vpack.c.b16 %v4787, %v4786
    %v4800 = vpack.c.b16 %v4789, %v4788
    %v4801 = vpack.c.b16 %v4791, %v4790
    %v4802 = vpack.c.b16 %v4793, %v4792
    %v4803 = vpack.c.b16 %v4795, %v4794
    %4812 = vmatprep.subr.bf16.mxu0 0
    %4813 = vmatpush1.bf16.msra.mxu0 %v4803
    %4814 = vmatprep.subr.bf16.mxu0 0
    %4815 = vmatpush1.bf16.msra.mxu0 %v4802
    %4816 = vmatprep.subr.bf16.mxu0 0
    %4817 = vmatpush1.bf16.msra.mxu0 %v4801
    %4818 = vmatprep.subr.bf16.mxu0 0
    %4819 = vmatpush1.bf16.msra.mxu0 %v4800
    %4820 = vmatprep.subr.bf16.mxu0 0
    %4821 = vmatpush1.bf16.msra.mxu0 %v4799
    %4822 = vmatprep.subr.bf16.mxu0 0
    %4823 = vmatpush1.bf16.msra.mxu0 %v4798
    %4824 = vmatprep.subr.bf16.mxu0 0
    %4825 = vmatpush1.bf16.msra.mxu0 %v4797
    %4826 = vmatprep.subr.bf16.mxu0 0
    %4827 = vmatpush1.bf16.msra.mxu0 %v4796
    %4828 = vmatprep.subr.bf16.mxu0 0
    %4829 = vmatpush2.bf16.msra.mxu0 0
    %4830 = vmatprep.subr.bf16.mxu0 0
    %4831 = vmatpush2.bf16.msra.mxu0 0
    %4832 = vmatprep.subr.bf16.mxu0 0
    %4833 = vmatpush2.bf16.msra.mxu0 0
    %4834 = vmatprep.subr.bf16.mxu0 0
    %4835 = vmatpush2.bf16.msra.mxu0 0
    %4836 = vmatprep.subr.bf16.mxu0 0
    %4837 = vmatpush2.bf16.msra.mxu0 0
    %4838 = vmatprep.subr.bf16.mxu0 0
    %4839 = vmatpush2.bf16.msra.mxu0 0
    %4840 = vmatprep.subr.bf16.mxu0 0
    %4841 = vmatpush2.bf16.msra.mxu0 0
    %4842 = vmatprep.subr.bf16.mxu0 0
    %4843 = vmatpush2.bf16.msra.mxu0 0
    %4844 = vmatprep.mubr.bf16.mxu0 0
    %4845 = vmatmul.mubr.bf16.gmra.mxu0 %v4763
    %v4846 = vpop.f32.mrf.mxu0
    %v4847 = vadd.f32 0.0, %v4846
    %v4848 = vpop.f32.mrf.mxu0
    %v4849 = vpop.f32.mrf.mxu0
    %v4850 = vpop.f32.mrf.mxu0
    %4851 = vdwg.mxu0
    %v4852 = vpack.c.bf16 %v4741, %v4741
    %4853 = vmatprep.subr.bf16.mxu0 0
    %4854 = vmatpush1.bf16.msra.mxu0 %v4803
    %4855 = vmatprep.subr.bf16.mxu0 0
    %4856 = vmatpush1.bf16.msra.mxu0 %v4802
    %4857 = vmatprep.subr.bf16.mxu0 0
    %4858 = vmatpush1.bf16.msra.mxu0 %v4801
    %4859 = vmatprep.subr.bf16.mxu0 0
    %4860 = vmatpush1.bf16.msra.mxu0 %v4800
    %4861 = vmatprep.subr.bf16.mxu0 0
    %4862 = vmatpush1.bf16.msra.mxu0 %v4799
    %4863 = vmatprep.subr.bf16.mxu0 0
    %4864 = vmatpush1.bf16.msra.mxu0 %v4798
    %4865 = vmatprep.subr.bf16.mxu0 0
    %4866 = vmatpush1.bf16.msra.mxu0 %v4797
    %4867 = vmatprep.subr.bf16.mxu0 0
    %4868 = vmatpush1.bf16.msra.mxu0 %v4796
    %4869 = vmatprep.subr.bf16.mxu0 0
    %4870 = vmatpush2.bf16.msra.mxu0 0
    %4871 = vmatprep.subr.bf16.mxu0 0
    %4872 = vmatpush2.bf16.msra.mxu0 0
    %4873 = vmatprep.subr.bf16.mxu0 0
    %4874 = vmatpush2.bf16.msra.mxu0 0
    %4875 = vmatprep.subr.bf16.mxu0 0
    %4876 = vmatpush2.bf16.msra.mxu0 0
    %4877 = vmatprep.subr.bf16.mxu0 0
    %4878 = vmatpush2.bf16.msra.mxu0 0
    %4879 = vmatprep.subr.bf16.mxu0 0
    %4880 = vmatpush2.bf16.msra.mxu0 0
    %4881 = vmatprep.subr.bf16.mxu0 0
    %4882 = vmatpush2.bf16.msra.mxu0 0
    %4883 = vmatprep.subr.bf16.mxu0 0
    %4884 = vmatpush2.bf16.msra.mxu0 0
    %4885 = vmatprep.mubr.bf16.mxu0 0
    %4886 = vmatmul.mubr.bf16.gmra.mxu0 %v4852
    %v4887 = vpop.f32.mrf.mxu0
    %v4888 = vadd.f32 0.0, %v4887
    %v4889 = vpop.f32.mrf.mxu0
    %v4890 = vpop.f32.mrf.mxu0
    %v4891 = vpop.f32.mrf.mxu0
    %4892 = vdwg.mxu0
    %s4893 = scalar_lea.vmem [#allocation5], 2112
    %v4894 = vld [vmem:[%s4893] sm:$0xf]
    %v4895 = vld [vmem:[%s4893 + $0x4] sm:$0xf]
    %v4896 = vld [vmem:[%s4893 + $0x8] sm:$0xf]
    %v4897 = vld [vmem:[%s4893 + $0xc] sm:$0xf]
    %v4898 = vld [vmem:[%s4893 + $0x10] sm:$0xf]
    %v4899 = vld [vmem:[%s4893 + $0x14] sm:$0xf]
    %v4900 = vld [vmem:[%s4893 + $0x18] sm:$0xf]
    %v4901 = vld [vmem:[%s4893 + $0x1c] sm:$0xf]
    %v4902 = vld [vmem:[%s4893 + $0x20] sm:$0xf]
    %v4903 = vld [vmem:[%s4893 + $0x24] sm:$0xf]
    %v4904 = vld [vmem:[%s4893 + $0x28] sm:$0xf]
    %v4905 = vld [vmem:[%s4893 + $0x2c] sm:$0xf]
    %v4906 = vld [vmem:[%s4893 + $0x30] sm:$0xf]
    %v4907 = vld [vmem:[%s4893 + $0x34] sm:$0xf]
    %v4908 = vld [vmem:[%s4893 + $0x38] sm:$0xf]
    %v4909 = vld [vmem:[%s4893 + $0x3c] sm:$0xf]
    %v4910 = vpack.c.bf16 %v4847, %v4847
    %v4927 = vunpack.c.l.b16 %v4894
    %v4928 = vunpack.c.l.b16 %v4895
    %v4929 = vunpack.c.l.b16 %v4896
    %v4930 = vunpack.c.l.b16 %v4897
    %v4931 = vunpack.c.l.b16 %v4898
    %v4932 = vunpack.c.l.b16 %v4899
    %v4933 = vunpack.c.l.b16 %v4900
    %v4934 = vunpack.c.l.b16 %v4901
    %v4935 = vunpack.c.l.b16 %v4902
    %v4936 = vunpack.c.l.b16 %v4903
    %v4937 = vunpack.c.l.b16 %v4904
    %v4938 = vunpack.c.l.b16 %v4905
    %v4939 = vunpack.c.l.b16 %v4906
    %v4940 = vunpack.c.l.b16 %v4907
    %v4941 = vunpack.c.l.b16 %v4908
    %v4942 = vunpack.c.l.b16 %v4909
    %v4943 = vpack.c.b16 %v4928, %v4927
    %v4944 = vpack.c.b16 %v4930, %v4929
    %v4945 = vpack.c.b16 %v4932, %v4931
    %v4946 = vpack.c.b16 %v4934, %v4933
    %v4947 = vpack.c.b16 %v4936, %v4935
    %v4948 = vpack.c.b16 %v4938, %v4937
    %v4949 = vpack.c.b16 %v4940, %v4939
    %v4950 = vpack.c.b16 %v4942, %v4941
    %4959 = vmatprep.subr.bf16.mxu0 0
    %4960 = vmatpush1.bf16.msra.mxu0 %v4950
    %4961 = vmatprep.subr.bf16.mxu0 0
    %4962 = vmatpush1.bf16.msra.mxu0 %v4949
    %4963 = vmatprep.subr.bf16.mxu0 0
    %4964 = vmatpush1.bf16.msra.mxu0 %v4948
    %4965 = vmatprep.subr.bf16.mxu0 0
    %4966 = vmatpush1.bf16.msra.mxu0 %v4947
    %4967 = vmatprep.subr.bf16.mxu0 0
    %4968 = vmatpush1.bf16.msra.mxu0 %v4946
    %4969 = vmatprep.subr.bf16.mxu0 0
    %4970 = vmatpush1.bf16.msra.mxu0 %v4945
    %4971 = vmatprep.subr.bf16.mxu0 0
    %4972 = vmatpush1.bf16.msra.mxu0 %v4944
    %4973 = vmatprep.subr.bf16.mxu0 0
    %4974 = vmatpush1.bf16.msra.mxu0 %v4943
    %4975 = vmatprep.subr.bf16.mxu0 0
    %4976 = vmatpush2.bf16.msra.mxu0 0
    %4977 = vmatprep.subr.bf16.mxu0 0
    %4978 = vmatpush2.bf16.msra.mxu0 0
    %4979 = vmatprep.subr.bf16.mxu0 0
    %4980 = vmatpush2.bf16.msra.mxu0 0
    %4981 = vmatprep.subr.bf16.mxu0 0
    %4982 = vmatpush2.bf16.msra.mxu0 0
    %4983 = vmatprep.subr.bf16.mxu0 0
    %4984 = vmatpush2.bf16.msra.mxu0 0
    %4985 = vmatprep.subr.bf16.mxu0 0
    %4986 = vmatpush2.bf16.msra.mxu0 0
    %4987 = vmatprep.subr.bf16.mxu0 0
    %4988 = vmatpush2.bf16.msra.mxu0 0
    %4989 = vmatprep.subr.bf16.mxu0 0
    %4990 = vmatpush2.bf16.msra.mxu0 0
    %4991 = vmatprep.mubr.bf16.mxu0 0
    %4992 = vmatmul.mubr.bf16.gmra.mxu0 %v4910
    %v4993 = vpop.f32.mrf.mxu0
    %v4994 = vadd.f32 0.0, %v4993
    %v4995 = vpop.f32.mrf.mxu0
    %v4996 = vpop.f32.mrf.mxu0
    %v4997 = vpop.f32.mrf.mxu0
    %4998 = vdwg.mxu0
    %v4999 = vpack.c.bf16 %v4888, %v4888
    %5000 = vmatprep.subr.bf16.mxu0 0
    %5001 = vmatpush1.bf16.msra.mxu0 %v4950
    %5002 = vmatprep.subr.bf16.mxu0 0
    %5003 = vmatpush1.bf16.msra.mxu0 %v4949
    %5004 = vmatprep.subr.bf16.mxu0 0
    %5005 = vmatpush1.bf16.msra.mxu0 %v4948
    %5006 = vmatprep.subr.bf16.mxu0 0
    %5007 = vmatpush1.bf16.msra.mxu0 %v4947
    %5008 = vmatprep.subr.bf16.mxu0 0
    %5009 = vmatpush1.bf16.msra.mxu0 %v4946
    %5010 = vmatprep.subr.bf16.mxu0 0
    %5011 = vmatpush1.bf16.msra.mxu0 %v4945
    %5012 = vmatprep.subr.bf16.mxu0 0
    %5013 = vmatpush1.bf16.msra.mxu0 %v4944
    %5014 = vmatprep.subr.bf16.mxu0 0
    %5015 = vmatpush1.bf16.msra.mxu0 %v4943
    %5016 = vmatprep.subr.bf16.mxu0 0
    %5017 = vmatpush2.bf16.msra.mxu0 0
    %5018 = vmatprep.subr.bf16.mxu0 0
    %5019 = vmatpush2.bf16.msra.mxu0 0
    %5020 = vmatprep.subr.bf16.mxu0 0
    %5021 = vmatpush2.bf16.msra.mxu0 0
    %5022 = vmatprep.subr.bf16.mxu0 0
    %5023 = vmatpush2.bf16.msra.mxu0 0
    %5024 = vmatprep.subr.bf16.mxu0 0
    %5025 = vmatpush2.bf16.msra.mxu0 0
    %5026 = vmatprep.subr.bf16.mxu0 0
    %5027 = vmatpush2.bf16.msra.mxu0 0
    %5028 = vmatprep.subr.bf16.mxu0 0
    %5029 = vmatpush2.bf16.msra.mxu0 0
    %5030 = vmatprep.subr.bf16.mxu0 0
    %5031 = vmatpush2.bf16.msra.mxu0 0
    %5032 = vmatprep.mubr.bf16.mxu0 0
    %5033 = vmatmul.mubr.bf16.gmra.mxu0 %v4999
    %v5034 = vpop.f32.mrf.mxu0
    %v5035 = vadd.f32 0.0, %v5034
    %v5036 = vpop.f32.mrf.mxu0
    %v5037 = vpop.f32.mrf.mxu0
    %v5038 = vpop.f32.mrf.mxu0
    %5039 = vdwg.mxu0
    %s5040 = scalar_lea.vmem [#allocation5], 2176
    %v5041 = vld [vmem:[%s5040] sm:$0xf]
    %v5042 = vld [vmem:[%s5040 + $0x4] sm:$0xf]
    %v5043 = vld [vmem:[%s5040 + $0x8] sm:$0xf]
    %v5044 = vld [vmem:[%s5040 + $0xc] sm:$0xf]
    %v5045 = vld [vmem:[%s5040 + $0x10] sm:$0xf]
    %v5046 = vld [vmem:[%s5040 + $0x14] sm:$0xf]
    %v5047 = vld [vmem:[%s5040 + $0x18] sm:$0xf]
    %v5048 = vld [vmem:[%s5040 + $0x1c] sm:$0xf]
    %v5049 = vld [vmem:[%s5040 + $0x20] sm:$0xf]
    %v5050 = vld [vmem:[%s5040 + $0x24] sm:$0xf]
    %v5051 = vld [vmem:[%s5040 + $0x28] sm:$0xf]
    %v5052 = vld [vmem:[%s5040 + $0x2c] sm:$0xf]
    %v5053 = vld [vmem:[%s5040 + $0x30] sm:$0xf]
    %v5054 = vld [vmem:[%s5040 + $0x34] sm:$0xf]
    %v5055 = vld [vmem:[%s5040 + $0x38] sm:$0xf]
    %v5056 = vld [vmem:[%s5040 + $0x3c] sm:$0xf]
    %v5057 = vpack.c.bf16 %v4994, %v4994
    %v5074 = vunpack.c.l.b16 %v5041
    %v5075 = vunpack.c.l.b16 %v5042
    %v5076 = vunpack.c.l.b16 %v5043
    %v5077 = vunpack.c.l.b16 %v5044
    %v5078 = vunpack.c.l.b16 %v5045
    %v5079 = vunpack.c.l.b16 %v5046
    %v5080 = vunpack.c.l.b16 %v5047
    %v5081 = vunpack.c.l.b16 %v5048
    %v5082 = vunpack.c.l.b16 %v5049
    %v5083 = vunpack.c.l.b16 %v5050
    %v5084 = vunpack.c.l.b16 %v5051
    %v5085 = vunpack.c.l.b16 %v5052
    %v5086 = vunpack.c.l.b16 %v5053
    %v5087 = vunpack.c.l.b16 %v5054
    %v5088 = vunpack.c.l.b16 %v5055
    %v5089 = vunpack.c.l.b16 %v5056
    %v5090 = vpack.c.b16 %v5075, %v5074
    %v5091 = vpack.c.b16 %v5077, %v5076
    %v5092 = vpack.c.b16 %v5079, %v5078
    %v5093 = vpack.c.b16 %v5081, %v5080
    %v5094 = vpack.c.b16 %v5083, %v5082
    %v5095 = vpack.c.b16 %v5085, %v5084
    %v5096 = vpack.c.b16 %v5087, %v5086
    %v5097 = vpack.c.b16 %v5089, %v5088
    %5106 = vmatprep.subr.bf16.mxu0 0
    %5107 = vmatpush1.bf16.msra.mxu0 %v5097
    %5108 = vmatprep.subr.bf16.mxu0 0
    %5109 = vmatpush1.bf16.msra.mxu0 %v5096
    %5110 = vmatprep.subr.bf16.mxu0 0
    %5111 = vmatpush1.bf16.msra.mxu0 %v5095
    %5112 = vmatprep.subr.bf16.mxu0 0
    %5113 = vmatpush1.bf16.msra.mxu0 %v5094
    %5114 = vmatprep.subr.bf16.mxu0 0
    %5115 = vmatpush1.bf16.msra.mxu0 %v5093
    %5116 = vmatprep.subr.bf16.mxu0 0
    %5117 = vmatpush1.bf16.msra.mxu0 %v5092
    %5118 = vmatprep.subr.bf16.mxu0 0
    %5119 = vmatpush1.bf16.msra.mxu0 %v5091
    %5120 = vmatprep.subr.bf16.mxu0 0
    %5121 = vmatpush1.bf16.msra.mxu0 %v5090
    %5122 = vmatprep.subr.bf16.mxu0 0
    %5123 = vmatpush2.bf16.msra.mxu0 0
    %5124 = vmatprep.subr.bf16.mxu0 0
    %5125 = vmatpush2.bf16.msra.mxu0 0
    %5126 = vmatprep.subr.bf16.mxu0 0
    %5127 = vmatpush2.bf16.msra.mxu0 0
    %5128 = vmatprep.subr.bf16.mxu0 0
    %5129 = vmatpush2.bf16.msra.mxu0 0
    %5130 = vmatprep.subr.bf16.mxu0 0
    %5131 = vmatpush2.bf16.msra.mxu0 0
    %5132 = vmatprep.subr.bf16.mxu0 0
    %5133 = vmatpush2.bf16.msra.mxu0 0
    %5134 = vmatprep.subr.bf16.mxu0 0
    %5135 = vmatpush2.bf16.msra.mxu0 0
    %5136 = vmatprep.subr.bf16.mxu0 0
    %5137 = vmatpush2.bf16.msra.mxu0 0
    %5138 = vmatprep.mubr.bf16.mxu0 0
    %5139 = vmatmul.mubr.bf16.gmra.mxu0 %v5057
    %v5140 = vpop.f32.mrf.mxu0
    %v5141 = vadd.f32 0.0, %v5140
    %v5142 = vpop.f32.mrf.mxu0
    %v5143 = vpop.f32.mrf.mxu0
    %v5144 = vpop.f32.mrf.mxu0
    %5145 = vdwg.mxu0
    %v5146 = vpack.c.bf16 %v5035, %v5035
    %5147 = vmatprep.subr.bf16.mxu0 0
    %5148 = vmatpush1.bf16.msra.mxu0 %v5097
    %5149 = vmatprep.subr.bf16.mxu0 0
    %5150 = vmatpush1.bf16.msra.mxu0 %v5096
    %5151 = vmatprep.subr.bf16.mxu0 0
    %5152 = vmatpush1.bf16.msra.mxu0 %v5095
    %5153 = vmatprep.subr.bf16.mxu0 0
    %5154 = vmatpush1.bf16.msra.mxu0 %v5094
    %5155 = vmatprep.subr.bf16.mxu0 0
    %5156 = vmatpush1.bf16.msra.mxu0 %v5093
    %5157 = vmatprep.subr.bf16.mxu0 0
    %5158 = vmatpush1.bf16.msra.mxu0 %v5092
    %5159 = vmatprep.subr.bf16.mxu0 0
    %5160 = vmatpush1.bf16.msra.mxu0 %v5091
    %5161 = vmatprep.subr.bf16.mxu0 0
    %5162 = vmatpush1.bf16.msra.mxu0 %v5090
    %5163 = vmatprep.subr.bf16.mxu0 0
    %5164 = vmatpush2.bf16.msra.mxu0 0
    %5165 = vmatprep.subr.bf16.mxu0 0
    %5166 = vmatpush2.bf16.msra.mxu0 0
    %5167 = vmatprep.subr.bf16.mxu0 0
    %5168 = vmatpush2.bf16.msra.mxu0 0
    %5169 = vmatprep.subr.bf16.mxu0 0
    %5170 = vmatpush2.bf16.msra.mxu0 0
    %5171 = vmatprep.subr.bf16.mxu0 0
    %5172 = vmatpush2.bf16.msra.mxu0 0
    %5173 = vmatprep.subr.bf16.mxu0 0
    %5174 = vmatpush2.bf16.msra.mxu0 0
    %5175 = vmatprep.subr.bf16.mxu0 0
    %5176 = vmatpush2.bf16.msra.mxu0 0
    %5177 = vmatprep.subr.bf16.mxu0 0
    %5178 = vmatpush2.bf16.msra.mxu0 0
    %5179 = vmatprep.mubr.bf16.mxu0 0
    %5180 = vmatmul.mubr.bf16.gmra.mxu0 %v5146
    %v5181 = vpop.f32.mrf.mxu0
    %v5182 = vadd.f32 0.0, %v5181
    %v5183 = vpop.f32.mrf.mxu0
    %v5184 = vpop.f32.mrf.mxu0
    %v5185 = vpop.f32.mrf.mxu0
    %5186 = vdwg.mxu0
    %s5187 = scalar_lea.vmem [#allocation5], 2240
    %v5188 = vld [vmem:[%s5187] sm:$0xf]
    %v5189 = vld [vmem:[%s5187 + $0x4] sm:$0xf]
    %v5190 = vld [vmem:[%s5187 + $0x8] sm:$0xf]
    %v5191 = vld [vmem:[%s5187 + $0xc] sm:$0xf]
    %v5192 = vld [vmem:[%s5187 + $0x10] sm:$0xf]
    %v5193 = vld [vmem:[%s5187 + $0x14] sm:$0xf]
    %v5194 = vld [vmem:[%s5187 + $0x18] sm:$0xf]
    %v5195 = vld [vmem:[%s5187 + $0x1c] sm:$0xf]
    %v5196 = vld [vmem:[%s5187 + $0x20] sm:$0xf]
    %v5197 = vld [vmem:[%s5187 + $0x24] sm:$0xf]
    %v5198 = vld [vmem:[%s5187 + $0x28] sm:$0xf]
    %v5199 = vld [vmem:[%s5187 + $0x2c] sm:$0xf]
    %v5200 = vld [vmem:[%s5187 + $0x30] sm:$0xf]
    %v5201 = vld [vmem:[%s5187 + $0x34] sm:$0xf]
    %v5202 = vld [vmem:[%s5187 + $0x38] sm:$0xf]
    %v5203 = vld [vmem:[%s5187 + $0x3c] sm:$0xf]
    %v5204 = vpack.c.bf16 %v5141, %v5141
    %v5221 = vunpack.c.l.b16 %v5188
    %v5222 = vunpack.c.l.b16 %v5189
    %v5223 = vunpack.c.l.b16 %v5190
    %v5224 = vunpack.c.l.b16 %v5191
    %v5225 = vunpack.c.l.b16 %v5192
    %v5226 = vunpack.c.l.b16 %v5193
    %v5227 = vunpack.c.l.b16 %v5194
    %v5228 = vunpack.c.l.b16 %v5195
    %v5229 = vunpack.c.l.b16 %v5196
    %v5230 = vunpack.c.l.b16 %v5197
    %v5231 = vunpack.c.l.b16 %v5198
    %v5232 = vunpack.c.l.b16 %v5199
    %v5233 = vunpack.c.l.b16 %v5200
    %v5234 = vunpack.c.l.b16 %v5201
    %v5235 = vunpack.c.l.b16 %v5202
    %v5236 = vunpack.c.l.b16 %v5203
    %v5237 = vpack.c.b16 %v5222, %v5221
    %v5238 = vpack.c.b16 %v5224, %v5223
    %v5239 = vpack.c.b16 %v5226, %v5225
    %v5240 = vpack.c.b16 %v5228, %v5227
    %v5241 = vpack.c.b16 %v5230, %v5229
    %v5242 = vpack.c.b16 %v5232, %v5231
    %v5243 = vpack.c.b16 %v5234, %v5233
    %v5244 = vpack.c.b16 %v5236, %v5235
    %5253 = vmatprep.subr.bf16.mxu0 0
    %5254 = vmatpush1.bf16.msra.mxu0 %v5244
    %5255 = vmatprep.subr.bf16.mxu0 0
    %5256 = vmatpush1.bf16.msra.mxu0 %v5243
    %5257 = vmatprep.subr.bf16.mxu0 0
    %5258 = vmatpush1.bf16.msra.mxu0 %v5242
    %5259 = vmatprep.subr.bf16.mxu0 0
    %5260 = vmatpush1.bf16.msra.mxu0 %v5241
    %5261 = vmatprep.subr.bf16.mxu0 0
    %5262 = vmatpush1.bf16.msra.mxu0 %v5240
    %5263 = vmatprep.subr.bf16.mxu0 0
    %5264 = vmatpush1.bf16.msra.mxu0 %v5239
    %5265 = vmatprep.subr.bf16.mxu0 0
    %5266 = vmatpush1.bf16.msra.mxu0 %v5238
    %5267 = vmatprep.subr.bf16.mxu0 0
    %5268 = vmatpush1.bf16.msra.mxu0 %v5237
    %5269 = vmatprep.subr.bf16.mxu0 0
    %5270 = vmatpush2.bf16.msra.mxu0 0
    %5271 = vmatprep.subr.bf16.mxu0 0
    %5272 = vmatpush2.bf16.msra.mxu0 0
    %5273 = vmatprep.subr.bf16.mxu0 0
    %5274 = vmatpush2.bf16.msra.mxu0 0
    %5275 = vmatprep.subr.bf16.mxu0 0
    %5276 = vmatpush2.bf16.msra.mxu0 0
    %5277 = vmatprep.subr.bf16.mxu0 0
    %5278 = vmatpush2.bf16.msra.mxu0 0
    %5279 = vmatprep.subr.bf16.mxu0 0
    %5280 = vmatpush2.bf16.msra.mxu0 0
    %5281 = vmatprep.subr.bf16.mxu0 0
    %5282 = vmatpush2.bf16.msra.mxu0 0
    %5283 = vmatprep.subr.bf16.mxu0 0
    %5284 = vmatpush2.bf16.msra.mxu0 0
    %5285 = vmatprep.mubr.bf16.mxu0 0
    %5286 = vmatmul.mubr.bf16.gmra.mxu0 %v5204
    %v5287 = vpop.f32.mrf.mxu0
    %v5288 = vadd.f32 0.0, %v5287
    %v5289 = vpop.f32.mrf.mxu0
    %v5290 = vpop.f32.mrf.mxu0
    %v5291 = vpop.f32.mrf.mxu0
    %5292 = vdwg.mxu0
    %v5293 = vpack.c.bf16 %v5182, %v5182
    %5294 = vmatprep.subr.bf16.mxu0 0
    %5295 = vmatpush1.bf16.msra.mxu0 %v5244
    %5296 = vmatprep.subr.bf16.mxu0 0
    %5297 = vmatpush1.bf16.msra.mxu0 %v5243
    %5298 = vmatprep.subr.bf16.mxu0 0
    %5299 = vmatpush1.bf16.msra.mxu0 %v5242
    %5300 = vmatprep.subr.bf16.mxu0 0
    %5301 = vmatpush1.bf16.msra.mxu0 %v5241
    %5302 = vmatprep.subr.bf16.mxu0 0
    %5303 = vmatpush1.bf16.msra.mxu0 %v5240
    %5304 = vmatprep.subr.bf16.mxu0 0
    %5305 = vmatpush1.bf16.msra.mxu0 %v5239
    %5306 = vmatprep.subr.bf16.mxu0 0
    %5307 = vmatpush1.bf16.msra.mxu0 %v5238
    %5308 = vmatprep.subr.bf16.mxu0 0
    %5309 = vmatpush1.bf16.msra.mxu0 %v5237
    %5310 = vmatprep.subr.bf16.mxu0 0
    %5311 = vmatpush2.bf16.msra.mxu0 0
    %5312 = vmatprep.subr.bf16.mxu0 0
    %5313 = vmatpush2.bf16.msra.mxu0 0
    %5314 = vmatprep.subr.bf16.mxu0 0
    %5315 = vmatpush2.bf16.msra.mxu0 0
    %5316 = vmatprep.subr.bf16.mxu0 0
    %5317 = vmatpush2.bf16.msra.mxu0 0
    %5318 = vmatprep.subr.bf16.mxu0 0
    %5319 = vmatpush2.bf16.msra.mxu0 0
    %5320 = vmatprep.subr.bf16.mxu0 0
    %5321 = vmatpush2.bf16.msra.mxu0 0
    %5322 = vmatprep.subr.bf16.mxu0 0
    %5323 = vmatpush2.bf16.msra.mxu0 0
    %5324 = vmatprep.subr.bf16.mxu0 0
    %5325 = vmatpush2.bf16.msra.mxu0 0
    %5326 = vmatprep.mubr.bf16.mxu0 0
    %5327 = vmatmul.mubr.bf16.gmra.mxu0 %v5293
    %v5328 = vpop.f32.mrf.mxu0
    %v5329 = vadd.f32 0.0, %v5328
    %v5330 = vpop.f32.mrf.mxu0
    %v5331 = vpop.f32.mrf.mxu0
    %v5332 = vpop.f32.mrf.mxu0
    %5333 = vdwg.mxu0
    %5334 = vst [vmem:[#allocation7] sm:$0xff] %v5288
    %5335 = vst [vmem:[#allocation7 + $0x8] sm:$0xff] %v5329
    // Predicated region
    $region18: #{_forward_impl.1} parent=1 // pred_check
      _
    $region19: #{_forward_impl.1} parent=1 // pred_check_branch
      %5337 = sbr.rel (0) target = $region21
    $region20: #{_forward_impl.1} parent=1 // pred_region
      %s5339 = ssub.s32 256, 256
      %5340 = vsyncadd [#allocation4], %s5339
      %s5341 = sshll.u32 [#allocation7], 4
      %s5342 = int_to_ptr.vmem [resolvable:$true] %s5341
      %5347 = dma.vmem_to_hbm [thread:$0]  %s5342, 256, %s2, [#allocation4], 128, 128, 8
    $region21: #{_forward_impl.1} parent=1 // pred_fallthru
      _
    // Predicated region
    $region22: #{_forward_impl.1} parent=1 // pred_check
      _
    $region23: #{_forward_impl.1} parent=1 // pred_check_branch
      %5349 = sbr.rel (0) target = $region25
    $region24: #{_forward_impl.1} parent=1 // pred_region
      %5350 = dma.done [#allocation4], 256
    $region25: #{_forward_impl.1} parent=1 // pred_fallthru
      _
    %5351 = vsyncpa [#allocation3], 1
    %5352 = vsyncpa [#allocation6], 1
    %5353 = vsyncpa [#allocation4], 1

</llo_original>
